<compile_context>
chip_gen: v6e
topology: v6e:2x2x1
jax: 0.10.0
libtpu: 0.0.40
codegen_flags: <defaults>
</compile_context>

<pallas_src>
import functools
import math

import jax
import jax.numpy as jnp
from jax.experimental import pallas as pl
from jax.experimental.pallas import tpu as pltpu


# ----------------------------------------------------------------------------
# Model config (deterministic synthetic init)
# ----------------------------------------------------------------------------

CFG = dict(
    vocab_size=100,
    hidden_size=32,
    num_attention_heads=4,
    num_hidden_layers=2,
    intermediate_size=64,
    max_position_embeddings=64,
    max_2d_position_embeddings=64,
    num_labels=5,
    num_channels=3,
    image_size=32,
    patch_size=16,
    hidden_dropout_prob=0.1,   # dropout == identity at inference
)

LOGIT_PAD = 128   # lane-dense width for the classifier output


def _round8(n):
    return ((n + 7) // 8) * 8


# ----------------------------------------------------------------------------
# In-kernel helpers
# ----------------------------------------------------------------------------

def _gelu(x):
    # TODO(synk): HF LayoutLMv3 uses exact erf-GELU; tanh approximation used here.
    return 0.5 * x * (1.0 + jnp.tanh(0.7978845608028654 * (x + 0.044715 * x * x * x)))


def _ln(x, g, b, eps=1e-5):
    mu = jnp.mean(x, axis=-1, keepdims=True)
    xc = x - mu
    var = jnp.mean(xc * xc, axis=-1, keepdims=True)
    return xc * jax.lax.rsqrt(var + eps) * g + b


# ----------------------------------------------------------------------------
# Fused forward kernel (whole model after embedding gathers)
# ----------------------------------------------------------------------------

def _fused_forward_kernel(
    text_ref,      # (B*S_text, H)   summed text-embedding lookups
    patch_ref,     # (B*Np, C*P*P)
    patch_w_ref,   # (C*P*P, H)
    misc_ref,      # (MISC_ROWS, 128) packed vectors / cls head / mask / labels
    lvec_ref,      # (L, 8, 128)     per-layer bias & LN vectors
    lmat_ref,      # (L, 3H+I, 128)  per-layer weight matrices (row-stacked)
    # outputs
    logits_ref,    # (B*S_text, 128) VMEM
    loss_ref,      # (1, 1)          SMEM scalar
    *, B, S_text, Np, T, H, I, nh, L, num_labels,
    VIS_OFF, CLSW_OFF, MASK_OFF, LAB_OFF,
):
    dh = H // nh
    scale = 1.0 / math.sqrt(dh)
    T_text = B * S_text
    T_real = T_text + B * Np

    # ---- unpack the misc buffer (one DMA for ~10 tiny tensors) ----------------
    mc = misc_ref[...]
    emb_g, emb_b = mc[0:1, 0:H], mc[1:2, 0:H]
    patch_b = mc[2:3, 0:H]
    vis_g, vis_b = mc[3:4, 0:H], mc[4:5, 0:H]
    cls_b = mc[5:6, :]
    vis_pos = mc[VIS_OFF:VIS_OFF + B * Np, 0:H]
    cls_w = mc[CLSW_OFF:CLSW_OFF + H, :]
    mask = mc[MASK_OFF:MASK_OFF + T, 0:T]                      # (T, T) additive
    labels_i = mc[LAB_OFF:LAB_OFF + T, 0:1].astype(jnp.int32)  # (T, 1)

    # ---- embeddings (both batches in one shot; all slabs sublane-aligned) -----
    te = _ln(text_ref[...], emb_g, emb_b)                       # (T_text, H)
    vis = jnp.dot(patch_ref[...], patch_w_ref[...],
                  preferred_element_type=jnp.float32) + patch_b + vis_pos
    vis = _ln(vis, vis_g, vis_b)                                # (B*Np, H)
    parts = [te, vis]
    if T > T_real:
        parts.append(jnp.zeros((T - T_real, H), jnp.float32))
    x = jnp.concatenate(parts, axis=0)                          # (T, H), in vregs

    # ---- transformer encoder (all layers fused, activations stay in vregs) ----
    # Cross-batch / masked / pad keys are killed by the -1e9 additive mask, so a
    # single (T, T) attention per head is numerically identical to per-batch attn.
    for l in range(L):
        wl = lmat_ref[l]                        # (3H+I, 128)
        lv = lvec_ref[l]                        # (8, 128)
        wqkv = wl[0:H, 0:3 * H]
        wo = wl[H:2 * H, 0:H]
        w1 = wl[2 * H:3 * H, 0:I]
        w2 = wl[3 * H:3 * H + I, 0:H]
        bqkv = lv[0:1, 0:3 * H]
        bo = lv[1:2, 0:H]
        ln1_g, ln1_b = lv[2:3, 0:H], lv[3:4, 0:H]
        b1 = lv[4:5, 0:I]
        b2 = lv[5:6, 0:H]
        ln2_g, ln2_b = lv[6:7, 0:H], lv[7:8, 0:H]

        qkv = jnp.dot(x, wqkv, preferred_element_type=jnp.float32) + bqkv  # (T, 3H)

        ctx_heads = []
        for h in range(nh):
            q = qkv[:, h * dh:(h + 1) * dh]
            k = qkv[:, H + h * dh:H + (h + 1) * dh]
            v = qkv[:, 2 * H + h * dh:2 * H + (h + 1) * dh]
            s = jax.lax.dot_general(
                q, k, (((1,), (1,)), ((), ())),
                preferred_element_type=jnp.float32) * scale + mask         # (T, T)
            s = s - jnp.max(s, axis=-1, keepdims=True)
            p = jnp.exp(s)
            p = p / jnp.sum(p, axis=-1, keepdims=True)
            ctx_heads.append(jnp.dot(p, v, preferred_element_type=jnp.float32))
        ctx = jnp.concatenate(ctx_heads, axis=1)                            # (T, H)
        attn = jnp.dot(ctx, wo, preferred_element_type=jnp.float32) + bo    # 1 proj

        h1 = _ln(x + attn, ln1_g, ln1_b)
        ffn = _gelu(jnp.dot(h1, w1, preferred_element_type=jnp.float32) + b1)
        ffn = jnp.dot(ffn, w2, preferred_element_type=jnp.float32) + b2
        x = _ln(h1 + ffn, ln2_g, ln2_b)

    # ---- classifier head (dropout = identity; lane-dense 128-wide logits) -----
    logits_all = jnp.dot(x, cls_w, preferred_element_type=jnp.float32) + cls_b  # (T, 128)
    logits_ref[...] = logits_all[0:T_text, :]

    # ---- cross-entropy (ignore_index = -100, mean over valid tokens) ----------
    col = jax.lax.broadcasted_iota(jnp.int32, (T, LOGIT_PAD), 1)
    masked = jnp.where(col < num_labels, logits_all, -1e30)
    m = jnp.max(masked, axis=-1, keepdims=True)
    lse = jnp.log(jnp.sum(jnp.exp(masked - m), axis=-1, keepdims=True)) + m
    true_logit = jnp.sum(jnp.where(col == labels_i, logits_all, 0.0),
                         axis=-1, keepdims=True)
    valid = (labels_i >= 0).astype(jnp.float32)
    count = jnp.maximum(jnp.sum(valid), 1.0)
    loss_ref[0, 0] = jnp.sum((lse - true_logit) * valid) / count


# ----------------------------------------------------------------------------
# Parameters (deterministic synthetic init)
# ----------------------------------------------------------------------------

def init_params(key, cfg):
    H = cfg["hidden_size"]
    I = cfg["intermediate_size"]
    std = 0.02

    def nrm(k, shape):
        return std * jax.random.normal(k, shape, dtype=jnp.float32)

    keys = iter(jax.random.split(key, 256))
    p = {}
    p["word_emb"] = nrm(next(keys), (cfg["vocab_size"], H))
    p["pos_emb"] = nrm(next(keys), (cfg["max_position_embeddings"], H))
    p["x_emb"] = nrm(next(keys), (cfg["max_2d_position_embeddings"], H))
    p["y_emb"] = nrm(next(keys), (cfg["max_2d_position_embeddings"], H))
    p["h_emb"] = nrm(next(keys), (cfg["max_2d_position_embeddings"], H))
    p["w_emb"] = nrm(next(keys), (cfg["max_2d_position_embeddings"], H))
    p["emb_ln_g"] = jnp.ones((1, H), jnp.float32)
    p["emb_ln_b"] = jnp.zeros((1, H), jnp.float32)
    C, P = cfg["num_channels"], cfg["patch_size"]
    n_patches = (cfg["image_size"] // P) ** 2
    p["patch_w"] = nrm(next(keys), (C * P * P, H))
    p["patch_b"] = jnp.zeros((1, H), jnp.float32)
    p["vis_pos_emb"] = nrm(next(keys), (n_patches, H))
    p["vis_ln_g"] = jnp.ones((1, H), jnp.float32)
    p["vis_ln_b"] = jnp.zeros((1, H), jnp.float32)
    p["layers"] = []
    for _ in range(cfg["num_hidden_layers"]):
        lp = dict(
            wq=nrm(next(keys), (H, H)), bq=jnp.zeros((1, H), jnp.float32),
            wk=nrm(next(keys), (H, H)), bk=jnp.zeros((1, H), jnp.float32),
            wv=nrm(next(keys), (H, H)), bv=jnp.zeros((1, H), jnp.float32),
            wo=nrm(next(keys), (H, H)), bo=jnp.zeros((1, H), jnp.float32),
            ln1_g=jnp.ones((1, H), jnp.float32), ln1_b=jnp.zeros((1, H), jnp.float32),
            w1=nrm(next(keys), (H, I)), b1=jnp.zeros((1, I), jnp.float32),
            w2=nrm(next(keys), (I, H)), b2=jnp.zeros((1, H), jnp.float32),
            ln2_g=jnp.ones((1, H), jnp.float32), ln2_b=jnp.zeros((1, H), jnp.float32),
        )
        p["layers"].append(lp)
    p["cls_w"] = nrm(next(keys), (H, cfg["num_labels"]))
    p["cls_b"] = jnp.zeros((1, cfg["num_labels"]), jnp.float32)
    return p


def _pack_layer_params(layers, H, I):
    """Pack all per-layer weights into 2 buffers: vectors (L,8,128), matrices (L,3H+I,128)."""
    L = len(layers)
    lvec = jnp.zeros((L, 8, 128), jnp.float32)
    lmat = jnp.zeros((L, 3 * H + I, 128), jnp.float32)
    for l, lp in enumerate(layers):
        lvec = lvec.at[l, 0, :3 * H].set(
            jnp.concatenate([lp["bq"][0], lp["bk"][0], lp["bv"][0]]))
        lvec = lvec.at[l, 1, :H].set(lp["bo"][0])
        lvec = lvec.at[l, 2, :H].set(lp["ln1_g"][0])
        lvec = lvec.at[l, 3, :H].set(lp["ln1_b"][0])
        lvec = lvec.at[l, 4, :I].set(lp["b1"][0])
        lvec = lvec.at[l, 5, :H].set(lp["b2"][0])
        lvec = lvec.at[l, 6, :H].set(lp["ln2_g"][0])
        lvec = lvec.at[l, 7, :H].set(lp["ln2_b"][0])
        wqkv = jnp.concatenate([lp["wq"], lp["wk"], lp["wv"]], axis=1)     # (H, 3H)
        lmat = lmat.at[l, 0:H, 0:3 * H].set(wqkv)
        lmat = lmat.at[l, H:2 * H, 0:H].set(lp["wo"])
        lmat = lmat.at[l, 2 * H:3 * H, 0:I].set(lp["w1"])
        lmat = lmat.at[l, 3 * H:3 * H + I, 0:H].set(lp["w2"])
    return lvec, lmat


# ----------------------------------------------------------------------------
# Forward pass (JAX glue: gathers + patch extraction + packing; rest = 1 kernel)
# ----------------------------------------------------------------------------

def _extract_patches_nchw(pixel_values, patch_size):
    # NCHW -> (B*n_patches, C*P*P) in (C, ph, pw) row-major order (Conv2d order)
    B, C, Himg, Wimg = pixel_values.shape
    P = patch_size
    x = pixel_values.reshape(B, C, Himg // P, P, Wimg // P, P)
    x = x.transpose(0, 2, 4, 1, 3, 5)          # (B, Hp, Wp, C, P, P)
    return x.reshape(B * (Himg // P) * (Wimg // P), C * P * P)


def layoutlmv3_for_token_classification(params, cfg, input_ids, attention_mask,
                                         bbox, pixel_values, labels=None):
    B, S_text = input_ids.shape
    H = cfg["hidden_size"]
    I = cfg["intermediate_size"]
    nh = cfg["num_attention_heads"]
    L = cfg["num_hidden_layers"]
    P = cfg["patch_size"]
    num_labels = cfg["num_labels"]

    # ---- text embedding lookups (data-dependent gathers -> JAX glue) ----------
    pos_ids = jnp.arange(S_text, dtype=jnp.int32)
    text_emb = (params["word_emb"][input_ids]
                + params["pos_emb"][pos_ids][None, :, :]
                + params["x_emb"][bbox[..., 0]]
                + params["y_emb"][bbox[..., 1]]
                + params["x_emb"][bbox[..., 2]]
                + params["y_emb"][bbox[..., 3]]
                + params["h_emb"][bbox[..., 3] - bbox[..., 1]]
                + params["w_emb"][bbox[..., 2] - bbox[..., 0]])        # (B, S_text, H)
    text_emb = text_emb.reshape(B * S_text, H)

    # ---- patch extraction (pure layout reshuffle -> JAX glue) -----------------
    patches = _extract_patches_nchw(pixel_values, P)                   # (B*Np, CPP)
    Np = patches.shape[0] // B

    # Row layout: [text_b0 | text_b1 | ... | vis_b0 | vis_b1 | ... | pad]
    T_text = B * S_text
    T_real = T_text + B * Np
    T = max(8, _round8(T_real))

    # ---- (T, T) additive mask: block-diagonal per batch + key mask + pad mask -
    row_batch = jnp.concatenate([
        jnp.repeat(jnp.arange(B, dtype=jnp.int32), S_text),
        jnp.repeat(jnp.arange(B, dtype=jnp.int32), Np),
        jnp.full((T - T_real,), -1, jnp.int32)])
    key_ok = jnp.concatenate([
        attention_mask.astype(jnp.float32).reshape(-1),
        jnp.ones((B * Np,), jnp.float32),
        jnp.zeros((T - T_real,), jnp.float32)])
    allow = ((row_batch[:, None] == row_batch[None, :])
             & (row_batch[:, None] >= 0)).astype(jnp.float32) * key_ok[None, :]
    mask_add = (1.0 - allow) * -1e9                                    # (T, T)

    # ---- labels aligned to the row layout (-100 = ignore) ---------------------
    if labels is None:
        lab = jnp.full((B, S_text), -100, jnp.int32)
    else:
        lab = labels.astype(jnp.int32)
    labels_row = jnp.concatenate(
        [lab.reshape(-1), jnp.full((T - T_text,), -100, jnp.int32)]).astype(jnp.float32)

    # ---- pack everything small into ONE misc buffer (one DMA) -----------------
    VIS_OFF = 8
    CLSW_OFF = VIS_OFF + _round8(B * Np)
    MASK_OFF = CLSW_OFF + _round8(H)
    LAB_OFF = MASK_OFF + T
    MISC_ROWS = _round8(LAB_OFF + T)

    misc = jnp.zeros((MISC_ROWS, 128), jnp.float32)
    misc = misc.at[0, :H].set(params["emb_ln_g"][0])
    misc = misc.at[1, :H].set(params["emb_ln_b"][0])
    misc = misc.at[2, :H].set(params["patch_b"][0])
    misc = misc.at[3, :H].set(params["vis_ln_g"][0])
    misc = misc.at[4, :H].set(params["vis_ln_b"][0])
    misc = misc.at[5, :num_labels].set(params["cls_b"][0])
    misc = misc.at[VIS_OFF:VIS_OFF + B * Np, :H].set(
        jnp.tile(params["vis_pos_emb"], (B, 1)))
    misc = misc.at[CLSW_OFF:CLSW_OFF + H, :num_labels].set(params["cls_w"])
    misc = misc.at[MASK_OFF:MASK_OFF + T, :T].set(mask_add)
    misc = misc.at[LAB_OFF:LAB_OFF + T, 0].set(labels_row)

    lvec, lmat = _pack_layer_params(params["layers"], H, I)

    kernel = functools.partial(
        _fused_forward_kernel,
        B=B, S_text=S_text, Np=Np, T=T, H=H, I=I, nh=nh, L=L, num_labels=num_labels,
        VIS_OFF=VIS_OFF, CLSW_OFF=CLSW_OFF, MASK_OFF=MASK_OFF, LAB_OFF=LAB_OFF)

    logits_pad, loss = pl.pallas_call(
        kernel,
        out_shape=(jax.ShapeDtypeStruct((T_text, LOGIT_PAD), jnp.float32),
                   jax.ShapeDtypeStruct((1, 1), jnp.float32)),
        out_specs=(pl.BlockSpec(memory_space=pltpu.VMEM),
                   pl.BlockSpec(memory_space=pltpu.SMEM)),
    )(text_emb, patches, params["patch_w"], misc, lvec, lmat)

    logits = logits_pad[:, :num_labels].reshape(B, S_text, num_labels)
    out_loss = None if labels is None else loss[0, 0]
    return {"loss": out_loss, "logits": logits}


# ----------------------------------------------------------------------------
# main
# ----------------------------------------------------------------------------

if __name__ == "__main__":
    key = jax.random.PRNGKey(0)
    k_par, k_ids, k_box, k_pix, k_lab = jax.random.split(key, 5)

    params = init_params(k_par, CFG)

    B, S_text = 2, 8
    input_ids = jax.random.randint(k_ids, (B, S_text), 0, CFG["vocab_size"], dtype=jnp.int32)
    attention_mask = jnp.ones((B, S_text), jnp.int32)

    kb0, kb1 = jax.random.split(k_box)
    xy0 = jax.random.randint(kb0, (B, S_text, 2), 0, 32, dtype=jnp.int32)
    wh = jax.random.randint(kb1, (B, S_text, 2), 1, 32, dtype=jnp.int32)
    bbox = jnp.concatenate([xy0, xy0 + wh], axis=-1)          # (B, S, 4): x0,y0,x1,y1

    pixel_values = jax.random.normal(
        k_pix, (B, CFG["num_channels"], CFG["image_size"], CFG["image_size"]),
        dtype=jnp.float32)
    labels = jax.random.randint(k_lab, (B, S_text), 0, CFG["num_labels"], dtype=jnp.int32)

    fwd = jax.jit(lambda p, ii, am, bb, pv, lb: layoutlmv3_for_token_classification(
        p, CFG, ii, am, bb, pv, labels=lb))
    out = fwd(params, input_ids, attention_mask, bbox, pixel_values, labels)
    jax.block_until_ready(out["logits"])
    jax.block_until_ready(out["loss"])

    assert out["logits"].shape == (B, S_text, CFG["num_labels"])
    assert out["loss"].shape == ()
    assert bool(jnp.isfinite(out["loss"]))
    print("KERNEL_OK")
</pallas_src>

<mosaic_0001>
module attributes {stable_mosaic.version = 11 : i64} {
  func.func @_fused_forward_kernel(%arg0: memref<16x32xf32, #tpu.memory_space<vmem>>, %arg1: memref<8x768xf32, #tpu.memory_space<vmem>>, %arg2: memref<768x32xf32, #tpu.memory_space<vmem>>, %arg3: memref<96x128xf32, #tpu.memory_space<vmem>>, %arg4: memref<2x8x128xf32, #tpu.memory_space<vmem>>, %arg5: memref<2x160x128xf32, #tpu.memory_space<vmem>>, %arg6: memref<16x128xf32, #tpu.memory_space<vmem>>, %arg7: memref<1x1xf32, #tpu.memory_space<smem>>) attributes {dimension_semantics = [], scalar_prefetch = 0 : i64, scratch_operands = 0 : i64, tpu.core_type = #tpu.core_type<tc>} {
    %c0 = arith.constant 0 : index
    %c0_0 = arith.constant 0 : index
    %0 = vector.load %arg3[%c0, %c0_0] : memref<96x128xf32, #tpu.memory_space<vmem>>, vector<96x128xf32>
    %1 = vector.extract_strided_slice %0 {offsets = [0, 0], sizes = [1, 32], strides = [1, 1]} : vector<96x128xf32> to vector<1x32xf32>
    %2 = vector.extract_strided_slice %0 {offsets = [1, 0], sizes = [1, 32], strides = [1, 1]} : vector<96x128xf32> to vector<1x32xf32>
    %3 = vector.extract_strided_slice %0 {offsets = [2, 0], sizes = [1, 32], strides = [1, 1]} : vector<96x128xf32> to vector<1x32xf32>
    %4 = vector.extract_strided_slice %0 {offsets = [3, 0], sizes = [1, 32], strides = [1, 1]} : vector<96x128xf32> to vector<1x32xf32>
    %5 = vector.extract_strided_slice %0 {offsets = [4, 0], sizes = [1, 32], strides = [1, 1]} : vector<96x128xf32> to vector<1x32xf32>
    %6 = vector.extract_strided_slice %0 {offsets = [5, 0], sizes = [1, 128], strides = [1, 1]} : vector<96x128xf32> to vector<1x128xf32>
    %7 = vector.extract_strided_slice %0 {offsets = [8, 0], sizes = [8, 32], strides = [1, 1]} : vector<96x128xf32> to vector<8x32xf32>
    %8 = vector.extract_strided_slice %0 {offsets = [16, 0], sizes = [32, 128], strides = [1, 1]} : vector<96x128xf32> to vector<32x128xf32>
    %9 = vector.extract_strided_slice %0 {offsets = [48, 0], sizes = [24, 24], strides = [1, 1]} : vector<96x128xf32> to vector<24x24xf32>
    %10 = vector.extract_strided_slice %0 {offsets = [72, 0], sizes = [24, 1], strides = [1, 1]} : vector<96x128xf32> to vector<24x1xf32>
    %11 = arith.fptosi %10 : vector<24x1xf32> to vector<24x1xi32>
    %c0_1 = arith.constant 0 : index
    %c0_2 = arith.constant 0 : index
    %12 = vector.load %arg0[%c0_1, %c0_2] : memref<16x32xf32, #tpu.memory_space<vmem>>, vector<16x32xf32>
    %cst = arith.constant dense<0.000000e+00> : vector<16xf32>
    %13 = vector.multi_reduction <add>, %12, %cst [1] : vector<16x32xf32> to vector<16xf32>
    %14 = vector.shape_cast %13 : vector<16xf32> to vector<16x1xf32>
    %cst_3 = arith.constant 3.200000e+01 : f32
    %15 = vector.broadcast %cst_3 : f32 to vector<16x1xf32>
    %16 = arith.divf %14, %15 : vector<16x1xf32>
    %17 = vector.broadcast %16 : vector<16x1xf32> to vector<16x32xf32>
    %18 = arith.subf %12, %17 : vector<16x32xf32>
    %19 = arith.mulf %18, %18 : vector<16x32xf32>
    %cst_4 = arith.constant dense<0.000000e+00> : vector<16xf32>
    %20 = vector.multi_reduction <add>, %19, %cst_4 [1] : vector<16x32xf32> to vector<16xf32>
    %21 = vector.shape_cast %20 : vector<16xf32> to vector<16x1xf32>
    %cst_5 = arith.constant 3.200000e+01 : f32
    %22 = vector.broadcast %cst_5 : f32 to vector<16x1xf32>
    %23 = arith.divf %21, %22 : vector<16x1xf32>
    %cst_6 = arith.constant 9.99999974E-6 : f32
    %24 = vector.broadcast %cst_6 : f32 to vector<16x1xf32>
    %25 = arith.addf %23, %24 : vector<16x1xf32>
    %26 = math.rsqrt %25 : vector<16x1xf32>
    %27 = vector.broadcast %26 : vector<16x1xf32> to vector<16x32xf32>
    %28 = arith.mulf %18, %27 : vector<16x32xf32>
    %29 = vector.broadcast %1 : vector<1x32xf32> to vector<16x32xf32>
    %30 = arith.mulf %28, %29 : vector<16x32xf32>
    %31 = vector.broadcast %2 : vector<1x32xf32> to vector<16x32xf32>
    %32 = arith.addf %30, %31 : vector<16x32xf32>
    %c0_7 = arith.constant 0 : index
    %c0_8 = arith.constant 0 : index
    %33 = vector.load %arg1[%c0_7, %c0_8] : memref<8x768xf32, #tpu.memory_space<vmem>>, vector<8x768xf32>
    %c0_9 = arith.constant 0 : index
    %c0_10 = arith.constant 0 : index
    %34 = vector.load %arg2[%c0_9, %c0_10] : memref<768x32xf32, #tpu.memory_space<vmem>>, vector<768x32xf32>
    %cst_11 = arith.constant dense<0.000000e+00> : vector<8x32xf32>
    %35 = tpu.matmul %33, %34, %cst_11 {dimension_numbers = #tpu.dot_dimension_numbers<[1], [0], [0], [1], [0, 0, 1, 1], [], []>} : vector<8x768xf32>, vector<768x32xf32>, vector<8x32xf32> -> vector<8x32xf32>
    %36 = vector.broadcast %3 : vector<1x32xf32> to vector<8x32xf32>
    %37 = arith.addf %35, %36 : vector<8x32xf32>
    %38 = arith.addf %37, %7 : vector<8x32xf32>
    %cst_12 = arith.constant dense<0.000000e+00> : vector<8xf32>
    %39 = vector.multi_reduction <add>, %38, %cst_12 [1] : vector<8x32xf32> to vector<8xf32>
    %40 = vector.shape_cast %39 : vector<8xf32> to vector<8x1xf32>
    %cst_13 = arith.constant 3.200000e+01 : f32
    %41 = vector.broadcast %cst_13 : f32 to vector<8x1xf32>
    %42 = arith.divf %40, %41 : vector<8x1xf32>
    %43 = vector.broadcast %42 : vector<8x1xf32> to vector<8x32xf32>
    %44 = arith.subf %38, %43 : vector<8x32xf32>
    %45 = arith.mulf %44, %44 : vector<8x32xf32>
    %cst_14 = arith.constant dense<0.000000e+00> : vector<8xf32>
    %46 = vector.multi_reduction <add>, %45, %cst_14 [1] : vector<8x32xf32> to vector<8xf32>
    %47 = vector.shape_cast %46 : vector<8xf32> to vector<8x1xf32>
    %cst_15 = arith.constant 3.200000e+01 : f32
    %48 = vector.broadcast %cst_15 : f32 to vector<8x1xf32>
    %49 = arith.divf %47, %48 : vector<8x1xf32>
    %cst_16 = arith.constant 9.99999974E-6 : f32
    %50 = vector.broadcast %cst_16 : f32 to vector<8x1xf32>
    %51 = arith.addf %49, %50 : vector<8x1xf32>
    %52 = math.rsqrt %51 : vector<8x1xf32>
    %53 = vector.broadcast %52 : vector<8x1xf32> to vector<8x32xf32>
    %54 = arith.mulf %44, %53 : vector<8x32xf32>
    %55 = vector.broadcast %4 : vector<1x32xf32> to vector<8x32xf32>
    %56 = arith.mulf %54, %55 : vector<8x32xf32>
    %57 = vector.broadcast %5 : vector<1x32xf32> to vector<8x32xf32>
    %58 = arith.addf %56, %57 : vector<8x32xf32>
    %59 = tpu.concatenate %32, %58 in 0 : vector<16x32xf32>, vector<8x32xf32> -> vector<24x32xf32>
    %c0_17 = arith.constant 0 : index
    %c0_18 = arith.constant 0 : index
    %c0_19 = arith.constant 0 : index
    %60 = vector.load %arg5[%c0_17, %c0_18, %c0_19] : memref<2x160x128xf32, #tpu.memory_space<vmem>>, vector<1x160x128xf32>
    %61 = vector.shape_cast %60 : vector<1x160x128xf32> to vector<160x128xf32>
    %c0_20 = arith.constant 0 : index
    %c0_21 = arith.constant 0 : index
    %c0_22 = arith.constant 0 : index
    %62 = vector.load %arg4[%c0_20, %c0_21, %c0_22] : memref<2x8x128xf32, #tpu.memory_space<vmem>>, vector<1x8x128xf32>
    %63 = vector.shape_cast %62 : vector<1x8x128xf32> to vector<8x128xf32>
    %64 = vector.extract_strided_slice %61 {offsets = [0, 0], sizes = [32, 96], strides = [1, 1]} : vector<160x128xf32> to vector<32x96xf32>
    %65 = vector.extract_strided_slice %61 {offsets = [32, 0], sizes = [32, 32], strides = [1, 1]} : vector<160x128xf32> to vector<32x32xf32>
    %66 = vector.extract_strided_slice %61 {offsets = [64, 0], sizes = [32, 64], strides = [1, 1]} : vector<160x128xf32> to vector<32x64xf32>
    %67 = vector.extract_strided_slice %61 {offsets = [96, 0], sizes = [64, 32], strides = [1, 1]} : vector<160x128xf32> to vector<64x32xf32>
    %68 = vector.extract_strided_slice %63 {offsets = [0, 0], sizes = [1, 96], strides = [1, 1]} : vector<8x128xf32> to vector<1x96xf32>
    %69 = vector.extract_strided_slice %63 {offsets = [1, 0], sizes = [1, 32], strides = [1, 1]} : vector<8x128xf32> to vector<1x32xf32>
    %70 = vector.extract_strided_slice %63 {offsets = [2, 0], sizes = [1, 32], strides = [1, 1]} : vector<8x128xf32> to vector<1x32xf32>
    %71 = vector.extract_strided_slice %63 {offsets = [3, 0], sizes = [1, 32], strides = [1, 1]} : vector<8x128xf32> to vector<1x32xf32>
    %72 = vector.extract_strided_slice %63 {offsets = [4, 0], sizes = [1, 64], strides = [1, 1]} : vector<8x128xf32> to vector<1x64xf32>
    %73 = vector.extract_strided_slice %63 {offsets = [5, 0], sizes = [1, 32], strides = [1, 1]} : vector<8x128xf32> to vector<1x32xf32>
    %74 = vector.extract_strided_slice %63 {offsets = [6, 0], sizes = [1, 32], strides = [1, 1]} : vector<8x128xf32> to vector<1x32xf32>
    %75 = vector.extract_strided_slice %63 {offsets = [7, 0], sizes = [1, 32], strides = [1, 1]} : vector<8x128xf32> to vector<1x32xf32>
    %cst_23 = arith.constant dense<0.000000e+00> : vector<24x96xf32>
    %76 = tpu.matmul %59, %64, %cst_23 {dimension_numbers = #tpu.dot_dimension_numbers<[1], [0], [0], [1], [0, 0, 1, 1], [], []>} : vector<24x32xf32>, vector<32x96xf32>, vector<24x96xf32> -> vector<24x96xf32>
    %77 = vector.broadcast %68 : vector<1x96xf32> to vector<24x96xf32>
    %78 = arith.addf %76, %77 : vector<24x96xf32>
    %79 = vector.extract_strided_slice %78 {offsets = [0, 0], sizes = [24, 8], strides = [1, 1]} : vector<24x96xf32> to vector<24x8xf32>
    %80 = vector.extract_strided_slice %78 {offsets = [0, 32], sizes = [24, 8], strides = [1, 1]} : vector<24x96xf32> to vector<24x8xf32>
    %81 = vector.extract_strided_slice %78 {offsets = [0, 64], sizes = [24, 8], strides = [1, 1]} : vector<24x96xf32> to vector<24x8xf32>
    %cst_24 = arith.constant dense<0.000000e+00> : vector<24x24xf32>
    %82 = tpu.matmul %79, %80, %cst_24 {dimension_numbers = #tpu.dot_dimension_numbers<[1], [1], [0], [0], [0, 0, 1, 0], [], []>} : vector<24x8xf32>, vector<24x8xf32>, vector<24x24xf32> -> vector<24x24xf32>
    %cst_25 = arith.constant 0.353553385 : f32
    %83 = vector.broadcast %cst_25 : f32 to vector<24x24xf32>
    %84 = arith.mulf %82, %83 : vector<24x24xf32>
    %85 = arith.addf %84, %9 : vector<24x24xf32>
    %cst_26 = arith.constant dense<0xFF800000> : vector<24xf32>
    %86 = vector.multi_reduction <maximumf>, %85, %cst_26 [1] : vector<24x24xf32> to vector<24xf32>
    %87 = vector.shape_cast %86 : vector<24xf32> to vector<24x1xf32>
    %88 = vector.broadcast %87 : vector<24x1xf32> to vector<24x24xf32>
    %89 = arith.subf %85, %88 : vector<24x24xf32>
    %90 = math.exp %89 : vector<24x24xf32>
    %cst_27 = arith.constant dense<0.000000e+00> : vector<24xf32>
    %91 = vector.multi_reduction <add>, %90, %cst_27 [1] : vector<24x24xf32> to vector<24xf32>
    %92 = vector.shape_cast %91 : vector<24xf32> to vector<24x1xf32>
    %93 = vector.broadcast %92 : vector<24x1xf32> to vector<24x24xf32>
    %94 = arith.divf %90, %93 : vector<24x24xf32>
    %cst_28 = arith.constant dense<0.000000e+00> : vector<24x8xf32>
    %95 = tpu.matmul %94, %81, %cst_28 {dimension_numbers = #tpu.dot_dimension_numbers<[1], [0], [0], [1], [0, 0, 1, 1], [], []>} : vector<24x24xf32>, vector<24x8xf32>, vector<24x8xf32> -> vector<24x8xf32>
    %96 = vector.extract_strided_slice %78 {offsets = [0, 8], sizes = [24, 8], strides = [1, 1]} : vector<24x96xf32> to vector<24x8xf32>
    %97 = vector.extract_strided_slice %78 {offsets = [0, 40], sizes = [24, 8], strides = [1, 1]} : vector<24x96xf32> to vector<24x8xf32>
    %98 = vector.extract_strided_slice %78 {offsets = [0, 72], sizes = [24, 8], strides = [1, 1]} : vector<24x96xf32> to vector<24x8xf32>
    %cst_29 = arith.constant dense<0.000000e+00> : vector<24x24xf32>
    %99 = tpu.matmul %96, %97, %cst_29 {dimension_numbers = #tpu.dot_dimension_numbers<[1], [1], [0], [0], [0, 0, 1, 0], [], []>} : vector<24x8xf32>, vector<24x8xf32>, vector<24x24xf32> -> vector<24x24xf32>
    %cst_30 = arith.constant 0.353553385 : f32
    %100 = vector.broadcast %cst_30 : f32 to vector<24x24xf32>
    %101 = arith.mulf %99, %100 : vector<24x24xf32>
    %102 = arith.addf %101, %9 : vector<24x24xf32>
    %cst_31 = arith.constant dense<0xFF800000> : vector<24xf32>
    %103 = vector.multi_reduction <maximumf>, %102, %cst_31 [1] : vector<24x24xf32> to vector<24xf32>
    %104 = vector.shape_cast %103 : vector<24xf32> to vector<24x1xf32>
    %105 = vector.broadcast %104 : vector<24x1xf32> to vector<24x24xf32>
    %106 = arith.subf %102, %105 : vector<24x24xf32>
    %107 = math.exp %106 : vector<24x24xf32>
    %cst_32 = arith.constant dense<0.000000e+00> : vector<24xf32>
    %108 = vector.multi_reduction <add>, %107, %cst_32 [1] : vector<24x24xf32> to vector<24xf32>
    %109 = vector.shape_cast %108 : vector<24xf32> to vector<24x1xf32>
    %110 = vector.broadcast %109 : vector<24x1xf32> to vector<24x24xf32>
    %111 = arith.divf %107, %110 : vector<24x24xf32>
    %cst_33 = arith.constant dense<0.000000e+00> : vector<24x8xf32>
    %112 = tpu.matmul %111, %98, %cst_33 {dimension_numbers = #tpu.dot_dimension_numbers<[1], [0], [0], [1], [0, 0, 1, 1], [], []>} : vector<24x24xf32>, vector<24x8xf32>, vector<24x8xf32> -> vector<24x8xf32>
    %113 = vector.extract_strided_slice %78 {offsets = [0, 16], sizes = [24, 8], strides = [1, 1]} : vector<24x96xf32> to vector<24x8xf32>
    %114 = vector.extract_strided_slice %78 {offsets = [0, 48], sizes = [24, 8], strides = [1, 1]} : vector<24x96xf32> to vector<24x8xf32>
    %115 = vector.extract_strided_slice %78 {offsets = [0, 80], sizes = [24, 8], strides = [1, 1]} : vector<24x96xf32> to vector<24x8xf32>
    %cst_34 = arith.constant dense<0.000000e+00> : vector<24x24xf32>
    %116 = tpu.matmul %113, %114, %cst_34 {dimension_numbers = #tpu.dot_dimension_numbers<[1], [1], [0], [0], [0, 0, 1, 0], [], []>} : vector<24x8xf32>, vector<24x8xf32>, vector<24x24xf32> -> vector<24x24xf32>
    %cst_35 = arith.constant 0.353553385 : f32
    %117 = vector.broadcast %cst_35 : f32 to vector<24x24xf32>
    %118 = arith.mulf %116, %117 : vector<24x24xf32>
    %119 = arith.addf %118, %9 : vector<24x24xf32>
    %cst_36 = arith.constant dense<0xFF800000> : vector<24xf32>
    %120 = vector.multi_reduction <maximumf>, %119, %cst_36 [1] : vector<24x24xf32> to vector<24xf32>
    %121 = vector.shape_cast %120 : vector<24xf32> to vector<24x1xf32>
    %122 = vector.broadcast %121 : vector<24x1xf32> to vector<24x24xf32>
    %123 = arith.subf %119, %122 : vector<24x24xf32>
    %124 = math.exp %123 : vector<24x24xf32>
    %cst_37 = arith.constant dense<0.000000e+00> : vector<24xf32>
    %125 = vector.multi_reduction <add>, %124, %cst_37 [1] : vector<24x24xf32> to vector<24xf32>
    %126 = vector.shape_cast %125 : vector<24xf32> to vector<24x1xf32>
    %127 = vector.broadcast %126 : vector<24x1xf32> to vector<24x24xf32>
    %128 = arith.divf %124, %127 : vector<24x24xf32>
    %cst_38 = arith.constant dense<0.000000e+00> : vector<24x8xf32>
    %129 = tpu.matmul %128, %115, %cst_38 {dimension_numbers = #tpu.dot_dimension_numbers<[1], [0], [0], [1], [0, 0, 1, 1], [], []>} : vector<24x24xf32>, vector<24x8xf32>, vector<24x8xf32> -> vector<24x8xf32>
    %130 = vector.extract_strided_slice %78 {offsets = [0, 24], sizes = [24, 8], strides = [1, 1]} : vector<24x96xf32> to vector<24x8xf32>
    %131 = vector.extract_strided_slice %78 {offsets = [0, 56], sizes = [24, 8], strides = [1, 1]} : vector<24x96xf32> to vector<24x8xf32>
    %132 = vector.extract_strided_slice %78 {offsets = [0, 88], sizes = [24, 8], strides = [1, 1]} : vector<24x96xf32> to vector<24x8xf32>
    %cst_39 = arith.constant dense<0.000000e+00> : vector<24x24xf32>
    %133 = tpu.matmul %130, %131, %cst_39 {dimension_numbers = #tpu.dot_dimension_numbers<[1], [1], [0], [0], [0, 0, 1, 0], [], []>} : vector<24x8xf32>, vector<24x8xf32>, vector<24x24xf32> -> vector<24x24xf32>
    %cst_40 = arith.constant 0.353553385 : f32
    %134 = vector.broadcast %cst_40 : f32 to vector<24x24xf32>
    %135 = arith.mulf %133, %134 : vector<24x24xf32>
    %136 = arith.addf %135, %9 : vector<24x24xf32>
    %cst_41 = arith.constant dense<0xFF800000> : vector<24xf32>
    %137 = vector.multi_reduction <maximumf>, %136, %cst_41 [1] : vector<24x24xf32> to vector<24xf32>
    %138 = vector.shape_cast %137 : vector<24xf32> to vector<24x1xf32>
    %139 = vector.broadcast %138 : vector<24x1xf32> to vector<24x24xf32>
    %140 = arith.subf %136, %139 : vector<24x24xf32>
    %141 = math.exp %140 : vector<24x24xf32>
    %cst_42 = arith.constant dense<0.000000e+00> : vector<24xf32>
    %142 = vector.multi_reduction <add>, %141, %cst_42 [1] : vector<24x24xf32> to vector<24xf32>
    %143 = vector.shape_cast %142 : vector<24xf32> to vector<24x1xf32>
    %144 = vector.broadcast %143 : vector<24x1xf32> to vector<24x24xf32>
    %145 = arith.divf %141, %144 : vector<24x24xf32>
    %cst_43 = arith.constant dense<0.000000e+00> : vector<24x8xf32>
    %146 = tpu.matmul %145, %132, %cst_43 {dimension_numbers = #tpu.dot_dimension_numbers<[1], [0], [0], [1], [0, 0, 1, 1], [], []>} : vector<24x24xf32>, vector<24x8xf32>, vector<24x8xf32> -> vector<24x8xf32>
    %147 = tpu.concatenate %95, %112, %129, %146 in 1 : vector<24x8xf32>, vector<24x8xf32>, vector<24x8xf32>, vector<24x8xf32> -> vector<24x32xf32>
    %cst_44 = arith.constant dense<0.000000e+00> : vector<24x32xf32>
    %148 = tpu.matmul %147, %65, %cst_44 {dimension_numbers = #tpu.dot_dimension_numbers<[1], [0], [0], [1], [0, 0, 1, 1], [], []>} : vector<24x32xf32>, vector<32x32xf32>, vector<24x32xf32> -> vector<24x32xf32>
    %149 = vector.broadcast %69 : vector<1x32xf32> to vector<24x32xf32>
    %150 = arith.addf %148, %149 : vector<24x32xf32>
    %151 = arith.addf %59, %150 : vector<24x32xf32>
    %cst_45 = arith.constant dense<0.000000e+00> : vector<24xf32>
    %152 = vector.multi_reduction <add>, %151, %cst_45 [1] : vector<24x32xf32> to vector<24xf32>
    %153 = vector.shape_cast %152 : vector<24xf32> to vector<24x1xf32>
    %cst_46 = arith.constant 3.200000e+01 : f32
    %154 = vector.broadcast %cst_46 : f32 to vector<24x1xf32>
    %155 = arith.divf %153, %154 : vector<24x1xf32>
    %156 = vector.broadcast %155 : vector<24x1xf32> to vector<24x32xf32>
    %157 = arith.subf %151, %156 : vector<24x32xf32>
    %158 = arith.mulf %157, %157 : vector<24x32xf32>
    %cst_47 = arith.constant dense<0.000000e+00> : vector<24xf32>
    %159 = vector.multi_reduction <add>, %158, %cst_47 [1] : vector<24x32xf32> to vector<24xf32>
    %160 = vector.shape_cast %159 : vector<24xf32> to vector<24x1xf32>
    %cst_48 = arith.constant 3.200000e+01 : f32
    %161 = vector.broadcast %cst_48 : f32 to vector<24x1xf32>
    %162 = arith.divf %160, %161 : vector<24x1xf32>
    %cst_49 = arith.constant 9.99999974E-6 : f32
    %163 = vector.broadcast %cst_49 : f32 to vector<24x1xf32>
    %164 = arith.addf %162, %163 : vector<24x1xf32>
    %165 = math.rsqrt %164 : vector<24x1xf32>
    %166 = vector.broadcast %165 : vector<24x1xf32> to vector<24x32xf32>
    %167 = arith.mulf %157, %166 : vector<24x32xf32>
    %168 = vector.broadcast %70 : vector<1x32xf32> to vector<24x32xf32>
    %169 = arith.mulf %167, %168 : vector<24x32xf32>
    %170 = vector.broadcast %71 : vector<1x32xf32> to vector<24x32xf32>
    %171 = arith.addf %169, %170 : vector<24x32xf32>
    %cst_50 = arith.constant dense<0.000000e+00> : vector<24x64xf32>
    %172 = tpu.matmul %171, %66, %cst_50 {dimension_numbers = #tpu.dot_dimension_numbers<[1], [0], [0], [1], [0, 0, 1, 1], [], []>} : vector<24x32xf32>, vector<32x64xf32>, vector<24x64xf32> -> vector<24x64xf32>
    %173 = vector.broadcast %72 : vector<1x64xf32> to vector<24x64xf32>
    %174 = arith.addf %172, %173 : vector<24x64xf32>
    %cst_51 = arith.constant 5.000000e-01 : f32
    %175 = vector.broadcast %cst_51 : f32 to vector<24x64xf32>
    %176 = arith.mulf %175, %174 : vector<24x64xf32>
    %cst_52 = arith.constant 4.471500e-02 : f32
    %177 = vector.broadcast %cst_52 : f32 to vector<24x64xf32>
    %178 = arith.mulf %177, %174 : vector<24x64xf32>
    %179 = arith.mulf %178, %174 : vector<24x64xf32>
    %180 = arith.mulf %179, %174 : vector<24x64xf32>
    %181 = arith.addf %174, %180 : vector<24x64xf32>
    %cst_53 = arith.constant 0.797884583 : f32
    %182 = vector.broadcast %cst_53 : f32 to vector<24x64xf32>
    %183 = arith.mulf %182, %181 : vector<24x64xf32>
    %184 = math.tanh %183 : vector<24x64xf32>
    %cst_54 = arith.constant 1.000000e+00 : f32
    %185 = vector.broadcast %cst_54 : f32 to vector<24x64xf32>
    %186 = arith.addf %185, %184 : vector<24x64xf32>
    %187 = arith.mulf %176, %186 : vector<24x64xf32>
    %cst_55 = arith.constant dense<0.000000e+00> : vector<24x32xf32>
    %188 = tpu.matmul %187, %67, %cst_55 {dimension_numbers = #tpu.dot_dimension_numbers<[1], [0], [0], [1], [0, 0, 1, 1], [], []>} : vector<24x64xf32>, vector<64x32xf32>, vector<24x32xf32> -> vector<24x32xf32>
    %189 = vector.broadcast %73 : vector<1x32xf32> to vector<24x32xf32>
    %190 = arith.addf %188, %189 : vector<24x32xf32>
    %191 = arith.addf %171, %190 : vector<24x32xf32>
    %cst_56 = arith.constant dense<0.000000e+00> : vector<24xf32>
    %192 = vector.multi_reduction <add>, %191, %cst_56 [1] : vector<24x32xf32> to vector<24xf32>
    %193 = vector.shape_cast %192 : vector<24xf32> to vector<24x1xf32>
    %cst_57 = arith.constant 3.200000e+01 : f32
    %194 = vector.broadcast %cst_57 : f32 to vector<24x1xf32>
    %195 = arith.divf %193, %194 : vector<24x1xf32>
    %196 = vector.broadcast %195 : vector<24x1xf32> to vector<24x32xf32>
    %197 = arith.subf %191, %196 : vector<24x32xf32>
    %198 = arith.mulf %197, %197 : vector<24x32xf32>
    %cst_58 = arith.constant dense<0.000000e+00> : vector<24xf32>
    %199 = vector.multi_reduction <add>, %198, %cst_58 [1] : vector<24x32xf32> to vector<24xf32>
    %200 = vector.shape_cast %199 : vector<24xf32> to vector<24x1xf32>
    %cst_59 = arith.constant 3.200000e+01 : f32
    %201 = vector.broadcast %cst_59 : f32 to vector<24x1xf32>
    %202 = arith.divf %200, %201 : vector<24x1xf32>
    %cst_60 = arith.constant 9.99999974E-6 : f32
    %203 = vector.broadcast %cst_60 : f32 to vector<24x1xf32>
    %204 = arith.addf %202, %203 : vector<24x1xf32>
    %205 = math.rsqrt %204 : vector<24x1xf32>
    %206 = vector.broadcast %205 : vector<24x1xf32> to vector<24x32xf32>
    %207 = arith.mulf %197, %206 : vector<24x32xf32>
    %208 = vector.broadcast %74 : vector<1x32xf32> to vector<24x32xf32>
    %209 = arith.mulf %207, %208 : vector<24x32xf32>
    %210 = vector.broadcast %75 : vector<1x32xf32> to vector<24x32xf32>
    %211 = arith.addf %209, %210 : vector<24x32xf32>
    %c1 = arith.constant 1 : index
    %c0_61 = arith.constant 0 : index
    %c0_62 = arith.constant 0 : index
    %212 = vector.load %arg5[%c1, %c0_61, %c0_62] : memref<2x160x128xf32, #tpu.memory_space<vmem>>, vector<1x160x128xf32>
    %213 = vector.shape_cast %212 : vector<1x160x128xf32> to vector<160x128xf32>
    %c1_63 = arith.constant 1 : index
    %c0_64 = arith.constant 0 : index
    %c0_65 = arith.constant 0 : index
    %214 = vector.load %arg4[%c1_63, %c0_64, %c0_65] : memref<2x8x128xf32, #tpu.memory_space<vmem>>, vector<1x8x128xf32>
    %215 = vector.shape_cast %214 : vector<1x8x128xf32> to vector<8x128xf32>
    %216 = vector.extract_strided_slice %213 {offsets = [0, 0], sizes = [32, 96], strides = [1, 1]} : vector<160x128xf32> to vector<32x96xf32>
    %217 = vector.extract_strided_slice %213 {offsets = [32, 0], sizes = [32, 32], strides = [1, 1]} : vector<160x128xf32> to vector<32x32xf32>
    %218 = vector.extract_strided_slice %213 {offsets = [64, 0], sizes = [32, 64], strides = [1, 1]} : vector<160x128xf32> to vector<32x64xf32>
    %219 = vector.extract_strided_slice %213 {offsets = [96, 0], sizes = [64, 32], strides = [1, 1]} : vector<160x128xf32> to vector<64x32xf32>
    %220 = vector.extract_strided_slice %215 {offsets = [0, 0], sizes = [1, 96], strides = [1, 1]} : vector<8x128xf32> to vector<1x96xf32>
    %221 = vector.extract_strided_slice %215 {offsets = [1, 0], sizes = [1, 32], strides = [1, 1]} : vector<8x128xf32> to vector<1x32xf32>
    %222 = vector.extract_strided_slice %215 {offsets = [2, 0], sizes = [1, 32], strides = [1, 1]} : vector<8x128xf32> to vector<1x32xf32>
    %223 = vector.extract_strided_slice %215 {offsets = [3, 0], sizes = [1, 32], strides = [1, 1]} : vector<8x128xf32> to vector<1x32xf32>
    %224 = vector.extract_strided_slice %215 {offsets = [4, 0], sizes = [1, 64], strides = [1, 1]} : vector<8x128xf32> to vector<1x64xf32>
    %225 = vector.extract_strided_slice %215 {offsets = [5, 0], sizes = [1, 32], strides = [1, 1]} : vector<8x128xf32> to vector<1x32xf32>
    %226 = vector.extract_strided_slice %215 {offsets = [6, 0], sizes = [1, 32], strides = [1, 1]} : vector<8x128xf32> to vector<1x32xf32>
    %227 = vector.extract_strided_slice %215 {offsets = [7, 0], sizes = [1, 32], strides = [1, 1]} : vector<8x128xf32> to vector<1x32xf32>
    %cst_66 = arith.constant dense<0.000000e+00> : vector<24x96xf32>
    %228 = tpu.matmul %211, %216, %cst_66 {dimension_numbers = #tpu.dot_dimension_numbers<[1], [0], [0], [1], [0, 0, 1, 1], [], []>} : vector<24x32xf32>, vector<32x96xf32>, vector<24x96xf32> -> vector<24x96xf32>
    %229 = vector.broadcast %220 : vector<1x96xf32> to vector<24x96xf32>
    %230 = arith.addf %228, %229 : vector<24x96xf32>
    %231 = vector.extract_strided_slice %230 {offsets = [0, 0], sizes = [24, 8], strides = [1, 1]} : vector<24x96xf32> to vector<24x8xf32>
    %232 = vector.extract_strided_slice %230 {offsets = [0, 32], sizes = [24, 8], strides = [1, 1]} : vector<24x96xf32> to vector<24x8xf32>
    %233 = vector.extract_strided_slice %230 {offsets = [0, 64], sizes = [24, 8], strides = [1, 1]} : vector<24x96xf32> to vector<24x8xf32>
    %cst_67 = arith.constant dense<0.000000e+00> : vector<24x24xf32>
    %234 = tpu.matmul %231, %232, %cst_67 {dimension_numbers = #tpu.dot_dimension_numbers<[1], [1], [0], [0], [0, 0, 1, 0], [], []>} : vector<24x8xf32>, vector<24x8xf32>, vector<24x24xf32> -> vector<24x24xf32>
    %cst_68 = arith.constant 0.353553385 : f32
    %235 = vector.broadcast %cst_68 : f32 to vector<24x24xf32>
    %236 = arith.mulf %234, %235 : vector<24x24xf32>
    %237 = arith.addf %236, %9 : vector<24x24xf32>
    %cst_69 = arith.constant dense<0xFF800000> : vector<24xf32>
    %238 = vector.multi_reduction <maximumf>, %237, %cst_69 [1] : vector<24x24xf32> to vector<24xf32>
    %239 = vector.shape_cast %238 : vector<24xf32> to vector<24x1xf32>
    %240 = vector.broadcast %239 : vector<24x1xf32> to vector<24x24xf32>
    %241 = arith.subf %237, %240 : vector<24x24xf32>
    %242 = math.exp %241 : vector<24x24xf32>
    %cst_70 = arith.constant dense<0.000000e+00> : vector<24xf32>
    %243 = vector.multi_reduction <add>, %242, %cst_70 [1] : vector<24x24xf32> to vector<24xf32>
    %244 = vector.shape_cast %243 : vector<24xf32> to vector<24x1xf32>
    %245 = vector.broadcast %244 : vector<24x1xf32> to vector<24x24xf32>
    %246 = arith.divf %242, %245 : vector<24x24xf32>
    %cst_71 = arith.constant dense<0.000000e+00> : vector<24x8xf32>
    %247 = tpu.matmul %246, %233, %cst_71 {dimension_numbers = #tpu.dot_dimension_numbers<[1], [0], [0], [1], [0, 0, 1, 1], [], []>} : vector<24x24xf32>, vector<24x8xf32>, vector<24x8xf32> -> vector<24x8xf32>
    %248 = vector.extract_strided_slice %230 {offsets = [0, 8], sizes = [24, 8], strides = [1, 1]} : vector<24x96xf32> to vector<24x8xf32>
    %249 = vector.extract_strided_slice %230 {offsets = [0, 40], sizes = [24, 8], strides = [1, 1]} : vector<24x96xf32> to vector<24x8xf32>
    %250 = vector.extract_strided_slice %230 {offsets = [0, 72], sizes = [24, 8], strides = [1, 1]} : vector<24x96xf32> to vector<24x8xf32>
    %cst_72 = arith.constant dense<0.000000e+00> : vector<24x24xf32>
    %251 = tpu.matmul %248, %249, %cst_72 {dimension_numbers = #tpu.dot_dimension_numbers<[1], [1], [0], [0], [0, 0, 1, 0], [], []>} : vector<24x8xf32>, vector<24x8xf32>, vector<24x24xf32> -> vector<24x24xf32>
    %cst_73 = arith.constant 0.353553385 : f32
    %252 = vector.broadcast %cst_73 : f32 to vector<24x24xf32>
    %253 = arith.mulf %251, %252 : vector<24x24xf32>
    %254 = arith.addf %253, %9 : vector<24x24xf32>
    %cst_74 = arith.constant dense<0xFF800000> : vector<24xf32>
    %255 = vector.multi_reduction <maximumf>, %254, %cst_74 [1] : vector<24x24xf32> to vector<24xf32>
    %256 = vector.shape_cast %255 : vector<24xf32> to vector<24x1xf32>
    %257 = vector.broadcast %256 : vector<24x1xf32> to vector<24x24xf32>
    %258 = arith.subf %254, %257 : vector<24x24xf32>
    %259 = math.exp %258 : vector<24x24xf32>
    %cst_75 = arith.constant dense<0.000000e+00> : vector<24xf32>
    %260 = vector.multi_reduction <add>, %259, %cst_75 [1] : vector<24x24xf32> to vector<24xf32>
    %261 = vector.shape_cast %260 : vector<24xf32> to vector<24x1xf32>
    %262 = vector.broadcast %261 : vector<24x1xf32> to vector<24x24xf32>
    %263 = arith.divf %259, %262 : vector<24x24xf32>
    %cst_76 = arith.constant dense<0.000000e+00> : vector<24x8xf32>
    %264 = tpu.matmul %263, %250, %cst_76 {dimension_numbers = #tpu.dot_dimension_numbers<[1], [0], [0], [1], [0, 0, 1, 1], [], []>} : vector<24x24xf32>, vector<24x8xf32>, vector<24x8xf32> -> vector<24x8xf32>
    %265 = vector.extract_strided_slice %230 {offsets = [0, 16], sizes = [24, 8], strides = [1, 1]} : vector<24x96xf32> to vector<24x8xf32>
    %266 = vector.extract_strided_slice %230 {offsets = [0, 48], sizes = [24, 8], strides = [1, 1]} : vector<24x96xf32> to vector<24x8xf32>
    %267 = vector.extract_strided_slice %230 {offsets = [0, 80], sizes = [24, 8], strides = [1, 1]} : vector<24x96xf32> to vector<24x8xf32>
    %cst_77 = arith.constant dense<0.000000e+00> : vector<24x24xf32>
    %268 = tpu.matmul %265, %266, %cst_77 {dimension_numbers = #tpu.dot_dimension_numbers<[1], [1], [0], [0], [0, 0, 1, 0], [], []>} : vector<24x8xf32>, vector<24x8xf32>, vector<24x24xf32> -> vector<24x24xf32>
    %cst_78 = arith.constant 0.353553385 : f32
    %269 = vector.broadcast %cst_78 : f32 to vector<24x24xf32>
    %270 = arith.mulf %268, %269 : vector<24x24xf32>
    %271 = arith.addf %270, %9 : vector<24x24xf32>
    %cst_79 = arith.constant dense<0xFF800000> : vector<24xf32>
    %272 = vector.multi_reduction <maximumf>, %271, %cst_79 [1] : vector<24x24xf32> to vector<24xf32>
    %273 = vector.shape_cast %272 : vector<24xf32> to vector<24x1xf32>
    %274 = vector.broadcast %273 : vector<24x1xf32> to vector<24x24xf32>
    %275 = arith.subf %271, %274 : vector<24x24xf32>
    %276 = math.exp %275 : vector<24x24xf32>
    %cst_80 = arith.constant dense<0.000000e+00> : vector<24xf32>
    %277 = vector.multi_reduction <add>, %276, %cst_80 [1] : vector<24x24xf32> to vector<24xf32>
    %278 = vector.shape_cast %277 : vector<24xf32> to vector<24x1xf32>
    %279 = vector.broadcast %278 : vector<24x1xf32> to vector<24x24xf32>
    %280 = arith.divf %276, %279 : vector<24x24xf32>
    %cst_81 = arith.constant dense<0.000000e+00> : vector<24x8xf32>
    %281 = tpu.matmul %280, %267, %cst_81 {dimension_numbers = #tpu.dot_dimension_numbers<[1], [0], [0], [1], [0, 0, 1, 1], [], []>} : vector<24x24xf32>, vector<24x8xf32>, vector<24x8xf32> -> vector<24x8xf32>
    %282 = vector.extract_strided_slice %230 {offsets = [0, 24], sizes = [24, 8], strides = [1, 1]} : vector<24x96xf32> to vector<24x8xf32>
    %283 = vector.extract_strided_slice %230 {offsets = [0, 56], sizes = [24, 8], strides = [1, 1]} : vector<24x96xf32> to vector<24x8xf32>
    %284 = vector.extract_strided_slice %230 {offsets = [0, 88], sizes = [24, 8], strides = [1, 1]} : vector<24x96xf32> to vector<24x8xf32>
    %cst_82 = arith.constant dense<0.000000e+00> : vector<24x24xf32>
    %285 = tpu.matmul %282, %283, %cst_82 {dimension_numbers = #tpu.dot_dimension_numbers<[1], [1], [0], [0], [0, 0, 1, 0], [], []>} : vector<24x8xf32>, vector<24x8xf32>, vector<24x24xf32> -> vector<24x24xf32>
    %cst_83 = arith.constant 0.353553385 : f32
    %286 = vector.broadcast %cst_83 : f32 to vector<24x24xf32>
    %287 = arith.mulf %285, %286 : vector<24x24xf32>
    %288 = arith.addf %287, %9 : vector<24x24xf32>
    %cst_84 = arith.constant dense<0xFF800000> : vector<24xf32>
    %289 = vector.multi_reduction <maximumf>, %288, %cst_84 [1] : vector<24x24xf32> to vector<24xf32>
    %290 = vector.shape_cast %289 : vector<24xf32> to vector<24x1xf32>
    %291 = vector.broadcast %290 : vector<24x1xf32> to vector<24x24xf32>
    %292 = arith.subf %288, %291 : vector<24x24xf32>
    %293 = math.exp %292 : vector<24x24xf32>
    %cst_85 = arith.constant dense<0.000000e+00> : vector<24xf32>
    %294 = vector.multi_reduction <add>, %293, %cst_85 [1] : vector<24x24xf32> to vector<24xf32>
    %295 = vector.shape_cast %294 : vector<24xf32> to vector<24x1xf32>
    %296 = vector.broadcast %295 : vector<24x1xf32> to vector<24x24xf32>
    %297 = arith.divf %293, %296 : vector<24x24xf32>
    %cst_86 = arith.constant dense<0.000000e+00> : vector<24x8xf32>
    %298 = tpu.matmul %297, %284, %cst_86 {dimension_numbers = #tpu.dot_dimension_numbers<[1], [0], [0], [1], [0, 0, 1, 1], [], []>} : vector<24x24xf32>, vector<24x8xf32>, vector<24x8xf32> -> vector<24x8xf32>
    %299 = tpu.concatenate %247, %264, %281, %298 in 1 : vector<24x8xf32>, vector<24x8xf32>, vector<24x8xf32>, vector<24x8xf32> -> vector<24x32xf32>
    %cst_87 = arith.constant dense<0.000000e+00> : vector<24x32xf32>
    %300 = tpu.matmul %299, %217, %cst_87 {dimension_numbers = #tpu.dot_dimension_numbers<[1], [0], [0], [1], [0, 0, 1, 1], [], []>} : vector<24x32xf32>, vector<32x32xf32>, vector<24x32xf32> -> vector<24x32xf32>
    %301 = vector.broadcast %221 : vector<1x32xf32> to vector<24x32xf32>
    %302 = arith.addf %300, %301 : vector<24x32xf32>
    %303 = arith.addf %211, %302 : vector<24x32xf32>
    %cst_88 = arith.constant dense<0.000000e+00> : vector<24xf32>
    %304 = vector.multi_reduction <add>, %303, %cst_88 [1] : vector<24x32xf32> to vector<24xf32>
    %305 = vector.shape_cast %304 : vector<24xf32> to vector<24x1xf32>
    %cst_89 = arith.constant 3.200000e+01 : f32
    %306 = vector.broadcast %cst_89 : f32 to vector<24x1xf32>
    %307 = arith.divf %305, %306 : vector<24x1xf32>
    %308 = vector.broadcast %307 : vector<24x1xf32> to vector<24x32xf32>
    %309 = arith.subf %303, %308 : vector<24x32xf32>
    %310 = arith.mulf %309, %309 : vector<24x32xf32>
    %cst_90 = arith.constant dense<0.000000e+00> : vector<24xf32>
    %311 = vector.multi_reduction <add>, %310, %cst_90 [1] : vector<24x32xf32> to vector<24xf32>
    %312 = vector.shape_cast %311 : vector<24xf32> to vector<24x1xf32>
    %cst_91 = arith.constant 3.200000e+01 : f32
    %313 = vector.broadcast %cst_91 : f32 to vector<24x1xf32>
    %314 = arith.divf %312, %313 : vector<24x1xf32>
    %cst_92 = arith.constant 9.99999974E-6 : f32
    %315 = vector.broadcast %cst_92 : f32 to vector<24x1xf32>
    %316 = arith.addf %314, %315 : vector<24x1xf32>
    %317 = math.rsqrt %316 : vector<24x1xf32>
    %318 = vector.broadcast %317 : vector<24x1xf32> to vector<24x32xf32>
    %319 = arith.mulf %309, %318 : vector<24x32xf32>
    %320 = vector.broadcast %222 : vector<1x32xf32> to vector<24x32xf32>
    %321 = arith.mulf %319, %320 : vector<24x32xf32>
    %322 = vector.broadcast %223 : vector<1x32xf32> to vector<24x32xf32>
    %323 = arith.addf %321, %322 : vector<24x32xf32>
    %cst_93 = arith.constant dense<0.000000e+00> : vector<24x64xf32>
    %324 = tpu.matmul %323, %218, %cst_93 {dimension_numbers = #tpu.dot_dimension_numbers<[1], [0], [0], [1], [0, 0, 1, 1], [], []>} : vector<24x32xf32>, vector<32x64xf32>, vector<24x64xf32> -> vector<24x64xf32>
    %325 = vector.broadcast %224 : vector<1x64xf32> to vector<24x64xf32>
    %326 = arith.addf %324, %325 : vector<24x64xf32>
    %cst_94 = arith.constant 5.000000e-01 : f32
    %327 = vector.broadcast %cst_94 : f32 to vector<24x64xf32>
    %328 = arith.mulf %327, %326 : vector<24x64xf32>
    %cst_95 = arith.constant 4.471500e-02 : f32
    %329 = vector.broadcast %cst_95 : f32 to vector<24x64xf32>
    %330 = arith.mulf %329, %326 : vector<24x64xf32>
    %331 = arith.mulf %330, %326 : vector<24x64xf32>
    %332 = arith.mulf %331, %326 : vector<24x64xf32>
    %333 = arith.addf %326, %332 : vector<24x64xf32>
    %cst_96 = arith.constant 0.797884583 : f32
    %334 = vector.broadcast %cst_96 : f32 to vector<24x64xf32>
    %335 = arith.mulf %334, %333 : vector<24x64xf32>
    %336 = math.tanh %335 : vector<24x64xf32>
    %cst_97 = arith.constant 1.000000e+00 : f32
    %337 = vector.broadcast %cst_97 : f32 to vector<24x64xf32>
    %338 = arith.addf %337, %336 : vector<24x64xf32>
    %339 = arith.mulf %328, %338 : vector<24x64xf32>
    %cst_98 = arith.constant dense<0.000000e+00> : vector<24x32xf32>
    %340 = tpu.matmul %339, %219, %cst_98 {dimension_numbers = #tpu.dot_dimension_numbers<[1], [0], [0], [1], [0, 0, 1, 1], [], []>} : vector<24x64xf32>, vector<64x32xf32>, vector<24x32xf32> -> vector<24x32xf32>
    %341 = vector.broadcast %225 : vector<1x32xf32> to vector<24x32xf32>
    %342 = arith.addf %340, %341 : vector<24x32xf32>
    %343 = arith.addf %323, %342 : vector<24x32xf32>
    %cst_99 = arith.constant dense<0.000000e+00> : vector<24xf32>
    %344 = vector.multi_reduction <add>, %343, %cst_99 [1] : vector<24x32xf32> to vector<24xf32>
    %345 = vector.shape_cast %344 : vector<24xf32> to vector<24x1xf32>
    %cst_100 = arith.constant 3.200000e+01 : f32
    %346 = vector.broadcast %cst_100 : f32 to vector<24x1xf32>
    %347 = arith.divf %345, %346 : vector<24x1xf32>
    %348 = vector.broadcast %347 : vector<24x1xf32> to vector<24x32xf32>
    %349 = arith.subf %343, %348 : vector<24x32xf32>
    %350 = arith.mulf %349, %349 : vector<24x32xf32>
    %cst_101 = arith.constant dense<0.000000e+00> : vector<24xf32>
    %351 = vector.multi_reduction <add>, %350, %cst_101 [1] : vector<24x32xf32> to vector<24xf32>
    %352 = vector.shape_cast %351 : vector<24xf32> to vector<24x1xf32>
    %cst_102 = arith.constant 3.200000e+01 : f32
    %353 = vector.broadcast %cst_102 : f32 to vector<24x1xf32>
    %354 = arith.divf %352, %353 : vector<24x1xf32>
    %cst_103 = arith.constant 9.99999974E-6 : f32
    %355 = vector.broadcast %cst_103 : f32 to vector<24x1xf32>
    %356 = arith.addf %354, %355 : vector<24x1xf32>
    %357 = math.rsqrt %356 : vector<24x1xf32>
    %358 = vector.broadcast %357 : vector<24x1xf32> to vector<24x32xf32>
    %359 = arith.mulf %349, %358 : vector<24x32xf32>
    %360 = vector.broadcast %226 : vector<1x32xf32> to vector<24x32xf32>
    %361 = arith.mulf %359, %360 : vector<24x32xf32>
    %362 = vector.broadcast %227 : vector<1x32xf32> to vector<24x32xf32>
    %363 = arith.addf %361, %362 : vector<24x32xf32>
    %cst_104 = arith.constant dense<0.000000e+00> : vector<24x128xf32>
    %364 = tpu.matmul %363, %8, %cst_104 {dimension_numbers = #tpu.dot_dimension_numbers<[1], [0], [0], [1], [0, 0, 1, 1], [], []>} : vector<24x32xf32>, vector<32x128xf32>, vector<24x128xf32> -> vector<24x128xf32>
    %365 = vector.broadcast %6 : vector<1x128xf32> to vector<24x128xf32>
    %366 = arith.addf %364, %365 : vector<24x128xf32>
    %367 = vector.extract_strided_slice %366 {offsets = [0, 0], sizes = [16, 128], strides = [1, 1]} : vector<24x128xf32> to vector<16x128xf32>
    %c0_105 = arith.constant 0 : index
    %c0_106 = arith.constant 0 : index
    %368 = vector.load %arg6[%c0_105, %c0_106] : memref<16x128xf32, #tpu.memory_space<vmem>>, vector<16x128xf32>
    tpu.vector_store %arg6[%c0_105, %c0_106], %367 {strides = array<i32>} : memref<16x128xf32, #tpu.memory_space<vmem>>, vector<16x128xf32>,
    %369 = tpu.iota {dimensions = array<i32: 1>} : vector<24x128xi32>
    %c5_i32 = arith.constant 5 : i32
    %370 = vector.broadcast %c5_i32 : i32 to vector<24x128xi32>
    %371 = arith.cmpi slt, %369, %370 : vector<24x128xi32>
    %cst_107 = arith.constant -1.000000e+30 : f32
    %372 = vector.broadcast %cst_107 : f32 to vector<24x128xf32>
    %373 = arith.select %371, %366, %372 : vector<24x128xi1>, vector<24x128xf32>
    %cst_108 = arith.constant dense<0xFF800000> : vector<24xf32>
    %374 = vector.multi_reduction <maximumf>, %373, %cst_108 [1] : vector<24x128xf32> to vector<24xf32>
    %375 = vector.shape_cast %374 : vector<24xf32> to vector<24x1xf32>
    %376 = vector.broadcast %375 : vector<24x1xf32> to vector<24x128xf32>
    %377 = arith.subf %373, %376 : vector<24x128xf32>
    %378 = math.exp %377 : vector<24x128xf32>
    %cst_109 = arith.constant dense<0.000000e+00> : vector<24xf32>
    %379 = vector.multi_reduction <add>, %378, %cst_109 [1] : vector<24x128xf32> to vector<24xf32>
    %380 = vector.shape_cast %379 : vector<24xf32> to vector<24x1xf32>
    %381 = math.log %380 : vector<24x1xf32>
    %382 = arith.addf %381, %375 : vector<24x1xf32>
    %383 = vector.broadcast %11 : vector<24x1xi32> to vector<24x128xi32>
    %384 = arith.cmpi eq, %369, %383 : vector<24x128xi32>
    %cst_110 = arith.constant 0.000000e+00 : f32
    %385 = vector.broadcast %cst_110 : f32 to vector<24x128xf32>
    %386 = arith.select %384, %366, %385 : vector<24x128xi1>, vector<24x128xf32>
    %cst_111 = arith.constant dense<0.000000e+00> : vector<24xf32>
    %387 = vector.multi_reduction <add>, %386, %cst_111 [1] : vector<24x128xf32> to vector<24xf32>
    %388 = vector.shape_cast %387 : vector<24xf32> to vector<24x1xf32>
    %c0_i32 = arith.constant 0 : i32
    %389 = vector.broadcast %c0_i32 : i32 to vector<24x1xi32>
    %390 = arith.cmpi sge, %11, %389 : vector<24x1xi32>
    %391 = arith.extui %390 : vector<24x1xi1> to vector<24x1xi32>
    %392 = arith.sitofp %391 : vector<24x1xi32> to vector<24x1xf32>
    %393 = vector.shape_cast %392 : vector<24x1xf32> to vector<1x24x1xf32>
    %cst_112 = arith.constant dense<0.000000e+00> : vector<1xf32>
    %394 = vector.multi_reduction <add>, %393, %cst_112 [1, 2] : vector<1x24x1xf32> to vector<1xf32>
    %395 = vector.shape_cast %394 : vector<1xf32> to vector<1x1x1xf32>
    %396 = vector.extract %395[0, 0, 0] : f32 from vector<1x1x1xf32>
    %cst_113 = arith.constant 1.000000e+00 : f32
    %397 = arith.maximumf %396, %cst_113 : f32
    %398 = arith.subf %382, %388 : vector<24x1xf32>
    %399 = arith.mulf %398, %392 : vector<24x1xf32>
    %400 = vector.shape_cast %399 : vector<24x1xf32> to vector<1x24x1xf32>
    %cst_114 = arith.constant dense<0.000000e+00> : vector<1xf32>
    %401 = vector.multi_reduction <add>, %400, %cst_114 [1, 2] : vector<1x24x1xf32> to vector<1xf32>
    %402 = vector.shape_cast %401 : vector<1xf32> to vector<1x1x1xf32>
    %403 = vector.extract %402[0, 0, 0] : f32 from vector<1x1x1xf32>
    %404 = arith.divf %403, %397 : f32
    %c0_115 = arith.constant 0 : index
    %c0_116 = arith.constant 0 : index
    %405 = memref.load %arg7[%c0_115, %c0_116] : memref<1x1xf32, #tpu.memory_space<smem>>
    memref.store %404, %arg7[%c0_115, %c0_116] : memref<1x1xf32, #tpu.memory_space<smem>>
    return
  }
}

</mosaic_0001>

<llo_original>
// kernel: _lambda_.1
$region0: #{_lambda_.1}
  #allocation0 [shape = 'u32[]', space=smem, size = 0x4, offset = 0x4, fixed_abs, tag = 'smem constant byte address 0x4 - core index']
  #allocation1 [shape = 'u32[144,128]{1,0:T(1,128)}', space=vmem, size = 0x12000, scoped, tag = 'internal scratch']
  %s0 = inlined_call_operand.vmem [shape: f32[16,32], index: 0, kind: input, shape index: {}]
  %s1 = inlined_call_operand.vmem [shape: f32[8,768], index: 1, kind: input, shape index: {}]
  %s2 = inlined_call_operand.vmem [shape: f32[768,32], index: 2, kind: input, shape index: {}]
  %s3 = inlined_call_operand.vmem [shape: f32[96,128], index: 3, kind: input, shape index: {}]
  %s4 = inlined_call_operand.vmem [shape: f32[2,8,128], index: 4, kind: input, shape index: {}]
  %s5 = inlined_call_operand.vmem [shape: f32[2,160,128], index: 5, kind: input, shape index: {}]
  %s6 = inlined_call_operand.vmem [shape: f32[16,128], index: 6, kind: output, shape index: {0}]
  %s7 = inlined_call_operand.hbm [shape: f32[1,1], index: 7, kind: output, shape index: {1}]
  %8 = xla_tuple %s6, %s7
  %s9 = sld [smem:[#allocation0]]
  $region42: #{_lambda_.1} parent=0
    _
  %s11 = ssub.s32 1, %s9
  %s12 = scalar_select 0, %s11, %s9
  $region1: #{_lambda_.1} parent=0
    #allocation2 [shape = 'u8[512]{0}', space=smem, size = 0x200, scoped, tag = 'output window, operand 1, single buffered']
    #allocation3 [shape = 's32[1]{0}', space=sflag, size = 0x4, scoped, tag = 'scoped memory for _lambda_.1']
    %13 = vsyncpa [#allocation3], 0
    // Predicated region
    $region2: #{_lambda_.1} parent=1 // pred_check
      _
    $region3: #{_lambda_.1} parent=1 // pred_check_branch
      %15 = sbr.rel (0) target = $region5
    $region4: #{_lambda_.1} parent=1 // pred_region
      _
    $region5: #{_lambda_.1} parent=1 // pred_fallthru
      _
    // Predicated region
    $region6: #{_lambda_.1} parent=1 // pred_check
      _
    $region7: #{_lambda_.1} parent=1 // pred_check_branch
      %17 = sbr.rel (0) target = $region9
    $region8: #{_lambda_.1} parent=1 // pred_region
      _
    $region9: #{_lambda_.1} parent=1 // pred_fallthru
      _
    // Predicated region
    $region10: #{_lambda_.1} parent=1 // pred_check
      _
    $region11: #{_lambda_.1} parent=1 // pred_check_branch
      %19 = sbr.rel (0) target = $region13
    $region12: #{_lambda_.1} parent=1 // pred_region
      _
    $region13: #{_lambda_.1} parent=1 // pred_fallthru
      _
    // Predicated region
    $region14: #{_lambda_.1} parent=1 // pred_check
      _
    $region15: #{_lambda_.1} parent=1 // pred_check_branch
      %21 = sbr.rel (0) target = $region17
    $region16: #{_lambda_.1} parent=1 // pred_region
      _
    $region17: #{_lambda_.1} parent=1 // pred_fallthru
      _
    // Predicated region
    $region18: #{_lambda_.1} parent=1 // pred_check
      _
    $region19: #{_lambda_.1} parent=1 // pred_check_branch
      %23 = sbr.rel (0) target = $region21
    $region20: #{_lambda_.1} parent=1 // pred_region
      _
    $region21: #{_lambda_.1} parent=1 // pred_fallthru
      _
    // Predicated region
    $region22: #{_lambda_.1} parent=1 // pred_check
      _
    $region23: #{_lambda_.1} parent=1 // pred_check_branch
      %25 = sbr.rel (0) target = $region25
    $region24: #{_lambda_.1} parent=1 // pred_region
      _
    $region25: #{_lambda_.1} parent=1 // pred_fallthru
      _
    %v26 = vld [vmem:[%s3] sm:$0xff]
    %v27 = vld [vmem:[%s3 + $0x8] sm:$0xff]
    %v28 = vld [vmem:[%s3 + $0x10] sm:$0xff]
    %v29 = vld [vmem:[%s3 + $0x18] sm:$0xff]
    %v30 = vld [vmem:[%s3 + $0x20] sm:$0xff]
    %v31 = vld [vmem:[%s3 + $0x28] sm:$0xff]
    %v32 = vld [vmem:[%s3 + $0x30] sm:$0xff]
    %v33 = vld [vmem:[%s3 + $0x38] sm:$0xff]
    %v34 = vld [vmem:[%s3 + $0x40] sm:$0xff]
    %v35 = vld [vmem:[%s3 + $0x48] sm:$0xff]
    %v36 = vld [vmem:[%s3 + $0x50] sm:$0xff]
    %v37 = vld [vmem:[%s3 + $0x58] sm:$0xff]
    %v38 = vcvt.f32.s32.to.zero.pseudo %v35
    %v39 = vcvt.f32.s32.to.zero.pseudo %v36
    %v40 = vcvt.f32.s32.to.zero.pseudo %v37
    %v41 = vld [vmem:[%s0] sm:$0xff]
    %v42 = vld [vmem:[%s0 + $0x8] sm:$0xff]
    %vm43 = vcmask 261120
    %v44 = vsel %vm43, %v41, 0.0
    %45 = vadd.xlane.f32.xlu0 %v44
    %v46 = vpop.xlane.xlu0 %45
    %v47 = vsel %vm43, %v42, 0.0
    %48 = vadd.xlane.f32.xlu0 %v47
    %v49 = vpop.xlane.xlu0 %48
    %v50 = vrcp.pop 32.0
    %v51 = vmul.f32 %v46, %v50
    %v52 = vmul.f32 %v49, %v50
    %v53 = vsub.f32 %v41, %v51
    %v54 = vsub.f32 %v42, %v52
    %v55 = vmul.f32 %v53, %v53
    %v56 = vmul.f32 %v54, %v54
    %v57 = vsel %vm43, %v55, 0.0
    %58 = vadd.xlane.f32.xlu0 %v57
    %v59 = vpop.xlane.xlu0 %58
    %v60 = vsel %vm43, %v56, 0.0
    %61 = vadd.xlane.f32.xlu0 %v60
    %v62 = vpop.xlane.xlu0 %61
    %v63 = vmul.f32 %v59, %v50
    %v64 = vmul.f32 %v62, %v50
    %v65 = vadd.f32 %v63, 1e-05
    %v66 = vadd.f32 %v64, 1e-05
    %v67 = vrsqrt.pop %v65
    %v68 = vrsqrt.pop %v66
    %v69 = vmul.f32 %v53, %v67
    %v70 = vmul.f32 %v54, %v68
    %v71 = vlaneseq
    %v72 = vshrl.u32 %v71, 7
    %v73 = vsub.s32 0, %v72
    %v74 = vrot.slane %v26, %v73
    %v75 = vmul.f32 %v69, %v74
    %v76 = vmul.f32 %v70, %v74
    %v77 = vlaneseq
    %v78 = vshrl.u32 %v77, 7
    %v79 = vsub.s32 1, %v78
    %v80 = vrot.slane %v26, %v79
    %v81 = vadd.f32 %v75, %v80
    %v82 = vadd.f32 %v76, %v80
    %v83 = vld [vmem:[%s1] sm:$0xff]
    %v84 = vld [vmem:[%s1 + $0x8] sm:$0xff]
    %v85 = vld [vmem:[%s1 + $0x10] sm:$0xff]
    %v86 = vld [vmem:[%s1 + $0x18] sm:$0xff]
    %v87 = vld [vmem:[%s1 + $0x20] sm:$0xff]
    %v88 = vld [vmem:[%s1 + $0x28] sm:$0xff]
    %v89 = vld [vmem:[%s2] sm:$0xff]
    %v90 = vld [vmem:[%s2 + $0x8] sm:$0xff]
    %v91 = vld [vmem:[%s2 + $0x10] sm:$0xff]
    %v92 = vld [vmem:[%s2 + $0x18] sm:$0xff]
    %v93 = vld [vmem:[%s2 + $0x20] sm:$0xff]
    %v94 = vld [vmem:[%s2 + $0x28] sm:$0xff]
    %v95 = vld [vmem:[%s2 + $0x30] sm:$0xff]
    %v96 = vld [vmem:[%s2 + $0x38] sm:$0xff]
    %v97 = vld [vmem:[%s2 + $0x40] sm:$0xff]
    %v98 = vld [vmem:[%s2 + $0x48] sm:$0xff]
    %v99 = vld [vmem:[%s2 + $0x50] sm:$0xff]
    %v100 = vld [vmem:[%s2 + $0x58] sm:$0xff]
    %v101 = vld [vmem:[%s2 + $0x60] sm:$0xff]
    %v102 = vld [vmem:[%s2 + $0x68] sm:$0xff]
    %v103 = vld [vmem:[%s2 + $0x70] sm:$0xff]
    %v104 = vld [vmem:[%s2 + $0x78] sm:$0xff]
    %v105 = vld [vmem:[%s2 + $0x80] sm:$0xff]
    %v106 = vld [vmem:[%s2 + $0x88] sm:$0xff]
    %v107 = vld [vmem:[%s2 + $0x90] sm:$0xff]
    %v108 = vld [vmem:[%s2 + $0x98] sm:$0xff]
    %v109 = vld [vmem:[%s2 + $0xa0] sm:$0xff]
    %v110 = vld [vmem:[%s2 + $0xa8] sm:$0xff]
    %v111 = vld [vmem:[%s2 + $0xb0] sm:$0xff]
    %v112 = vld [vmem:[%s2 + $0xb8] sm:$0xff]
    %v113 = vld [vmem:[%s2 + $0xc0] sm:$0xff]
    %v114 = vld [vmem:[%s2 + $0xc8] sm:$0xff]
    %v115 = vld [vmem:[%s2 + $0xd0] sm:$0xff]
    %v116 = vld [vmem:[%s2 + $0xd8] sm:$0xff]
    %v117 = vld [vmem:[%s2 + $0xe0] sm:$0xff]
    %v118 = vld [vmem:[%s2 + $0xe8] sm:$0xff]
    %v119 = vld [vmem:[%s2 + $0xf0] sm:$0xff]
    %v120 = vld [vmem:[%s2 + $0xf8] sm:$0xff]
    %v121 = vld [vmem:[%s2 + $0x100] sm:$0xff]
    %v122 = vld [vmem:[%s2 + $0x108] sm:$0xff]
    %v123 = vld [vmem:[%s2 + $0x110] sm:$0xff]
    %v124 = vld [vmem:[%s2 + $0x118] sm:$0xff]
    %v125 = vld [vmem:[%s2 + $0x120] sm:$0xff]
    %v126 = vld [vmem:[%s2 + $0x128] sm:$0xff]
    %v127 = vld [vmem:[%s2 + $0x130] sm:$0xff]
    %v128 = vld [vmem:[%s2 + $0x138] sm:$0xff]
    %v129 = vld [vmem:[%s2 + $0x140] sm:$0xff]
    %v130 = vld [vmem:[%s2 + $0x148] sm:$0xff]
    %v131 = vld [vmem:[%s2 + $0x150] sm:$0xff]
    %v132 = vld [vmem:[%s2 + $0x158] sm:$0xff]
    %v133 = vld [vmem:[%s2 + $0x160] sm:$0xff]
    %v134 = vld [vmem:[%s2 + $0x168] sm:$0xff]
    %v135 = vld [vmem:[%s2 + $0x170] sm:$0xff]
    %v136 = vld [vmem:[%s2 + $0x178] sm:$0xff]
    %v137 = vld [vmem:[%s2 + $0x180] sm:$0xff]
    %v138 = vld [vmem:[%s2 + $0x188] sm:$0xff]
    %v139 = vld [vmem:[%s2 + $0x190] sm:$0xff]
    %v140 = vld [vmem:[%s2 + $0x198] sm:$0xff]
    %v141 = vld [vmem:[%s2 + $0x1a0] sm:$0xff]
    %v142 = vld [vmem:[%s2 + $0x1a8] sm:$0xff]
    %v143 = vld [vmem:[%s2 + $0x1b0] sm:$0xff]
    %v144 = vld [vmem:[%s2 + $0x1b8] sm:$0xff]
    %v145 = vld [vmem:[%s2 + $0x1c0] sm:$0xff]
    %v146 = vld [vmem:[%s2 + $0x1c8] sm:$0xff]
    %v147 = vld [vmem:[%s2 + $0x1d0] sm:$0xff]
    %v148 = vld [vmem:[%s2 + $0x1d8] sm:$0xff]
    %v149 = vld [vmem:[%s2 + $0x1e0] sm:$0xff]
    %v150 = vld [vmem:[%s2 + $0x1e8] sm:$0xff]
    %v151 = vld [vmem:[%s2 + $0x1f0] sm:$0xff]
    %v152 = vld [vmem:[%s2 + $0x1f8] sm:$0xff]
    %v153 = vld [vmem:[%s2 + $0x200] sm:$0xff]
    %v154 = vld [vmem:[%s2 + $0x208] sm:$0xff]
    %v155 = vld [vmem:[%s2 + $0x210] sm:$0xff]
    %v156 = vld [vmem:[%s2 + $0x218] sm:$0xff]
    %v157 = vld [vmem:[%s2 + $0x220] sm:$0xff]
    %v158 = vld [vmem:[%s2 + $0x228] sm:$0xff]
    %v159 = vld [vmem:[%s2 + $0x230] sm:$0xff]
    %v160 = vld [vmem:[%s2 + $0x238] sm:$0xff]
    %v161 = vld [vmem:[%s2 + $0x240] sm:$0xff]
    %v162 = vld [vmem:[%s2 + $0x248] sm:$0xff]
    %v163 = vld [vmem:[%s2 + $0x250] sm:$0xff]
    %v164 = vld [vmem:[%s2 + $0x258] sm:$0xff]
    %v165 = vld [vmem:[%s2 + $0x260] sm:$0xff]
    %v166 = vld [vmem:[%s2 + $0x268] sm:$0xff]
    %v167 = vld [vmem:[%s2 + $0x270] sm:$0xff]
    %v168 = vld [vmem:[%s2 + $0x278] sm:$0xff]
    %v169 = vld [vmem:[%s2 + $0x280] sm:$0xff]
    %v170 = vld [vmem:[%s2 + $0x288] sm:$0xff]
    %v171 = vld [vmem:[%s2 + $0x290] sm:$0xff]
    %v172 = vld [vmem:[%s2 + $0x298] sm:$0xff]
    %v173 = vld [vmem:[%s2 + $0x2a0] sm:$0xff]
    %v174 = vld [vmem:[%s2 + $0x2a8] sm:$0xff]
    %v175 = vld [vmem:[%s2 + $0x2b0] sm:$0xff]
    %v176 = vld [vmem:[%s2 + $0x2b8] sm:$0xff]
    %v177 = vld [vmem:[%s2 + $0x2c0] sm:$0xff]
    %v178 = vld [vmem:[%s2 + $0x2c8] sm:$0xff]
    %v179 = vld [vmem:[%s2 + $0x2d0] sm:$0xff]
    %v180 = vld [vmem:[%s2 + $0x2d8] sm:$0xff]
    %v181 = vld [vmem:[%s2 + $0x2e0] sm:$0xff]
    %v182 = vld [vmem:[%s2 + $0x2e8] sm:$0xff]
    %v183 = vld [vmem:[%s2 + $0x2f0] sm:$0xff]
    %v184 = vld [vmem:[%s2 + $0x2f8] sm:$0xff]
    %v185 = vlaneseq
    %v186 = vshrl.u32 %v185, 7
    %v187 = vsub.s32 2, %v186
    %v188 = vrot.slane %v26, %v187
    %189 = vmatprep.subr.mxu0 0.0
    %190 = vmatpush1.msra.mxu0 %v104
    %191 = vmatprep.subr.mxu0 0.0
    %192 = vmatpush1.msra.mxu0 %v103
    %193 = vmatprep.subr.mxu0 0.0
    %194 = vmatpush1.msra.mxu0 %v102
    %195 = vmatprep.subr.mxu0 0.0
    %196 = vmatpush1.msra.mxu0 %v101
    %197 = vmatprep.subr.mxu0 0.0
    %198 = vmatpush1.msra.mxu0 %v100
    %199 = vmatprep.subr.mxu0 0.0
    %200 = vmatpush1.msra.mxu0 %v99
    %201 = vmatprep.subr.mxu0 0.0
    %202 = vmatpush1.msra.mxu0 %v98
    %203 = vmatprep.subr.mxu0 0.0
    %204 = vmatpush1.msra.mxu0 %v97
    %205 = vmatprep.subr.mxu0 0.0
    %206 = vmatpush1.msra.mxu0 %v96
    %207 = vmatprep.subr.mxu0 0.0
    %208 = vmatpush1.msra.mxu0 %v95
    %209 = vmatprep.subr.mxu0 0.0
    %210 = vmatpush1.msra.mxu0 %v94
    %211 = vmatprep.subr.mxu0 0.0
    %212 = vmatpush1.msra.mxu0 %v93
    %213 = vmatprep.subr.mxu0 0.0
    %214 = vmatpush1.msra.mxu0 %v92
    %215 = vmatprep.subr.mxu0 0.0
    %216 = vmatpush1.msra.mxu0 %v91
    %217 = vmatprep.subr.mxu0 0.0
    %218 = vmatpush1.msra.mxu0 %v90
    %219 = vmatprep.subr.mxu0 0.0
    %220 = vmatpush1.msra.mxu0 %v89
    %221 = vmatprep.subr.mxu0 0.0
    %222 = vmatpush2.msra.mxu0 %v120
    %223 = vmatprep.subr.mxu0 0.0
    %224 = vmatpush2.msra.mxu0 %v119
    %225 = vmatprep.subr.mxu0 0.0
    %226 = vmatpush2.msra.mxu0 %v118
    %227 = vmatprep.subr.mxu0 0.0
    %228 = vmatpush2.msra.mxu0 %v117
    %229 = vmatprep.subr.mxu0 0.0
    %230 = vmatpush2.msra.mxu0 %v116
    %231 = vmatprep.subr.mxu0 0.0
    %232 = vmatpush2.msra.mxu0 %v115
    %233 = vmatprep.subr.mxu0 0.0
    %234 = vmatpush2.msra.mxu0 %v114
    %235 = vmatprep.subr.mxu0 0.0
    %236 = vmatpush2.msra.mxu0 %v113
    %237 = vmatprep.subr.mxu0 0.0
    %238 = vmatpush2.msra.mxu0 %v112
    %239 = vmatprep.subr.mxu0 0.0
    %240 = vmatpush2.msra.mxu0 %v111
    %241 = vmatprep.subr.mxu0 0.0
    %242 = vmatpush2.msra.mxu0 %v110
    %243 = vmatprep.subr.mxu0 0.0
    %244 = vmatpush2.msra.mxu0 %v109
    %245 = vmatprep.subr.mxu0 0.0
    %246 = vmatpush2.msra.mxu0 %v108
    %247 = vmatprep.subr.mxu0 0.0
    %248 = vmatpush2.msra.mxu0 %v107
    %249 = vmatprep.subr.mxu0 0.0
    %250 = vmatpush2.msra.mxu0 %v106
    %251 = vmatprep.subr.mxu0 0.0
    %252 = vmatpush2.msra.mxu0 %v105
    %253 = vmatprep.mubr.f32.mxu0 %v84
    %254 = vmatmul.mubr.f32.gmra.mxu0 %v83
    %v255 = vpop.f32.mrf.mxu0
    %v256 = vadd.f32 %v188, %v255
    %v257 = vpop.f32.mrf.mxu0
    %258 = vdwg.mxu0
    %259 = vmatprep.subr.mxu0 0.0
    %260 = vmatpush1.msra.mxu0 %v136
    %261 = vmatprep.subr.mxu0 0.0
    %262 = vmatpush1.msra.mxu0 %v135
    %263 = vmatprep.subr.mxu0 0.0
    %264 = vmatpush1.msra.mxu0 %v134
    %265 = vmatprep.subr.mxu0 0.0
    %266 = vmatpush1.msra.mxu0 %v133
    %267 = vmatprep.subr.mxu0 0.0
    %268 = vmatpush1.msra.mxu0 %v132
    %269 = vmatprep.subr.mxu0 0.0
    %270 = vmatpush1.msra.mxu0 %v131
    %271 = vmatprep.subr.mxu0 0.0
    %272 = vmatpush1.msra.mxu0 %v130
    %273 = vmatprep.subr.mxu0 0.0
    %274 = vmatpush1.msra.mxu0 %v129
    %275 = vmatprep.subr.mxu0 0.0
    %276 = vmatpush1.msra.mxu0 %v128
    %277 = vmatprep.subr.mxu0 0.0
    %278 = vmatpush1.msra.mxu0 %v127
    %279 = vmatprep.subr.mxu0 0.0
    %280 = vmatpush1.msra.mxu0 %v126
    %281 = vmatprep.subr.mxu0 0.0
    %282 = vmatpush1.msra.mxu0 %v125
    %283 = vmatprep.subr.mxu0 0.0
    %284 = vmatpush1.msra.mxu0 %v124
    %285 = vmatprep.subr.mxu0 0.0
    %286 = vmatpush1.msra.mxu0 %v123
    %287 = vmatprep.subr.mxu0 0.0
    %288 = vmatpush1.msra.mxu0 %v122
    %289 = vmatprep.subr.mxu0 0.0
    %290 = vmatpush1.msra.mxu0 %v121
    %291 = vmatprep.subr.mxu0 0.0
    %292 = vmatpush2.msra.mxu0 %v152
    %293 = vmatprep.subr.mxu0 0.0
    %294 = vmatpush2.msra.mxu0 %v151
    %295 = vmatprep.subr.mxu0 0.0
    %296 = vmatpush2.msra.mxu0 %v150
    %297 = vmatprep.subr.mxu0 0.0
    %298 = vmatpush2.msra.mxu0 %v149
    %299 = vmatprep.subr.mxu0 0.0
    %300 = vmatpush2.msra.mxu0 %v148
    %301 = vmatprep.subr.mxu0 0.0
    %302 = vmatpush2.msra.mxu0 %v147
    %303 = vmatprep.subr.mxu0 0.0
    %304 = vmatpush2.msra.mxu0 %v146
    %305 = vmatprep.subr.mxu0 0.0
    %306 = vmatpush2.msra.mxu0 %v145
    %307 = vmatprep.subr.mxu0 0.0
    %308 = vmatpush2.msra.mxu0 %v144
    %309 = vmatprep.subr.mxu0 0.0
    %310 = vmatpush2.msra.mxu0 %v143
    %311 = vmatprep.subr.mxu0 0.0
    %312 = vmatpush2.msra.mxu0 %v142
    %313 = vmatprep.subr.mxu0 0.0
    %314 = vmatpush2.msra.mxu0 %v141
    %315 = vmatprep.subr.mxu0 0.0
    %316 = vmatpush2.msra.mxu0 %v140
    %317 = vmatprep.subr.mxu0 0.0
    %318 = vmatpush2.msra.mxu0 %v139
    %319 = vmatprep.subr.mxu0 0.0
    %320 = vmatpush2.msra.mxu0 %v138
    %321 = vmatprep.subr.mxu0 0.0
    %322 = vmatpush2.msra.mxu0 %v137
    %323 = vmatprep.mubr.f32.mxu0 %v86
    %324 = vmatmul.mubr.f32.gmra.mxu0 %v85
    %v325 = vpop.f32.mrf.mxu0
    %v326 = vadd.f32 %v256, %v325
    %v327 = vpop.f32.mrf.mxu0
    %328 = vdwg.mxu0
    %329 = vmatprep.subr.mxu0 0.0
    %330 = vmatpush1.msra.mxu0 %v168
    %331 = vmatprep.subr.mxu0 0.0
    %332 = vmatpush1.msra.mxu0 %v167
    %333 = vmatprep.subr.mxu0 0.0
    %334 = vmatpush1.msra.mxu0 %v166
    %335 = vmatprep.subr.mxu0 0.0
    %336 = vmatpush1.msra.mxu0 %v165
    %337 = vmatprep.subr.mxu0 0.0
    %338 = vmatpush1.msra.mxu0 %v164
    %339 = vmatprep.subr.mxu0 0.0
    %340 = vmatpush1.msra.mxu0 %v163
    %341 = vmatprep.subr.mxu0 0.0
    %342 = vmatpush1.msra.mxu0 %v162
    %343 = vmatprep.subr.mxu0 0.0
    %344 = vmatpush1.msra.mxu0 %v161
    %345 = vmatprep.subr.mxu0 0.0
    %346 = vmatpush1.msra.mxu0 %v160
    %347 = vmatprep.subr.mxu0 0.0
    %348 = vmatpush1.msra.mxu0 %v159
    %349 = vmatprep.subr.mxu0 0.0
    %350 = vmatpush1.msra.mxu0 %v158
    %351 = vmatprep.subr.mxu0 0.0
    %352 = vmatpush1.msra.mxu0 %v157
    %353 = vmatprep.subr.mxu0 0.0
    %354 = vmatpush1.msra.mxu0 %v156
    %355 = vmatprep.subr.mxu0 0.0
    %356 = vmatpush1.msra.mxu0 %v155
    %357 = vmatprep.subr.mxu0 0.0
    %358 = vmatpush1.msra.mxu0 %v154
    %359 = vmatprep.subr.mxu0 0.0
    %360 = vmatpush1.msra.mxu0 %v153
    %361 = vmatprep.subr.mxu0 0.0
    %362 = vmatpush2.msra.mxu0 %v184
    %363 = vmatprep.subr.mxu0 0.0
    %364 = vmatpush2.msra.mxu0 %v183
    %365 = vmatprep.subr.mxu0 0.0
    %366 = vmatpush2.msra.mxu0 %v182
    %367 = vmatprep.subr.mxu0 0.0
    %368 = vmatpush2.msra.mxu0 %v181
    %369 = vmatprep.subr.mxu0 0.0
    %370 = vmatpush2.msra.mxu0 %v180
    %371 = vmatprep.subr.mxu0 0.0
    %372 = vmatpush2.msra.mxu0 %v179
    %373 = vmatprep.subr.mxu0 0.0
    %374 = vmatpush2.msra.mxu0 %v178
    %375 = vmatprep.subr.mxu0 0.0
    %376 = vmatpush2.msra.mxu0 %v177
    %377 = vmatprep.subr.mxu0 0.0
    %378 = vmatpush2.msra.mxu0 %v176
    %379 = vmatprep.subr.mxu0 0.0
    %380 = vmatpush2.msra.mxu0 %v175
    %381 = vmatprep.subr.mxu0 0.0
    %382 = vmatpush2.msra.mxu0 %v174
    %383 = vmatprep.subr.mxu0 0.0
    %384 = vmatpush2.msra.mxu0 %v173
    %385 = vmatprep.subr.mxu0 0.0
    %386 = vmatpush2.msra.mxu0 %v172
    %387 = vmatprep.subr.mxu0 0.0
    %388 = vmatpush2.msra.mxu0 %v171
    %389 = vmatprep.subr.mxu0 0.0
    %390 = vmatpush2.msra.mxu0 %v170
    %391 = vmatprep.subr.mxu0 0.0
    %392 = vmatpush2.msra.mxu0 %v169
    %393 = vmatprep.mubr.f32.mxu0 %v88
    %394 = vmatmul.mubr.f32.gmra.mxu0 %v87
    %v395 = vpop.f32.mrf.mxu0
    %v396 = vadd.f32 %v326, %v395
    %v397 = vpop.f32.mrf.mxu0
    %398 = vdwg.mxu0
    %v399 = vadd.f32 %v396, %v27
    %v400 = vsel %vm43, %v399, 0.0
    %401 = vadd.xlane.f32.xlu0 %v400
    %v402 = vpop.xlane.xlu0 %401
    %v403 = vmul.f32 %v402, %v50
    %v404 = vsub.f32 %v399, %v403
    %v405 = vmul.f32 %v404, %v404
    %v406 = vsel %vm43, %v405, 0.0
    %407 = vadd.xlane.f32.xlu0 %v406
    %v408 = vpop.xlane.xlu0 %407
    %v409 = vmul.f32 %v408, %v50
    %v410 = vadd.f32 %v409, 1e-05
    %v411 = vrsqrt.pop %v410
    %v412 = vmul.f32 %v404, %v411
    %v413 = vlaneseq
    %v414 = vshrl.u32 %v413, 7
    %v415 = vsub.s32 3, %v414
    %v416 = vrot.slane %v26, %v415
    %v417 = vmul.f32 %v412, %v416
    %v418 = vlaneseq
    %v419 = vshrl.u32 %v418, 7
    %v420 = vsub.s32 4, %v419
    %v421 = vrot.slane %v26, %v420
    %v422 = vadd.f32 %v417, %v421
    %v423 = vld [vmem:[%s5] sm:$0xff]
    %v424 = vld [vmem:[%s5 + $0x8] sm:$0xff]
    %v425 = vld [vmem:[%s5 + $0x10] sm:$0xff]
    %v426 = vld [vmem:[%s5 + $0x18] sm:$0xff]
    %v427 = vld [vmem:[%s5 + $0x20] sm:$0xff]
    %v428 = vld [vmem:[%s5 + $0x28] sm:$0xff]
    %v429 = vld [vmem:[%s5 + $0x30] sm:$0xff]
    %v430 = vld [vmem:[%s5 + $0x38] sm:$0xff]
    %v431 = vld [vmem:[%s5 + $0x40] sm:$0xff]
    %v432 = vld [vmem:[%s5 + $0x48] sm:$0xff]
    %v433 = vld [vmem:[%s5 + $0x50] sm:$0xff]
    %v434 = vld [vmem:[%s5 + $0x58] sm:$0xff]
    %v435 = vld [vmem:[%s5 + $0x60] sm:$0xff]
    %v436 = vld [vmem:[%s5 + $0x68] sm:$0xff]
    %v437 = vld [vmem:[%s5 + $0x70] sm:$0xff]
    %v438 = vld [vmem:[%s5 + $0x78] sm:$0xff]
    %v439 = vld [vmem:[%s5 + $0x80] sm:$0xff]
    %v440 = vld [vmem:[%s5 + $0x88] sm:$0xff]
    %v441 = vld [vmem:[%s5 + $0x90] sm:$0xff]
    %v442 = vld [vmem:[%s5 + $0x98] sm:$0xff]
    %v443 = vld [vmem:[%s4] sm:$0xff]
    %v444 = vlaneseq
    %v445 = vshrl.u32 %v444, 7
    %v446 = vsub.s32 0, %v445
    %v447 = vrot.slane %v443, %v446
    %v449 = vsel %vm43, %v81, 0
    %v452 = vsel %vm43, %v82, 0
    %v455 = vsel %vm43, %v422, 0
    %457 = vmatprep.subr.mxu0 0.0
    %458 = vmatpush1.msra.mxu0 0.0
    %459 = vmatprep.subr.mxu0 0.0
    %460 = vmatpush1.msra.mxu0 0.0
    %461 = vmatprep.subr.mxu0 0.0
    %462 = vmatpush1.msra.mxu0 0.0
    %463 = vmatprep.subr.mxu0 0.0
    %464 = vmatpush1.msra.mxu0 0.0
    %465 = vmatprep.subr.mxu0 0.0
    %466 = vmatpush1.msra.mxu0 0.0
    %467 = vmatprep.subr.mxu0 0.0
    %468 = vmatpush1.msra.mxu0 0.0
    %469 = vmatprep.subr.mxu0 0.0
    %470 = vmatpush1.msra.mxu0 0.0
    %471 = vmatprep.subr.mxu0 0.0
    %472 = vmatpush1.msra.mxu0 0.0
    %473 = vmatprep.subr.mxu0 0.0
    %474 = vmatpush1.msra.mxu0 0.0
    %475 = vmatprep.subr.mxu0 0.0
    %476 = vmatpush1.msra.mxu0 0.0
    %477 = vmatprep.subr.mxu0 0.0
    %478 = vmatpush1.msra.mxu0 0.0
    %479 = vmatprep.subr.mxu0 0.0
    %480 = vmatpush1.msra.mxu0 0.0
    %481 = vmatprep.subr.mxu0 0.0
    %482 = vmatpush1.msra.mxu0 %v426
    %483 = vmatprep.subr.mxu0 0.0
    %484 = vmatpush1.msra.mxu0 %v425
    %485 = vmatprep.subr.mxu0 0.0
    %486 = vmatpush1.msra.mxu0 %v424
    %487 = vmatprep.subr.mxu0 0.0
    %488 = vmatpush1.msra.mxu0 %v423
    %489 = vmatprep.subr.mxu0 0.0
    %490 = vmatpush2.msra.mxu0 0.0
    %491 = vmatprep.subr.mxu0 0.0
    %492 = vmatpush2.msra.mxu0 0.0
    %493 = vmatprep.subr.mxu0 0.0
    %494 = vmatpush2.msra.mxu0 0.0
    %495 = vmatprep.subr.mxu0 0.0
    %496 = vmatpush2.msra.mxu0 0.0
    %497 = vmatprep.subr.mxu0 0.0
    %498 = vmatpush2.msra.mxu0 0.0
    %499 = vmatprep.subr.mxu0 0.0
    %500 = vmatpush2.msra.mxu0 0.0
    %501 = vmatprep.subr.mxu0 0.0
    %502 = vmatpush2.msra.mxu0 0.0
    %503 = vmatprep.subr.mxu0 0.0
    %504 = vmatpush2.msra.mxu0 0.0
    %505 = vmatprep.subr.mxu0 0.0
    %506 = vmatpush2.msra.mxu0 0.0
    %507 = vmatprep.subr.mxu0 0.0
    %508 = vmatpush2.msra.mxu0 0.0
    %509 = vmatprep.subr.mxu0 0.0
    %510 = vmatpush2.msra.mxu0 0.0
    %511 = vmatprep.subr.mxu0 0.0
    %512 = vmatpush2.msra.mxu0 0.0
    %513 = vmatprep.subr.mxu0 0.0
    %514 = vmatpush2.msra.mxu0 0.0
    %515 = vmatprep.subr.mxu0 0.0
    %516 = vmatpush2.msra.mxu0 0.0
    %517 = vmatprep.subr.mxu0 0.0
    %518 = vmatpush2.msra.mxu0 0.0
    %519 = vmatprep.subr.mxu0 0.0
    %520 = vmatpush2.msra.mxu0 0.0
    %521 = vmatprep.mubr.f32.mxu0 0.0
    %522 = vmatmul.mubr.f32.gmra.mxu0 %v449
    %v523 = vpop.f32.mrf.mxu0
    %v524 = vadd.f32 %v447, %v523
    %v525 = vpop.f32.mrf.mxu0
    %526 = vmatprep.mubr.f32.mxu0 0.0
    %527 = vmatmul.mubr.f32.gmra.mxu0 %v452
    %v528 = vpop.f32.mrf.mxu0
    %v529 = vadd.f32 %v447, %v528
    %v530 = vpop.f32.mrf.mxu0
    %531 = vmatprep.mubr.f32.mxu0 0.0
    %532 = vmatmul.mubr.f32.gmra.mxu0 %v455
    %v533 = vpop.f32.mrf.mxu0
    %v534 = vadd.f32 %v447, %v533
    %v535 = vpop.f32.mrf.mxu0
    %536 = vdwg.mxu0
    %540 = vrot.lane.b32.xlu0 %v524, 96
    %v541 = vpop.permute.xlu0 %540
    %542 = vrot.lane.b32.xlu0 %v529, 96
    %v543 = vpop.permute.xlu0 %542
    %544 = vrot.lane.b32.xlu0 %v534, 96
    %v545 = vpop.permute.xlu0 %544
    %vm546 = vcmask 64512
    %v547 = vsel %vm546, %v524, 0
    %v549 = vsel %vm546, %v529, 0
    %v551 = vsel %vm546, %v534, 0
    %v553 = vsel %vm546, %v541, 0
    %v555 = vsel %vm546, %v543, 0
    %v557 = vsel %vm546, %v545, 0
    %559 = vmatprep.subr.mxu0 0.0
    %560 = vmatpush1.xpose.msra.mxu0 0.0
    %561 = vmatprep.subr.mxu0 0.0
    %562 = vmatpush1.xpose.msra.mxu0 0.0
    %563 = vmatprep.subr.mxu0 0.0
    %564 = vmatpush1.xpose.msra.mxu0 0.0
    %565 = vmatprep.subr.mxu0 0.0
    %566 = vmatpush1.xpose.msra.mxu0 0.0
    %567 = vmatprep.subr.mxu0 0.0
    %568 = vmatpush1.xpose.msra.mxu0 0.0
    %569 = vmatprep.subr.mxu0 0.0
    %570 = vmatpush1.xpose.msra.mxu0 0.0
    %571 = vmatprep.subr.mxu0 0.0
    %572 = vmatpush1.xpose.msra.mxu0 0.0
    %573 = vmatprep.subr.mxu0 0.0
    %574 = vmatpush1.xpose.msra.mxu0 0.0
    %575 = vmatprep.subr.mxu0 0.0
    %576 = vmatpush1.xpose.msra.mxu0 0.0
    %577 = vmatprep.subr.mxu0 0.0
    %578 = vmatpush1.xpose.msra.mxu0 0.0
    %579 = vmatprep.subr.mxu0 0.0
    %580 = vmatpush1.xpose.msra.mxu0 0.0
    %581 = vmatprep.subr.mxu0 0.0
    %582 = vmatpush1.xpose.msra.mxu0 0.0
    %583 = vmatprep.subr.mxu0 0.0
    %584 = vmatpush1.xpose.msra.mxu0 0.0
    %585 = vmatprep.subr.mxu0 0.0
    %586 = vmatpush1.xpose.msra.mxu0 %v557
    %587 = vmatprep.subr.mxu0 0.0
    %588 = vmatpush1.xpose.msra.mxu0 %v555
    %589 = vmatprep.subr.mxu0 0.0
    %590 = vmatpush1.xpose.msra.mxu0 %v553
    %591 = vmatprep.subr.mxu0 0.0
    %592 = vmatpush2.xpose.msra.mxu0 0.0
    %593 = vmatprep.subr.mxu0 0.0
    %594 = vmatpush2.xpose.msra.mxu0 0.0
    %595 = vmatprep.subr.mxu0 0.0
    %596 = vmatpush2.xpose.msra.mxu0 0.0
    %597 = vmatprep.subr.mxu0 0.0
    %598 = vmatpush2.xpose.msra.mxu0 0.0
    %599 = vmatprep.subr.mxu0 0.0
    %600 = vmatpush2.xpose.msra.mxu0 0.0
    %601 = vmatprep.subr.mxu0 0.0
    %602 = vmatpush2.xpose.msra.mxu0 0.0
    %603 = vmatprep.subr.mxu0 0.0
    %604 = vmatpush2.xpose.msra.mxu0 0.0
    %605 = vmatprep.subr.mxu0 0.0
    %606 = vmatpush2.xpose.msra.mxu0 0.0
    %607 = vmatprep.subr.mxu0 0.0
    %608 = vmatpush2.xpose.msra.mxu0 0.0
    %609 = vmatprep.subr.mxu0 0.0
    %610 = vmatpush2.xpose.msra.mxu0 0.0
    %611 = vmatprep.subr.mxu0 0.0
    %612 = vmatpush2.xpose.msra.mxu0 0.0
    %613 = vmatprep.subr.mxu0 0.0
    %614 = vmatpush2.xpose.msra.mxu0 0.0
    %615 = vmatprep.subr.mxu0 0.0
    %616 = vmatpush2.xpose.msra.mxu0 0.0
    %617 = vmatprep.subr.mxu0 0.0
    %618 = vmatpush2.xpose.msra.mxu0 0.0
    %619 = vmatprep.subr.mxu0 0.0
    %620 = vmatpush2.xpose.msra.mxu0 0.0
    %621 = vmatprep.subr.mxu0 0.0
    %622 = vmatpush2.xpose.msra.mxu0 0.0
    %623 = vmatprep.mubr.f32.mxu0 0.0
    %624 = vmatmul.mubr.f32.gmra.mxu0 %v547
    %v625 = vpop.f32.mrf.mxu0
    %v626 = vadd.f32 0.0, %v625
    %v627 = vpop.f32.mrf.mxu0
    %628 = vmatprep.mubr.f32.mxu0 0.0
    %629 = vmatmul.mubr.f32.gmra.mxu0 %v549
    %v630 = vpop.f32.mrf.mxu0
    %v631 = vadd.f32 0.0, %v630
    %v632 = vpop.f32.mrf.mxu0
    %633 = vmatprep.mubr.f32.mxu0 0.0
    %634 = vmatmul.mubr.f32.gmra.mxu0 %v551
    %v635 = vpop.f32.mrf.mxu0
    %v636 = vadd.f32 0.0, %v635
    %v637 = vpop.f32.mrf.mxu0
    %638 = vdwg.mxu0
    %v639 = vmul.f32 %v626, 0.35355338
    %v640 = vmul.f32 %v631, 0.35355338
    %v641 = vmul.f32 %v636, 0.35355338
    %v642 = vadd.f32 %v639, %v32
    %v643 = vadd.f32 %v640, %v33
    %v644 = vadd.f32 %v641, %v34
    %vm645 = vcmask 195584
    %v646 = vsel %vm645, %v642, -inf
    %647 = vmax.xlane.f32.xlu0 %v646
    %v648 = vpop.xlane.xlu0 %647
    %v649 = vsel %vm645, %v643, -inf
    %650 = vmax.xlane.f32.xlu0 %v649
    %v651 = vpop.xlane.xlu0 %650
    %v652 = vsel %vm645, %v644, -inf
    %653 = vmax.xlane.f32.xlu0 %v652
    %v654 = vpop.xlane.xlu0 %653
    %v655 = vsub.f32 %v642, %v648
    %v656 = vsub.f32 %v643, %v651
    %v657 = vsub.f32 %v644, %v654
    %v658 = vmul.f32 %v655, 1.442695
    %v659 = vpow.pop %v658
    %v660 = vmul.f32 %v656, 1.442695
    %v661 = vpow.pop %v660
    %v662 = vmul.f32 %v657, 1.442695
    %v663 = vpow.pop %v662
    %v664 = vsel %vm645, %v659, 0.0
    %665 = vadd.xlane.f32.xlu0 %v664
    %v666 = vpop.xlane.xlu0 %665
    %v667 = vsel %vm645, %v661, 0.0
    %668 = vadd.xlane.f32.xlu0 %v667
    %v669 = vpop.xlane.xlu0 %668
    %v670 = vsel %vm645, %v663, 0.0
    %671 = vadd.xlane.f32.xlu0 %v670
    %v672 = vpop.xlane.xlu0 %671
    %v673 = vrcp.pop %v666
    %v674 = vmul.f32 %v659, %v673
    %v675 = vrcp.pop %v669
    %v676 = vmul.f32 %v661, %v675
    %v677 = vrcp.pop %v672
    %v678 = vmul.f32 %v663, %v677
    %679 = vrot.lane.b32.xlu0 %v524, 64
    %v680 = vpop.permute.xlu0 %679
    %681 = vrot.lane.b32.xlu0 %v529, 64
    %v682 = vpop.permute.xlu0 %681
    %683 = vrot.lane.b32.xlu0 %v534, 64
    %v684 = vpop.permute.xlu0 %683
    %v689 = vsel %vm645, %v674, 0
    %v692 = vsel %vm645, %v676, 0
    %v695 = vsel %vm645, %v678, 0
    %697 = vmatprep.subr.mxu0 0.0
    %698 = vmatpush1.msra.mxu0 0.0
    %699 = vmatprep.subr.mxu0 0.0
    %700 = vmatpush1.msra.mxu0 0.0
    %701 = vmatprep.subr.mxu0 0.0
    %702 = vmatpush1.msra.mxu0 0.0
    %703 = vmatprep.subr.mxu0 0.0
    %704 = vmatpush1.msra.mxu0 0.0
    %705 = vmatprep.subr.mxu0 0.0
    %706 = vmatpush1.msra.mxu0 0.0
    %707 = vmatprep.subr.mxu0 0.0
    %708 = vmatpush1.msra.mxu0 0.0
    %709 = vmatprep.subr.mxu0 0.0
    %710 = vmatpush1.msra.mxu0 0.0
    %711 = vmatprep.subr.mxu0 0.0
    %712 = vmatpush1.msra.mxu0 0.0
    %713 = vmatprep.subr.mxu0 0.0
    %714 = vmatpush1.msra.mxu0 0.0
    %715 = vmatprep.subr.mxu0 0.0
    %716 = vmatpush1.msra.mxu0 0.0
    %717 = vmatprep.subr.mxu0 0.0
    %718 = vmatpush1.msra.mxu0 0.0
    %719 = vmatprep.subr.mxu0 0.0
    %720 = vmatpush1.msra.mxu0 0.0
    %721 = vmatprep.subr.mxu0 0.0
    %722 = vmatpush1.msra.mxu0 0.0
    %723 = vmatprep.subr.mxu0 0.0
    %724 = vmatpush1.msra.mxu0 %v684
    %725 = vmatprep.subr.mxu0 0.0
    %726 = vmatpush1.msra.mxu0 %v682
    %727 = vmatprep.subr.mxu0 0.0
    %728 = vmatpush1.msra.mxu0 %v680
    %729 = vmatprep.subr.mxu0 0.0
    %730 = vmatpush2.msra.mxu0 0.0
    %731 = vmatprep.subr.mxu0 0.0
    %732 = vmatpush2.msra.mxu0 0.0
    %733 = vmatprep.subr.mxu0 0.0
    %734 = vmatpush2.msra.mxu0 0.0
    %735 = vmatprep.subr.mxu0 0.0
    %736 = vmatpush2.msra.mxu0 0.0
    %737 = vmatprep.subr.mxu0 0.0
    %738 = vmatpush2.msra.mxu0 0.0
    %739 = vmatprep.subr.mxu0 0.0
    %740 = vmatpush2.msra.mxu0 0.0
    %741 = vmatprep.subr.mxu0 0.0
    %742 = vmatpush2.msra.mxu0 0.0
    %743 = vmatprep.subr.mxu0 0.0
    %744 = vmatpush2.msra.mxu0 0.0
    %745 = vmatprep.subr.mxu0 0.0
    %746 = vmatpush2.msra.mxu0 0.0
    %747 = vmatprep.subr.mxu0 0.0
    %748 = vmatpush2.msra.mxu0 0.0
    %749 = vmatprep.subr.mxu0 0.0
    %750 = vmatpush2.msra.mxu0 0.0
    %751 = vmatprep.subr.mxu0 0.0
    %752 = vmatpush2.msra.mxu0 0.0
    %753 = vmatprep.subr.mxu0 0.0
    %754 = vmatpush2.msra.mxu0 0.0
    %755 = vmatprep.subr.mxu0 0.0
    %756 = vmatpush2.msra.mxu0 0.0
    %757 = vmatprep.subr.mxu0 0.0
    %758 = vmatpush2.msra.mxu0 0.0
    %759 = vmatprep.subr.mxu0 0.0
    %760 = vmatpush2.msra.mxu0 0.0
    %761 = vmatprep.mubr.f32.mxu0 0.0
    %762 = vmatmul.mubr.f32.gmra.mxu0 %v689
    %v763 = vpop.f32.mrf.mxu0
    %v764 = vadd.f32 0.0, %v763
    %v765 = vpop.f32.mrf.mxu0
    %766 = vmatprep.mubr.f32.mxu0 0.0
    %767 = vmatmul.mubr.f32.gmra.mxu0 %v692
    %v768 = vpop.f32.mrf.mxu0
    %v769 = vadd.f32 0.0, %v768
    %v770 = vpop.f32.mrf.mxu0
    %771 = vmatprep.mubr.f32.mxu0 0.0
    %772 = vmatmul.mubr.f32.gmra.mxu0 %v695
    %v773 = vpop.f32.mrf.mxu0
    %v774 = vadd.f32 0.0, %v773
    %v775 = vpop.f32.mrf.mxu0
    %776 = vdwg.mxu0
    %777 = vrot.lane.b32.xlu0 %v524, 120
    %v778 = vpop.permute.xlu0 %777
    %779 = vrot.lane.b32.xlu0 %v529, 120
    %v780 = vpop.permute.xlu0 %779
    %781 = vrot.lane.b32.xlu0 %v534, 120
    %v782 = vpop.permute.xlu0 %781
    %783 = vrot.lane.b32.xlu0 %v524, 88
    %v784 = vpop.permute.xlu0 %783
    %785 = vrot.lane.b32.xlu0 %v529, 88
    %v786 = vpop.permute.xlu0 %785
    %787 = vrot.lane.b32.xlu0 %v534, 88
    %v788 = vpop.permute.xlu0 %787
    %v789 = vsel %vm546, %v778, 0
    %v791 = vsel %vm546, %v780, 0
    %v793 = vsel %vm546, %v782, 0
    %v795 = vsel %vm546, %v784, 0
    %v797 = vsel %vm546, %v786, 0
    %v799 = vsel %vm546, %v788, 0
    %801 = vmatprep.subr.mxu0 0.0
    %802 = vmatpush1.xpose.msra.mxu0 0.0
    %803 = vmatprep.subr.mxu0 0.0
    %804 = vmatpush1.xpose.msra.mxu0 0.0
    %805 = vmatprep.subr.mxu0 0.0
    %806 = vmatpush1.xpose.msra.mxu0 0.0
    %807 = vmatprep.subr.mxu0 0.0
    %808 = vmatpush1.xpose.msra.mxu0 0.0
    %809 = vmatprep.subr.mxu0 0.0
    %810 = vmatpush1.xpose.msra.mxu0 0.0
    %811 = vmatprep.subr.mxu0 0.0
    %812 = vmatpush1.xpose.msra.mxu0 0.0
    %813 = vmatprep.subr.mxu0 0.0
    %814 = vmatpush1.xpose.msra.mxu0 0.0
    %815 = vmatprep.subr.mxu0 0.0
    %816 = vmatpush1.xpose.msra.mxu0 0.0
    %817 = vmatprep.subr.mxu0 0.0
    %818 = vmatpush1.xpose.msra.mxu0 0.0
    %819 = vmatprep.subr.mxu0 0.0
    %820 = vmatpush1.xpose.msra.mxu0 0.0
    %821 = vmatprep.subr.mxu0 0.0
    %822 = vmatpush1.xpose.msra.mxu0 0.0
    %823 = vmatprep.subr.mxu0 0.0
    %824 = vmatpush1.xpose.msra.mxu0 0.0
    %825 = vmatprep.subr.mxu0 0.0
    %826 = vmatpush1.xpose.msra.mxu0 0.0
    %827 = vmatprep.subr.mxu0 0.0
    %828 = vmatpush1.xpose.msra.mxu0 %v799
    %829 = vmatprep.subr.mxu0 0.0
    %830 = vmatpush1.xpose.msra.mxu0 %v797
    %831 = vmatprep.subr.mxu0 0.0
    %832 = vmatpush1.xpose.msra.mxu0 %v795
    %833 = vmatprep.subr.mxu0 0.0
    %834 = vmatpush2.xpose.msra.mxu0 0.0
    %835 = vmatprep.subr.mxu0 0.0
    %836 = vmatpush2.xpose.msra.mxu0 0.0
    %837 = vmatprep.subr.mxu0 0.0
    %838 = vmatpush2.xpose.msra.mxu0 0.0
    %839 = vmatprep.subr.mxu0 0.0
    %840 = vmatpush2.xpose.msra.mxu0 0.0
    %841 = vmatprep.subr.mxu0 0.0
    %842 = vmatpush2.xpose.msra.mxu0 0.0
    %843 = vmatprep.subr.mxu0 0.0
    %844 = vmatpush2.xpose.msra.mxu0 0.0
    %845 = vmatprep.subr.mxu0 0.0
    %846 = vmatpush2.xpose.msra.mxu0 0.0
    %847 = vmatprep.subr.mxu0 0.0
    %848 = vmatpush2.xpose.msra.mxu0 0.0
    %849 = vmatprep.subr.mxu0 0.0
    %850 = vmatpush2.xpose.msra.mxu0 0.0
    %851 = vmatprep.subr.mxu0 0.0
    %852 = vmatpush2.xpose.msra.mxu0 0.0
    %853 = vmatprep.subr.mxu0 0.0
    %854 = vmatpush2.xpose.msra.mxu0 0.0
    %855 = vmatprep.subr.mxu0 0.0
    %856 = vmatpush2.xpose.msra.mxu0 0.0
    %857 = vmatprep.subr.mxu0 0.0
    %858 = vmatpush2.xpose.msra.mxu0 0.0
    %859 = vmatprep.subr.mxu0 0.0
    %860 = vmatpush2.xpose.msra.mxu0 0.0
    %861 = vmatprep.subr.mxu0 0.0
    %862 = vmatpush2.xpose.msra.mxu0 0.0
    %863 = vmatprep.subr.mxu0 0.0
    %864 = vmatpush2.xpose.msra.mxu0 0.0
    %865 = vmatprep.mubr.f32.mxu0 0.0
    %866 = vmatmul.mubr.f32.gmra.mxu0 %v789
    %v867 = vpop.f32.mrf.mxu0
    %v868 = vadd.f32 0.0, %v867
    %v869 = vpop.f32.mrf.mxu0
    %870 = vmatprep.mubr.f32.mxu0 0.0
    %871 = vmatmul.mubr.f32.gmra.mxu0 %v791
    %v872 = vpop.f32.mrf.mxu0
    %v873 = vadd.f32 0.0, %v872
    %v874 = vpop.f32.mrf.mxu0
    %875 = vmatprep.mubr.f32.mxu0 0.0
    %876 = vmatmul.mubr.f32.gmra.mxu0 %v793
    %v877 = vpop.f32.mrf.mxu0
    %v878 = vadd.f32 0.0, %v877
    %v879 = vpop.f32.mrf.mxu0
    %880 = vdwg.mxu0
    %v881 = vmul.f32 %v868, 0.35355338
    %v882 = vmul.f32 %v873, 0.35355338
    %v883 = vmul.f32 %v878, 0.35355338
    %v884 = vadd.f32 %v881, %v32
    %v885 = vadd.f32 %v882, %v33
    %v886 = vadd.f32 %v883, %v34
    %v887 = vsel %vm645, %v884, -inf
    %888 = vmax.xlane.f32.xlu0 %v887
    %v889 = vpop.xlane.xlu0 %888
    %v890 = vsel %vm645, %v885, -inf
    %891 = vmax.xlane.f32.xlu0 %v890
    %v892 = vpop.xlane.xlu0 %891
    %v893 = vsel %vm645, %v886, -inf
    %894 = vmax.xlane.f32.xlu0 %v893
    %v895 = vpop.xlane.xlu0 %894
    %v896 = vsub.f32 %v884, %v889
    %v897 = vsub.f32 %v885, %v892
    %v898 = vsub.f32 %v886, %v895
    %v899 = vmul.f32 %v896, 1.442695
    %v900 = vpow.pop %v899
    %v901 = vmul.f32 %v897, 1.442695
    %v902 = vpow.pop %v901
    %v903 = vmul.f32 %v898, 1.442695
    %v904 = vpow.pop %v903
    %v905 = vsel %vm645, %v900, 0.0
    %906 = vadd.xlane.f32.xlu0 %v905
    %v907 = vpop.xlane.xlu0 %906
    %v908 = vsel %vm645, %v902, 0.0
    %909 = vadd.xlane.f32.xlu0 %v908
    %v910 = vpop.xlane.xlu0 %909
    %v911 = vsel %vm645, %v904, 0.0
    %912 = vadd.xlane.f32.xlu0 %v911
    %v913 = vpop.xlane.xlu0 %912
    %v914 = vrcp.pop %v907
    %v915 = vmul.f32 %v900, %v914
    %v916 = vrcp.pop %v910
    %v917 = vmul.f32 %v902, %v916
    %v918 = vrcp.pop %v913
    %v919 = vmul.f32 %v904, %v918
    %920 = vrot.lane.b32.xlu0 %v524, 56
    %v921 = vpop.permute.xlu0 %920
    %922 = vrot.lane.b32.xlu0 %v529, 56
    %v923 = vpop.permute.xlu0 %922
    %924 = vrot.lane.b32.xlu0 %v534, 56
    %v925 = vpop.permute.xlu0 %924
    %v930 = vsel %vm645, %v915, 0
    %v933 = vsel %vm645, %v917, 0
    %v936 = vsel %vm645, %v919, 0
    %938 = vmatprep.subr.mxu0 0.0
    %939 = vmatpush1.msra.mxu0 0.0
    %940 = vmatprep.subr.mxu0 0.0
    %941 = vmatpush1.msra.mxu0 0.0
    %942 = vmatprep.subr.mxu0 0.0
    %943 = vmatpush1.msra.mxu0 0.0
    %944 = vmatprep.subr.mxu0 0.0
    %945 = vmatpush1.msra.mxu0 0.0
    %946 = vmatprep.subr.mxu0 0.0
    %947 = vmatpush1.msra.mxu0 0.0
    %948 = vmatprep.subr.mxu0 0.0
    %949 = vmatpush1.msra.mxu0 0.0
    %950 = vmatprep.subr.mxu0 0.0
    %951 = vmatpush1.msra.mxu0 0.0
    %952 = vmatprep.subr.mxu0 0.0
    %953 = vmatpush1.msra.mxu0 0.0
    %954 = vmatprep.subr.mxu0 0.0
    %955 = vmatpush1.msra.mxu0 0.0
    %956 = vmatprep.subr.mxu0 0.0
    %957 = vmatpush1.msra.mxu0 0.0
    %958 = vmatprep.subr.mxu0 0.0
    %959 = vmatpush1.msra.mxu0 0.0
    %960 = vmatprep.subr.mxu0 0.0
    %961 = vmatpush1.msra.mxu0 0.0
    %962 = vmatprep.subr.mxu0 0.0
    %963 = vmatpush1.msra.mxu0 0.0
    %964 = vmatprep.subr.mxu0 0.0
    %965 = vmatpush1.msra.mxu0 %v925
    %966 = vmatprep.subr.mxu0 0.0
    %967 = vmatpush1.msra.mxu0 %v923
    %968 = vmatprep.subr.mxu0 0.0
    %969 = vmatpush1.msra.mxu0 %v921
    %970 = vmatprep.subr.mxu0 0.0
    %971 = vmatpush2.msra.mxu0 0.0
    %972 = vmatprep.subr.mxu0 0.0
    %973 = vmatpush2.msra.mxu0 0.0
    %974 = vmatprep.subr.mxu0 0.0
    %975 = vmatpush2.msra.mxu0 0.0
    %976 = vmatprep.subr.mxu0 0.0
    %977 = vmatpush2.msra.mxu0 0.0
    %978 = vmatprep.subr.mxu0 0.0
    %979 = vmatpush2.msra.mxu0 0.0
    %980 = vmatprep.subr.mxu0 0.0
    %981 = vmatpush2.msra.mxu0 0.0
    %982 = vmatprep.subr.mxu0 0.0
    %983 = vmatpush2.msra.mxu0 0.0
    %984 = vmatprep.subr.mxu0 0.0
    %985 = vmatpush2.msra.mxu0 0.0
    %986 = vmatprep.subr.mxu0 0.0
    %987 = vmatpush2.msra.mxu0 0.0
    %988 = vmatprep.subr.mxu0 0.0
    %989 = vmatpush2.msra.mxu0 0.0
    %990 = vmatprep.subr.mxu0 0.0
    %991 = vmatpush2.msra.mxu0 0.0
    %992 = vmatprep.subr.mxu0 0.0
    %993 = vmatpush2.msra.mxu0 0.0
    %994 = vmatprep.subr.mxu0 0.0
    %995 = vmatpush2.msra.mxu0 0.0
    %996 = vmatprep.subr.mxu0 0.0
    %997 = vmatpush2.msra.mxu0 0.0
    %998 = vmatprep.subr.mxu0 0.0
    %999 = vmatpush2.msra.mxu0 0.0
    %1000 = vmatprep.subr.mxu0 0.0
    %1001 = vmatpush2.msra.mxu0 0.0
    %1002 = vmatprep.mubr.f32.mxu0 0.0
    %1003 = vmatmul.mubr.f32.gmra.mxu0 %v930
    %v1004 = vpop.f32.mrf.mxu0
    %v1005 = vadd.f32 0.0, %v1004
    %v1006 = vpop.f32.mrf.mxu0
    %1007 = vmatprep.mubr.f32.mxu0 0.0
    %1008 = vmatmul.mubr.f32.gmra.mxu0 %v933
    %v1009 = vpop.f32.mrf.mxu0
    %v1010 = vadd.f32 0.0, %v1009
    %v1011 = vpop.f32.mrf.mxu0
    %1012 = vmatprep.mubr.f32.mxu0 0.0
    %1013 = vmatmul.mubr.f32.gmra.mxu0 %v936
    %v1014 = vpop.f32.mrf.mxu0
    %v1015 = vadd.f32 0.0, %v1014
    %v1016 = vpop.f32.mrf.mxu0
    %1017 = vdwg.mxu0
    %1018 = vrot.lane.b32.xlu0 %v524, 112
    %v1019 = vpop.permute.xlu0 %1018
    %1020 = vrot.lane.b32.xlu0 %v529, 112
    %v1021 = vpop.permute.xlu0 %1020
    %1022 = vrot.lane.b32.xlu0 %v534, 112
    %v1023 = vpop.permute.xlu0 %1022
    %1024 = vrot.lane.b32.xlu0 %v524, 80
    %v1025 = vpop.permute.xlu0 %1024
    %1026 = vrot.lane.b32.xlu0 %v529, 80
    %v1027 = vpop.permute.xlu0 %1026
    %1028 = vrot.lane.b32.xlu0 %v534, 80
    %v1029 = vpop.permute.xlu0 %1028
    %v1030 = vsel %vm546, %v1019, 0
    %v1032 = vsel %vm546, %v1021, 0
    %v1034 = vsel %vm546, %v1023, 0
    %v1036 = vsel %vm546, %v1025, 0
    %v1038 = vsel %vm546, %v1027, 0
    %v1040 = vsel %vm546, %v1029, 0
    %1042 = vmatprep.subr.mxu0 0.0
    %1043 = vmatpush1.xpose.msra.mxu0 0.0
    %1044 = vmatprep.subr.mxu0 0.0
    %1045 = vmatpush1.xpose.msra.mxu0 0.0
    %1046 = vmatprep.subr.mxu0 0.0
    %1047 = vmatpush1.xpose.msra.mxu0 0.0
    %1048 = vmatprep.subr.mxu0 0.0
    %1049 = vmatpush1.xpose.msra.mxu0 0.0
    %1050 = vmatprep.subr.mxu0 0.0
    %1051 = vmatpush1.xpose.msra.mxu0 0.0
    %1052 = vmatprep.subr.mxu0 0.0
    %1053 = vmatpush1.xpose.msra.mxu0 0.0
    %1054 = vmatprep.subr.mxu0 0.0
    %1055 = vmatpush1.xpose.msra.mxu0 0.0
    %1056 = vmatprep.subr.mxu0 0.0
    %1057 = vmatpush1.xpose.msra.mxu0 0.0
    %1058 = vmatprep.subr.mxu0 0.0
    %1059 = vmatpush1.xpose.msra.mxu0 0.0
    %1060 = vmatprep.subr.mxu0 0.0
    %1061 = vmatpush1.xpose.msra.mxu0 0.0
    %1062 = vmatprep.subr.mxu0 0.0
    %1063 = vmatpush1.xpose.msra.mxu0 0.0
    %1064 = vmatprep.subr.mxu0 0.0
    %1065 = vmatpush1.xpose.msra.mxu0 0.0
    %1066 = vmatprep.subr.mxu0 0.0
    %1067 = vmatpush1.xpose.msra.mxu0 0.0
    %1068 = vmatprep.subr.mxu0 0.0
    %1069 = vmatpush1.xpose.msra.mxu0 %v1040
    %1070 = vmatprep.subr.mxu0 0.0
    %1071 = vmatpush1.xpose.msra.mxu0 %v1038
    %1072 = vmatprep.subr.mxu0 0.0
    %1073 = vmatpush1.xpose.msra.mxu0 %v1036
    %1074 = vmatprep.subr.mxu0 0.0
    %1075 = vmatpush2.xpose.msra.mxu0 0.0
    %1076 = vmatprep.subr.mxu0 0.0
    %1077 = vmatpush2.xpose.msra.mxu0 0.0
    %1078 = vmatprep.subr.mxu0 0.0
    %1079 = vmatpush2.xpose.msra.mxu0 0.0
    %1080 = vmatprep.subr.mxu0 0.0
    %1081 = vmatpush2.xpose.msra.mxu0 0.0
    %1082 = vmatprep.subr.mxu0 0.0
    %1083 = vmatpush2.xpose.msra.mxu0 0.0
    %1084 = vmatprep.subr.mxu0 0.0
    %1085 = vmatpush2.xpose.msra.mxu0 0.0
    %1086 = vmatprep.subr.mxu0 0.0
    %1087 = vmatpush2.xpose.msra.mxu0 0.0
    %1088 = vmatprep.subr.mxu0 0.0
    %1089 = vmatpush2.xpose.msra.mxu0 0.0
    %1090 = vmatprep.subr.mxu0 0.0
    %1091 = vmatpush2.xpose.msra.mxu0 0.0
    %1092 = vmatprep.subr.mxu0 0.0
    %1093 = vmatpush2.xpose.msra.mxu0 0.0
    %1094 = vmatprep.subr.mxu0 0.0
    %1095 = vmatpush2.xpose.msra.mxu0 0.0
    %1096 = vmatprep.subr.mxu0 0.0
    %1097 = vmatpush2.xpose.msra.mxu0 0.0
    %1098 = vmatprep.subr.mxu0 0.0
    %1099 = vmatpush2.xpose.msra.mxu0 0.0
    %1100 = vmatprep.subr.mxu0 0.0
    %1101 = vmatpush2.xpose.msra.mxu0 0.0
    %1102 = vmatprep.subr.mxu0 0.0
    %1103 = vmatpush2.xpose.msra.mxu0 0.0
    %1104 = vmatprep.subr.mxu0 0.0
    %1105 = vmatpush2.xpose.msra.mxu0 0.0
    %1106 = vmatprep.mubr.f32.mxu0 0.0
    %1107 = vmatmul.mubr.f32.gmra.mxu0 %v1030
    %v1108 = vpop.f32.mrf.mxu0
    %v1109 = vadd.f32 0.0, %v1108
    %v1110 = vpop.f32.mrf.mxu0
    %1111 = vmatprep.mubr.f32.mxu0 0.0
    %1112 = vmatmul.mubr.f32.gmra.mxu0 %v1032
    %v1113 = vpop.f32.mrf.mxu0
    %v1114 = vadd.f32 0.0, %v1113
    %v1115 = vpop.f32.mrf.mxu0
    %1116 = vmatprep.mubr.f32.mxu0 0.0
    %1117 = vmatmul.mubr.f32.gmra.mxu0 %v1034
    %v1118 = vpop.f32.mrf.mxu0
    %v1119 = vadd.f32 0.0, %v1118
    %v1120 = vpop.f32.mrf.mxu0
    %1121 = vdwg.mxu0
    %v1122 = vmul.f32 %v1109, 0.35355338
    %v1123 = vmul.f32 %v1114, 0.35355338
    %v1124 = vmul.f32 %v1119, 0.35355338
    %v1125 = vadd.f32 %v1122, %v32
    %v1126 = vadd.f32 %v1123, %v33
    %v1127 = vadd.f32 %v1124, %v34
    %v1128 = vsel %vm645, %v1125, -inf
    %1129 = vmax.xlane.f32.xlu0 %v1128
    %v1130 = vpop.xlane.xlu0 %1129
    %v1131 = vsel %vm645, %v1126, -inf
    %1132 = vmax.xlane.f32.xlu0 %v1131
    %v1133 = vpop.xlane.xlu0 %1132
    %v1134 = vsel %vm645, %v1127, -inf
    %1135 = vmax.xlane.f32.xlu0 %v1134
    %v1136 = vpop.xlane.xlu0 %1135
    %v1137 = vsub.f32 %v1125, %v1130
    %v1138 = vsub.f32 %v1126, %v1133
    %v1139 = vsub.f32 %v1127, %v1136
    %v1140 = vmul.f32 %v1137, 1.442695
    %v1141 = vpow.pop %v1140
    %v1142 = vmul.f32 %v1138, 1.442695
    %v1143 = vpow.pop %v1142
    %v1144 = vmul.f32 %v1139, 1.442695
    %v1145 = vpow.pop %v1144
    %v1146 = vsel %vm645, %v1141, 0.0
    %1147 = vadd.xlane.f32.xlu0 %v1146
    %v1148 = vpop.xlane.xlu0 %1147
    %v1149 = vsel %vm645, %v1143, 0.0
    %1150 = vadd.xlane.f32.xlu0 %v1149
    %v1151 = vpop.xlane.xlu0 %1150
    %v1152 = vsel %vm645, %v1145, 0.0
    %1153 = vadd.xlane.f32.xlu0 %v1152
    %v1154 = vpop.xlane.xlu0 %1153
    %v1155 = vrcp.pop %v1148
    %v1156 = vmul.f32 %v1141, %v1155
    %v1157 = vrcp.pop %v1151
    %v1158 = vmul.f32 %v1143, %v1157
    %v1159 = vrcp.pop %v1154
    %v1160 = vmul.f32 %v1145, %v1159
    %1161 = vrot.lane.b32.xlu0 %v524, 48
    %v1162 = vpop.permute.xlu0 %1161
    %1163 = vrot.lane.b32.xlu0 %v529, 48
    %v1164 = vpop.permute.xlu0 %1163
    %1165 = vrot.lane.b32.xlu0 %v534, 48
    %v1166 = vpop.permute.xlu0 %1165
    %v1171 = vsel %vm645, %v1156, 0
    %v1174 = vsel %vm645, %v1158, 0
    %v1177 = vsel %vm645, %v1160, 0
    %1179 = vmatprep.subr.mxu0 0.0
    %1180 = vmatpush1.msra.mxu0 0.0
    %1181 = vmatprep.subr.mxu0 0.0
    %1182 = vmatpush1.msra.mxu0 0.0
    %1183 = vmatprep.subr.mxu0 0.0
    %1184 = vmatpush1.msra.mxu0 0.0
    %1185 = vmatprep.subr.mxu0 0.0
    %1186 = vmatpush1.msra.mxu0 0.0
    %1187 = vmatprep.subr.mxu0 0.0
    %1188 = vmatpush1.msra.mxu0 0.0
    %1189 = vmatprep.subr.mxu0 0.0
    %1190 = vmatpush1.msra.mxu0 0.0
    %1191 = vmatprep.subr.mxu0 0.0
    %1192 = vmatpush1.msra.mxu0 0.0
    %1193 = vmatprep.subr.mxu0 0.0
    %1194 = vmatpush1.msra.mxu0 0.0
    %1195 = vmatprep.subr.mxu0 0.0
    %1196 = vmatpush1.msra.mxu0 0.0
    %1197 = vmatprep.subr.mxu0 0.0
    %1198 = vmatpush1.msra.mxu0 0.0
    %1199 = vmatprep.subr.mxu0 0.0
    %1200 = vmatpush1.msra.mxu0 0.0
    %1201 = vmatprep.subr.mxu0 0.0
    %1202 = vmatpush1.msra.mxu0 0.0
    %1203 = vmatprep.subr.mxu0 0.0
    %1204 = vmatpush1.msra.mxu0 0.0
    %1205 = vmatprep.subr.mxu0 0.0
    %1206 = vmatpush1.msra.mxu0 %v1166
    %1207 = vmatprep.subr.mxu0 0.0
    %1208 = vmatpush1.msra.mxu0 %v1164
    %1209 = vmatprep.subr.mxu0 0.0
    %1210 = vmatpush1.msra.mxu0 %v1162
    %1211 = vmatprep.subr.mxu0 0.0
    %1212 = vmatpush2.msra.mxu0 0.0
    %1213 = vmatprep.subr.mxu0 0.0
    %1214 = vmatpush2.msra.mxu0 0.0
    %1215 = vmatprep.subr.mxu0 0.0
    %1216 = vmatpush2.msra.mxu0 0.0
    %1217 = vmatprep.subr.mxu0 0.0
    %1218 = vmatpush2.msra.mxu0 0.0
    %1219 = vmatprep.subr.mxu0 0.0
    %1220 = vmatpush2.msra.mxu0 0.0
    %1221 = vmatprep.subr.mxu0 0.0
    %1222 = vmatpush2.msra.mxu0 0.0
    %1223 = vmatprep.subr.mxu0 0.0
    %1224 = vmatpush2.msra.mxu0 0.0
    %1225 = vmatprep.subr.mxu0 0.0
    %1226 = vmatpush2.msra.mxu0 0.0
    %1227 = vmatprep.subr.mxu0 0.0
    %1228 = vmatpush2.msra.mxu0 0.0
    %1229 = vmatprep.subr.mxu0 0.0
    %1230 = vmatpush2.msra.mxu0 0.0
    %1231 = vmatprep.subr.mxu0 0.0
    %1232 = vmatpush2.msra.mxu0 0.0
    %1233 = vmatprep.subr.mxu0 0.0
    %1234 = vmatpush2.msra.mxu0 0.0
    %1235 = vmatprep.subr.mxu0 0.0
    %1236 = vmatpush2.msra.mxu0 0.0
    %1237 = vmatprep.subr.mxu0 0.0
    %1238 = vmatpush2.msra.mxu0 0.0
    %1239 = vmatprep.subr.mxu0 0.0
    %1240 = vmatpush2.msra.mxu0 0.0
    %1241 = vmatprep.subr.mxu0 0.0
    %1242 = vmatpush2.msra.mxu0 0.0
    %1243 = vmatprep.mubr.f32.mxu0 0.0
    %1244 = vmatmul.mubr.f32.gmra.mxu0 %v1171
    %v1245 = vpop.f32.mrf.mxu0
    %v1246 = vadd.f32 0.0, %v1245
    %v1247 = vpop.f32.mrf.mxu0
    %1248 = vmatprep.mubr.f32.mxu0 0.0
    %1249 = vmatmul.mubr.f32.gmra.mxu0 %v1174
    %v1250 = vpop.f32.mrf.mxu0
    %v1251 = vadd.f32 0.0, %v1250
    %v1252 = vpop.f32.mrf.mxu0
    %1253 = vmatprep.mubr.f32.mxu0 0.0
    %1254 = vmatmul.mubr.f32.gmra.mxu0 %v1177
    %v1255 = vpop.f32.mrf.mxu0
    %v1256 = vadd.f32 0.0, %v1255
    %v1257 = vpop.f32.mrf.mxu0
    %1258 = vdwg.mxu0
    %1259 = vrot.lane.b32.xlu0 %v524, 104
    %v1260 = vpop.permute.xlu0 %1259
    %1261 = vrot.lane.b32.xlu0 %v529, 104
    %v1262 = vpop.permute.xlu0 %1261
    %1263 = vrot.lane.b32.xlu0 %v534, 104
    %v1264 = vpop.permute.xlu0 %1263
    %1265 = vrot.lane.b32.xlu0 %v524, 72
    %v1266 = vpop.permute.xlu0 %1265
    %1267 = vrot.lane.b32.xlu0 %v529, 72
    %v1268 = vpop.permute.xlu0 %1267
    %1269 = vrot.lane.b32.xlu0 %v534, 72
    %v1270 = vpop.permute.xlu0 %1269
    %v1271 = vsel %vm546, %v1260, 0
    %v1273 = vsel %vm546, %v1262, 0
    %v1275 = vsel %vm546, %v1264, 0
    %v1277 = vsel %vm546, %v1266, 0
    %v1279 = vsel %vm546, %v1268, 0
    %v1281 = vsel %vm546, %v1270, 0
    %1283 = vmatprep.subr.mxu0 0.0
    %1284 = vmatpush1.xpose.msra.mxu0 0.0
    %1285 = vmatprep.subr.mxu0 0.0
    %1286 = vmatpush1.xpose.msra.mxu0 0.0
    %1287 = vmatprep.subr.mxu0 0.0
    %1288 = vmatpush1.xpose.msra.mxu0 0.0
    %1289 = vmatprep.subr.mxu0 0.0
    %1290 = vmatpush1.xpose.msra.mxu0 0.0
    %1291 = vmatprep.subr.mxu0 0.0
    %1292 = vmatpush1.xpose.msra.mxu0 0.0
    %1293 = vmatprep.subr.mxu0 0.0
    %1294 = vmatpush1.xpose.msra.mxu0 0.0
    %1295 = vmatprep.subr.mxu0 0.0
    %1296 = vmatpush1.xpose.msra.mxu0 0.0
    %1297 = vmatprep.subr.mxu0 0.0
    %1298 = vmatpush1.xpose.msra.mxu0 0.0
    %1299 = vmatprep.subr.mxu0 0.0
    %1300 = vmatpush1.xpose.msra.mxu0 0.0
    %1301 = vmatprep.subr.mxu0 0.0
    %1302 = vmatpush1.xpose.msra.mxu0 0.0
    %1303 = vmatprep.subr.mxu0 0.0
    %1304 = vmatpush1.xpose.msra.mxu0 0.0
    %1305 = vmatprep.subr.mxu0 0.0
    %1306 = vmatpush1.xpose.msra.mxu0 0.0
    %1307 = vmatprep.subr.mxu0 0.0
    %1308 = vmatpush1.xpose.msra.mxu0 0.0
    %1309 = vmatprep.subr.mxu0 0.0
    %1310 = vmatpush1.xpose.msra.mxu0 %v1281
    %1311 = vmatprep.subr.mxu0 0.0
    %1312 = vmatpush1.xpose.msra.mxu0 %v1279
    %1313 = vmatprep.subr.mxu0 0.0
    %1314 = vmatpush1.xpose.msra.mxu0 %v1277
    %1315 = vmatprep.subr.mxu0 0.0
    %1316 = vmatpush2.xpose.msra.mxu0 0.0
    %1317 = vmatprep.subr.mxu0 0.0
    %1318 = vmatpush2.xpose.msra.mxu0 0.0
    %1319 = vmatprep.subr.mxu0 0.0
    %1320 = vmatpush2.xpose.msra.mxu0 0.0
    %1321 = vmatprep.subr.mxu0 0.0
    %1322 = vmatpush2.xpose.msra.mxu0 0.0
    %1323 = vmatprep.subr.mxu0 0.0
    %1324 = vmatpush2.xpose.msra.mxu0 0.0
    %1325 = vmatprep.subr.mxu0 0.0
    %1326 = vmatpush2.xpose.msra.mxu0 0.0
    %1327 = vmatprep.subr.mxu0 0.0
    %1328 = vmatpush2.xpose.msra.mxu0 0.0
    %1329 = vmatprep.subr.mxu0 0.0
    %1330 = vmatpush2.xpose.msra.mxu0 0.0
    %1331 = vmatprep.subr.mxu0 0.0
    %1332 = vmatpush2.xpose.msra.mxu0 0.0
    %1333 = vmatprep.subr.mxu0 0.0
    %1334 = vmatpush2.xpose.msra.mxu0 0.0
    %1335 = vmatprep.subr.mxu0 0.0
    %1336 = vmatpush2.xpose.msra.mxu0 0.0
    %1337 = vmatprep.subr.mxu0 0.0
    %1338 = vmatpush2.xpose.msra.mxu0 0.0
    %1339 = vmatprep.subr.mxu0 0.0
    %1340 = vmatpush2.xpose.msra.mxu0 0.0
    %1341 = vmatprep.subr.mxu0 0.0
    %1342 = vmatpush2.xpose.msra.mxu0 0.0
    %1343 = vmatprep.subr.mxu0 0.0
    %1344 = vmatpush2.xpose.msra.mxu0 0.0
    %1345 = vmatprep.subr.mxu0 0.0
    %1346 = vmatpush2.xpose.msra.mxu0 0.0
    %1347 = vmatprep.mubr.f32.mxu0 0.0
    %1348 = vmatmul.mubr.f32.gmra.mxu0 %v1271
    %v1349 = vpop.f32.mrf.mxu0
    %v1350 = vadd.f32 0.0, %v1349
    %v1351 = vpop.f32.mrf.mxu0
    %1352 = vmatprep.mubr.f32.mxu0 0.0
    %1353 = vmatmul.mubr.f32.gmra.mxu0 %v1273
    %v1354 = vpop.f32.mrf.mxu0
    %v1355 = vadd.f32 0.0, %v1354
    %v1356 = vpop.f32.mrf.mxu0
    %1357 = vmatprep.mubr.f32.mxu0 0.0
    %1358 = vmatmul.mubr.f32.gmra.mxu0 %v1275
    %v1359 = vpop.f32.mrf.mxu0
    %v1360 = vadd.f32 0.0, %v1359
    %v1361 = vpop.f32.mrf.mxu0
    %1362 = vdwg.mxu0
    %v1363 = vmul.f32 %v1350, 0.35355338
    %v1364 = vmul.f32 %v1355, 0.35355338
    %v1365 = vmul.f32 %v1360, 0.35355338
    %v1366 = vadd.f32 %v1363, %v32
    %v1367 = vadd.f32 %v1364, %v33
    %v1368 = vadd.f32 %v1365, %v34
    %v1369 = vsel %vm645, %v1366, -inf
    %1370 = vmax.xlane.f32.xlu0 %v1369
    %v1371 = vpop.xlane.xlu0 %1370
    %v1372 = vsel %vm645, %v1367, -inf
    %1373 = vmax.xlane.f32.xlu0 %v1372
    %v1374 = vpop.xlane.xlu0 %1373
    %v1375 = vsel %vm645, %v1368, -inf
    %1376 = vmax.xlane.f32.xlu0 %v1375
    %v1377 = vpop.xlane.xlu0 %1376
    %v1378 = vsub.f32 %v1366, %v1371
    %v1379 = vsub.f32 %v1367, %v1374
    %v1380 = vsub.f32 %v1368, %v1377
    %v1381 = vmul.f32 %v1378, 1.442695
    %v1382 = vpow.pop %v1381
    %v1383 = vmul.f32 %v1379, 1.442695
    %v1384 = vpow.pop %v1383
    %v1385 = vmul.f32 %v1380, 1.442695
    %v1386 = vpow.pop %v1385
    %v1387 = vsel %vm645, %v1382, 0.0
    %1388 = vadd.xlane.f32.xlu0 %v1387
    %v1389 = vpop.xlane.xlu0 %1388
    %v1390 = vsel %vm645, %v1384, 0.0
    %1391 = vadd.xlane.f32.xlu0 %v1390
    %v1392 = vpop.xlane.xlu0 %1391
    %v1393 = vsel %vm645, %v1386, 0.0
    %1394 = vadd.xlane.f32.xlu0 %v1393
    %v1395 = vpop.xlane.xlu0 %1394
    %v1396 = vrcp.pop %v1389
    %v1397 = vmul.f32 %v1382, %v1396
    %v1398 = vrcp.pop %v1392
    %v1399 = vmul.f32 %v1384, %v1398
    %v1400 = vrcp.pop %v1395
    %v1401 = vmul.f32 %v1386, %v1400
    %1402 = vrot.lane.b32.xlu0 %v524, 40
    %v1403 = vpop.permute.xlu0 %1402
    %1404 = vrot.lane.b32.xlu0 %v529, 40
    %v1405 = vpop.permute.xlu0 %1404
    %1406 = vrot.lane.b32.xlu0 %v534, 40
    %v1407 = vpop.permute.xlu0 %1406
    %v1412 = vsel %vm645, %v1397, 0
    %v1415 = vsel %vm645, %v1399, 0
    %v1418 = vsel %vm645, %v1401, 0
    %1420 = vmatprep.subr.mxu0 0.0
    %1421 = vmatpush1.msra.mxu0 0.0
    %1422 = vmatprep.subr.mxu0 0.0
    %1423 = vmatpush1.msra.mxu0 0.0
    %1424 = vmatprep.subr.mxu0 0.0
    %1425 = vmatpush1.msra.mxu0 0.0
    %1426 = vmatprep.subr.mxu0 0.0
    %1427 = vmatpush1.msra.mxu0 0.0
    %1428 = vmatprep.subr.mxu0 0.0
    %1429 = vmatpush1.msra.mxu0 0.0
    %1430 = vmatprep.subr.mxu0 0.0
    %1431 = vmatpush1.msra.mxu0 0.0
    %1432 = vmatprep.subr.mxu0 0.0
    %1433 = vmatpush1.msra.mxu0 0.0
    %1434 = vmatprep.subr.mxu0 0.0
    %1435 = vmatpush1.msra.mxu0 0.0
    %1436 = vmatprep.subr.mxu0 0.0
    %1437 = vmatpush1.msra.mxu0 0.0
    %1438 = vmatprep.subr.mxu0 0.0
    %1439 = vmatpush1.msra.mxu0 0.0
    %1440 = vmatprep.subr.mxu0 0.0
    %1441 = vmatpush1.msra.mxu0 0.0
    %1442 = vmatprep.subr.mxu0 0.0
    %1443 = vmatpush1.msra.mxu0 0.0
    %1444 = vmatprep.subr.mxu0 0.0
    %1445 = vmatpush1.msra.mxu0 0.0
    %1446 = vmatprep.subr.mxu0 0.0
    %1447 = vmatpush1.msra.mxu0 %v1407
    %1448 = vmatprep.subr.mxu0 0.0
    %1449 = vmatpush1.msra.mxu0 %v1405
    %1450 = vmatprep.subr.mxu0 0.0
    %1451 = vmatpush1.msra.mxu0 %v1403
    %1452 = vmatprep.subr.mxu0 0.0
    %1453 = vmatpush2.msra.mxu0 0.0
    %1454 = vmatprep.subr.mxu0 0.0
    %1455 = vmatpush2.msra.mxu0 0.0
    %1456 = vmatprep.subr.mxu0 0.0
    %1457 = vmatpush2.msra.mxu0 0.0
    %1458 = vmatprep.subr.mxu0 0.0
    %1459 = vmatpush2.msra.mxu0 0.0
    %1460 = vmatprep.subr.mxu0 0.0
    %1461 = vmatpush2.msra.mxu0 0.0
    %1462 = vmatprep.subr.mxu0 0.0
    %1463 = vmatpush2.msra.mxu0 0.0
    %1464 = vmatprep.subr.mxu0 0.0
    %1465 = vmatpush2.msra.mxu0 0.0
    %1466 = vmatprep.subr.mxu0 0.0
    %1467 = vmatpush2.msra.mxu0 0.0
    %1468 = vmatprep.subr.mxu0 0.0
    %1469 = vmatpush2.msra.mxu0 0.0
    %1470 = vmatprep.subr.mxu0 0.0
    %1471 = vmatpush2.msra.mxu0 0.0
    %1472 = vmatprep.subr.mxu0 0.0
    %1473 = vmatpush2.msra.mxu0 0.0
    %1474 = vmatprep.subr.mxu0 0.0
    %1475 = vmatpush2.msra.mxu0 0.0
    %1476 = vmatprep.subr.mxu0 0.0
    %1477 = vmatpush2.msra.mxu0 0.0
    %1478 = vmatprep.subr.mxu0 0.0
    %1479 = vmatpush2.msra.mxu0 0.0
    %1480 = vmatprep.subr.mxu0 0.0
    %1481 = vmatpush2.msra.mxu0 0.0
    %1482 = vmatprep.subr.mxu0 0.0
    %1483 = vmatpush2.msra.mxu0 0.0
    %1484 = vmatprep.mubr.f32.mxu0 0.0
    %1485 = vmatmul.mubr.f32.gmra.mxu0 %v1412
    %v1486 = vpop.f32.mrf.mxu0
    %v1487 = vadd.f32 0.0, %v1486
    %v1488 = vpop.f32.mrf.mxu0
    %1489 = vmatprep.mubr.f32.mxu0 0.0
    %1490 = vmatmul.mubr.f32.gmra.mxu0 %v1415
    %v1491 = vpop.f32.mrf.mxu0
    %v1492 = vadd.f32 0.0, %v1491
    %v1493 = vpop.f32.mrf.mxu0
    %1494 = vmatprep.mubr.f32.mxu0 0.0
    %1495 = vmatmul.mubr.f32.gmra.mxu0 %v1418
    %v1496 = vpop.f32.mrf.mxu0
    %v1497 = vadd.f32 0.0, %v1496
    %v1498 = vpop.f32.mrf.mxu0
    %1499 = vdwg.mxu0
    %1503 = vrot.lane.b32.xlu0 %v1005, 8
    %v1504 = vpop.permute.xlu0 %1503
    %1505 = vrot.lane.b32.xlu0 %v1010, 8
    %v1506 = vpop.permute.xlu0 %1505
    %1507 = vrot.lane.b32.xlu0 %v1015, 8
    %v1508 = vpop.permute.xlu0 %1507
    %1515 = vrot.lane.b32.xlu0 %v1246, 16
    %v1516 = vpop.permute.xlu0 %1515
    %1517 = vrot.lane.b32.xlu0 %v1251, 16
    %v1518 = vpop.permute.xlu0 %1517
    %1519 = vrot.lane.b32.xlu0 %v1256, 16
    %v1520 = vpop.permute.xlu0 %1519
    %1527 = vrot.lane.b32.xlu0 %v1487, 24
    %v1528 = vpop.permute.xlu0 %1527
    %1529 = vrot.lane.b32.xlu0 %v1492, 24
    %v1530 = vpop.permute.xlu0 %1529
    %1531 = vrot.lane.b32.xlu0 %v1497, 24
    %v1532 = vpop.permute.xlu0 %1531
    %v1536 = vsel %vm546, %v764, %v1504
    %v1537 = vsel %vm546, %v769, %v1506
    %v1538 = vsel %vm546, %v774, %v1508
    %vm1539 = vcmask 130048
    %v1540 = vsel %vm1539, %v1536, %v1516
    %v1541 = vsel %vm1539, %v1537, %v1518
    %v1542 = vsel %vm1539, %v1538, %v1520
    %v1543 = vsel %vm645, %v1540, %v1528
    %v1544 = vsel %vm645, %v1541, %v1530
    %v1545 = vsel %vm645, %v1542, %v1532
    %v1546 = vlaneseq
    %v1547 = vshrl.u32 %v1546, 7
    %v1548 = vsub.s32 1, %v1547
    %v1549 = vrot.slane %v443, %v1548
    %v1551 = vsel %vm43, %v1543, 0
    %v1554 = vsel %vm43, %v1544, 0
    %v1557 = vsel %vm43, %v1545, 0
    %1559 = vmatprep.subr.mxu0 0.0
    %1560 = vmatpush1.msra.mxu0 0.0
    %1561 = vmatprep.subr.mxu0 0.0
    %1562 = vmatpush1.msra.mxu0 0.0
    %1563 = vmatprep.subr.mxu0 0.0
    %1564 = vmatpush1.msra.mxu0 0.0
    %1565 = vmatprep.subr.mxu0 0.0
    %1566 = vmatpush1.msra.mxu0 0.0
    %1567 = vmatprep.subr.mxu0 0.0
    %1568 = vmatpush1.msra.mxu0 0.0
    %1569 = vmatprep.subr.mxu0 0.0
    %1570 = vmatpush1.msra.mxu0 0.0
    %1571 = vmatprep.subr.mxu0 0.0
    %1572 = vmatpush1.msra.mxu0 0.0
    %1573 = vmatprep.subr.mxu0 0.0
    %1574 = vmatpush1.msra.mxu0 0.0
    %1575 = vmatprep.subr.mxu0 0.0
    %1576 = vmatpush1.msra.mxu0 0.0
    %1577 = vmatprep.subr.mxu0 0.0
    %1578 = vmatpush1.msra.mxu0 0.0
    %1579 = vmatprep.subr.mxu0 0.0
    %1580 = vmatpush1.msra.mxu0 0.0
    %1581 = vmatprep.subr.mxu0 0.0
    %1582 = vmatpush1.msra.mxu0 0.0
    %1583 = vmatprep.subr.mxu0 0.0
    %1584 = vmatpush1.msra.mxu0 %v430
    %1585 = vmatprep.subr.mxu0 0.0
    %1586 = vmatpush1.msra.mxu0 %v429
    %1587 = vmatprep.subr.mxu0 0.0
    %1588 = vmatpush1.msra.mxu0 %v428
    %1589 = vmatprep.subr.mxu0 0.0
    %1590 = vmatpush1.msra.mxu0 %v427
    %1591 = vmatprep.subr.mxu0 0.0
    %1592 = vmatpush2.msra.mxu0 0.0
    %1593 = vmatprep.subr.mxu0 0.0
    %1594 = vmatpush2.msra.mxu0 0.0
    %1595 = vmatprep.subr.mxu0 0.0
    %1596 = vmatpush2.msra.mxu0 0.0
    %1597 = vmatprep.subr.mxu0 0.0
    %1598 = vmatpush2.msra.mxu0 0.0
    %1599 = vmatprep.subr.mxu0 0.0
    %1600 = vmatpush2.msra.mxu0 0.0
    %1601 = vmatprep.subr.mxu0 0.0
    %1602 = vmatpush2.msra.mxu0 0.0
    %1603 = vmatprep.subr.mxu0 0.0
    %1604 = vmatpush2.msra.mxu0 0.0
    %1605 = vmatprep.subr.mxu0 0.0
    %1606 = vmatpush2.msra.mxu0 0.0
    %1607 = vmatprep.subr.mxu0 0.0
    %1608 = vmatpush2.msra.mxu0 0.0
    %1609 = vmatprep.subr.mxu0 0.0
    %1610 = vmatpush2.msra.mxu0 0.0
    %1611 = vmatprep.subr.mxu0 0.0
    %1612 = vmatpush2.msra.mxu0 0.0
    %1613 = vmatprep.subr.mxu0 0.0
    %1614 = vmatpush2.msra.mxu0 0.0
    %1615 = vmatprep.subr.mxu0 0.0
    %1616 = vmatpush2.msra.mxu0 0.0
    %1617 = vmatprep.subr.mxu0 0.0
    %1618 = vmatpush2.msra.mxu0 0.0
    %1619 = vmatprep.subr.mxu0 0.0
    %1620 = vmatpush2.msra.mxu0 0.0
    %1621 = vmatprep.subr.mxu0 0.0
    %1622 = vmatpush2.msra.mxu0 0.0
    %1623 = vmatprep.mubr.f32.mxu0 0.0
    %1624 = vmatmul.mubr.f32.gmra.mxu0 %v1551
    %v1625 = vpop.f32.mrf.mxu0
    %v1626 = vadd.f32 %v1549, %v1625
    %v1627 = vpop.f32.mrf.mxu0
    %1628 = vmatprep.mubr.f32.mxu0 0.0
    %1629 = vmatmul.mubr.f32.gmra.mxu0 %v1554
    %v1630 = vpop.f32.mrf.mxu0
    %v1631 = vadd.f32 %v1549, %v1630
    %v1632 = vpop.f32.mrf.mxu0
    %1633 = vmatprep.mubr.f32.mxu0 0.0
    %1634 = vmatmul.mubr.f32.gmra.mxu0 %v1557
    %v1635 = vpop.f32.mrf.mxu0
    %v1636 = vadd.f32 %v1549, %v1635
    %v1637 = vpop.f32.mrf.mxu0
    %1638 = vdwg.mxu0
    %v1639 = vadd.f32 %v81, %v1626
    %v1640 = vadd.f32 %v82, %v1631
    %v1641 = vadd.f32 %v422, %v1636
    %v1642 = vsel %vm43, %v1639, 0.0
    %1643 = vadd.xlane.f32.xlu0 %v1642
    %v1644 = vpop.xlane.xlu0 %1643
    %v1645 = vsel %vm43, %v1640, 0.0
    %1646 = vadd.xlane.f32.xlu0 %v1645
    %v1647 = vpop.xlane.xlu0 %1646
    %v1648 = vsel %vm43, %v1641, 0.0
    %1649 = vadd.xlane.f32.xlu0 %v1648
    %v1650 = vpop.xlane.xlu0 %1649
    %v1651 = vmul.f32 %v1644, %v50
    %v1652 = vmul.f32 %v1647, %v50
    %v1653 = vmul.f32 %v1650, %v50
    %v1654 = vsub.f32 %v1639, %v1651
    %v1655 = vsub.f32 %v1640, %v1652
    %v1656 = vsub.f32 %v1641, %v1653
    %v1657 = vmul.f32 %v1654, %v1654
    %v1658 = vmul.f32 %v1655, %v1655
    %v1659 = vmul.f32 %v1656, %v1656
    %v1660 = vsel %vm43, %v1657, 0.0
    %1661 = vadd.xlane.f32.xlu0 %v1660
    %v1662 = vpop.xlane.xlu0 %1661
    %v1663 = vsel %vm43, %v1658, 0.0
    %1664 = vadd.xlane.f32.xlu0 %v1663
    %v1665 = vpop.xlane.xlu0 %1664
    %v1666 = vsel %vm43, %v1659, 0.0
    %1667 = vadd.xlane.f32.xlu0 %v1666
    %v1668 = vpop.xlane.xlu0 %1667
    %v1669 = vmul.f32 %v1662, %v50
    %v1670 = vmul.f32 %v1665, %v50
    %v1671 = vmul.f32 %v1668, %v50
    %v1672 = vadd.f32 %v1669, 1e-05
    %v1673 = vadd.f32 %v1670, 1e-05
    %v1674 = vadd.f32 %v1671, 1e-05
    %v1675 = vrsqrt.pop %v1672
    %v1676 = vrsqrt.pop %v1673
    %v1677 = vrsqrt.pop %v1674
    %v1678 = vmul.f32 %v1654, %v1675
    %v1679 = vmul.f32 %v1655, %v1676
    %v1680 = vmul.f32 %v1656, %v1677
    %v1681 = vlaneseq
    %v1682 = vshrl.u32 %v1681, 7
    %v1683 = vsub.s32 2, %v1682
    %v1684 = vrot.slane %v443, %v1683
    %v1685 = vmul.f32 %v1678, %v1684
    %v1686 = vmul.f32 %v1679, %v1684
    %v1687 = vmul.f32 %v1680, %v1684
    %v1688 = vlaneseq
    %v1689 = vshrl.u32 %v1688, 7
    %v1690 = vsub.s32 3, %v1689
    %v1691 = vrot.slane %v443, %v1690
    %v1692 = vadd.f32 %v1685, %v1691
    %v1693 = vadd.f32 %v1686, %v1691
    %v1694 = vadd.f32 %v1687, %v1691
    %v1695 = vlaneseq
    %v1696 = vshrl.u32 %v1695, 7
    %v1697 = vsub.s32 4, %v1696
    %v1698 = vrot.slane %v443, %v1697
    %v1700 = vsel %vm43, %v1692, 0
    %v1703 = vsel %vm43, %v1693, 0
    %v1706 = vsel %vm43, %v1694, 0
    %1708 = vmatprep.subr.mxu0 0.0
    %1709 = vmatpush1.msra.mxu0 0.0
    %1710 = vmatprep.subr.mxu0 0.0
    %1711 = vmatpush1.msra.mxu0 0.0
    %1712 = vmatprep.subr.mxu0 0.0
    %1713 = vmatpush1.msra.mxu0 0.0
    %1714 = vmatprep.subr.mxu0 0.0
    %1715 = vmatpush1.msra.mxu0 0.0
    %1716 = vmatprep.subr.mxu0 0.0
    %1717 = vmatpush1.msra.mxu0 0.0
    %1718 = vmatprep.subr.mxu0 0.0
    %1719 = vmatpush1.msra.mxu0 0.0
    %1720 = vmatprep.subr.mxu0 0.0
    %1721 = vmatpush1.msra.mxu0 0.0
    %1722 = vmatprep.subr.mxu0 0.0
    %1723 = vmatpush1.msra.mxu0 0.0
    %1724 = vmatprep.subr.mxu0 0.0
    %1725 = vmatpush1.msra.mxu0 0.0
    %1726 = vmatprep.subr.mxu0 0.0
    %1727 = vmatpush1.msra.mxu0 0.0
    %1728 = vmatprep.subr.mxu0 0.0
    %1729 = vmatpush1.msra.mxu0 0.0
    %1730 = vmatprep.subr.mxu0 0.0
    %1731 = vmatpush1.msra.mxu0 0.0
    %1732 = vmatprep.subr.mxu0 0.0
    %1733 = vmatpush1.msra.mxu0 %v434
    %1734 = vmatprep.subr.mxu0 0.0
    %1735 = vmatpush1.msra.mxu0 %v433
    %1736 = vmatprep.subr.mxu0 0.0
    %1737 = vmatpush1.msra.mxu0 %v432
    %1738 = vmatprep.subr.mxu0 0.0
    %1739 = vmatpush1.msra.mxu0 %v431
    %1740 = vmatprep.subr.mxu0 0.0
    %1741 = vmatpush2.msra.mxu0 0.0
    %1742 = vmatprep.subr.mxu0 0.0
    %1743 = vmatpush2.msra.mxu0 0.0
    %1744 = vmatprep.subr.mxu0 0.0
    %1745 = vmatpush2.msra.mxu0 0.0
    %1746 = vmatprep.subr.mxu0 0.0
    %1747 = vmatpush2.msra.mxu0 0.0
    %1748 = vmatprep.subr.mxu0 0.0
    %1749 = vmatpush2.msra.mxu0 0.0
    %1750 = vmatprep.subr.mxu0 0.0
    %1751 = vmatpush2.msra.mxu0 0.0
    %1752 = vmatprep.subr.mxu0 0.0
    %1753 = vmatpush2.msra.mxu0 0.0
    %1754 = vmatprep.subr.mxu0 0.0
    %1755 = vmatpush2.msra.mxu0 0.0
    %1756 = vmatprep.subr.mxu0 0.0
    %1757 = vmatpush2.msra.mxu0 0.0
    %1758 = vmatprep.subr.mxu0 0.0
    %1759 = vmatpush2.msra.mxu0 0.0
    %1760 = vmatprep.subr.mxu0 0.0
    %1761 = vmatpush2.msra.mxu0 0.0
    %1762 = vmatprep.subr.mxu0 0.0
    %1763 = vmatpush2.msra.mxu0 0.0
    %1764 = vmatprep.subr.mxu0 0.0
    %1765 = vmatpush2.msra.mxu0 0.0
    %1766 = vmatprep.subr.mxu0 0.0
    %1767 = vmatpush2.msra.mxu0 0.0
    %1768 = vmatprep.subr.mxu0 0.0
    %1769 = vmatpush2.msra.mxu0 0.0
    %1770 = vmatprep.subr.mxu0 0.0
    %1771 = vmatpush2.msra.mxu0 0.0
    %1772 = vmatprep.mubr.f32.mxu0 0.0
    %1773 = vmatmul.mubr.f32.gmra.mxu0 %v1700
    %v1774 = vpop.f32.mrf.mxu0
    %v1775 = vadd.f32 %v1698, %v1774
    %v1776 = vpop.f32.mrf.mxu0
    %1777 = vmatprep.mubr.f32.mxu0 0.0
    %1778 = vmatmul.mubr.f32.gmra.mxu0 %v1703
    %v1779 = vpop.f32.mrf.mxu0
    %v1780 = vadd.f32 %v1698, %v1779
    %v1781 = vpop.f32.mrf.mxu0
    %1782 = vmatprep.mubr.f32.mxu0 0.0
    %1783 = vmatmul.mubr.f32.gmra.mxu0 %v1706
    %v1784 = vpop.f32.mrf.mxu0
    %v1785 = vadd.f32 %v1698, %v1784
    %v1786 = vpop.f32.mrf.mxu0
    %1787 = vdwg.mxu0
    %v1788 = vmul.f32 %v1775, 0.5
    %v1789 = vmul.f32 %v1780, 0.5
    %v1790 = vmul.f32 %v1785, 0.5
    %v1791 = vmul.f32 %v1775, 0.044715
    %v1792 = vmul.f32 %v1780, 0.044715
    %v1793 = vmul.f32 %v1785, 0.044715
    %v1794 = vmul.f32 %v1791, %v1775
    %v1795 = vmul.f32 %v1792, %v1780
    %v1796 = vmul.f32 %v1793, %v1785
    %v1797 = vmul.f32 %v1794, %v1775
    %v1798 = vmul.f32 %v1795, %v1780
    %v1799 = vmul.f32 %v1796, %v1785
    %v1800 = vadd.f32 %v1775, %v1797
    %v1801 = vadd.f32 %v1780, %v1798
    %v1802 = vadd.f32 %v1785, %v1799
    %v1803 = vmul.f32 %v1800, 0.7978846
    %v1804 = vmul.f32 %v1801, 0.7978846
    %v1805 = vmul.f32 %v1802, 0.7978846
    %v1806 = vtanh.pop %v1803
    %v1807 = vtanh.pop %v1804
    %v1808 = vtanh.pop %v1805
    %v1809 = vadd.f32 %v1806, 1.0
    %v1810 = vadd.f32 %v1807, 1.0
    %v1811 = vadd.f32 %v1808, 1.0
    %v1812 = vmul.f32 %v1788, %v1809
    %v1813 = vmul.f32 %v1789, %v1810
    %v1814 = vmul.f32 %v1790, %v1811
    %v1815 = vlaneseq
    %v1816 = vshrl.u32 %v1815, 7
    %v1817 = vsub.s32 5, %v1816
    %v1818 = vrot.slane %v443, %v1817
    %vm1819 = vcmask 523264
    %v1821 = vsel %vm1819, %v1812, 0
    %v1824 = vsel %vm1819, %v1813, 0
    %v1827 = vsel %vm1819, %v1814, 0
    %1829 = vmatprep.subr.mxu0 0.0
    %1830 = vmatpush1.msra.mxu0 0.0
    %1831 = vmatprep.subr.mxu0 0.0
    %1832 = vmatpush1.msra.mxu0 0.0
    %1833 = vmatprep.subr.mxu0 0.0
    %1834 = vmatpush1.msra.mxu0 0.0
    %1835 = vmatprep.subr.mxu0 0.0
    %1836 = vmatpush1.msra.mxu0 0.0
    %1837 = vmatprep.subr.mxu0 0.0
    %1838 = vmatpush1.msra.mxu0 0.0
    %1839 = vmatprep.subr.mxu0 0.0
    %1840 = vmatpush1.msra.mxu0 0.0
    %1841 = vmatprep.subr.mxu0 0.0
    %1842 = vmatpush1.msra.mxu0 0.0
    %1843 = vmatprep.subr.mxu0 0.0
    %1844 = vmatpush1.msra.mxu0 0.0
    %1845 = vmatprep.subr.mxu0 0.0
    %1846 = vmatpush1.msra.mxu0 %v442
    %1847 = vmatprep.subr.mxu0 0.0
    %1848 = vmatpush1.msra.mxu0 %v441
    %1849 = vmatprep.subr.mxu0 0.0
    %1850 = vmatpush1.msra.mxu0 %v440
    %1851 = vmatprep.subr.mxu0 0.0
    %1852 = vmatpush1.msra.mxu0 %v439
    %1853 = vmatprep.subr.mxu0 0.0
    %1854 = vmatpush1.msra.mxu0 %v438
    %1855 = vmatprep.subr.mxu0 0.0
    %1856 = vmatpush1.msra.mxu0 %v437
    %1857 = vmatprep.subr.mxu0 0.0
    %1858 = vmatpush1.msra.mxu0 %v436
    %1859 = vmatprep.subr.mxu0 0.0
    %1860 = vmatpush1.msra.mxu0 %v435
    %1861 = vmatprep.subr.mxu0 0.0
    %1862 = vmatpush2.msra.mxu0 0.0
    %1863 = vmatprep.subr.mxu0 0.0
    %1864 = vmatpush2.msra.mxu0 0.0
    %1865 = vmatprep.subr.mxu0 0.0
    %1866 = vmatpush2.msra.mxu0 0.0
    %1867 = vmatprep.subr.mxu0 0.0
    %1868 = vmatpush2.msra.mxu0 0.0
    %1869 = vmatprep.subr.mxu0 0.0
    %1870 = vmatpush2.msra.mxu0 0.0
    %1871 = vmatprep.subr.mxu0 0.0
    %1872 = vmatpush2.msra.mxu0 0.0
    %1873 = vmatprep.subr.mxu0 0.0
    %1874 = vmatpush2.msra.mxu0 0.0
    %1875 = vmatprep.subr.mxu0 0.0
    %1876 = vmatpush2.msra.mxu0 0.0
    %1877 = vmatprep.subr.mxu0 0.0
    %1878 = vmatpush2.msra.mxu0 0.0
    %1879 = vmatprep.subr.mxu0 0.0
    %1880 = vmatpush2.msra.mxu0 0.0
    %1881 = vmatprep.subr.mxu0 0.0
    %1882 = vmatpush2.msra.mxu0 0.0
    %1883 = vmatprep.subr.mxu0 0.0
    %1884 = vmatpush2.msra.mxu0 0.0
    %1885 = vmatprep.subr.mxu0 0.0
    %1886 = vmatpush2.msra.mxu0 0.0
    %1887 = vmatprep.subr.mxu0 0.0
    %1888 = vmatpush2.msra.mxu0 0.0
    %1889 = vmatprep.subr.mxu0 0.0
    %1890 = vmatpush2.msra.mxu0 0.0
    %1891 = vmatprep.subr.mxu0 0.0
    %1892 = vmatpush2.msra.mxu0 0.0
    %1893 = vmatprep.mubr.f32.mxu0 0.0
    %1894 = vmatmul.mubr.f32.gmra.mxu0 %v1821
    %v1895 = vpop.f32.mrf.mxu0
    %v1896 = vadd.f32 %v1818, %v1895
    %v1897 = vpop.f32.mrf.mxu0
    %1898 = vmatprep.mubr.f32.mxu0 0.0
    %1899 = vmatmul.mubr.f32.gmra.mxu0 %v1824
    %v1900 = vpop.f32.mrf.mxu0
    %v1901 = vadd.f32 %v1818, %v1900
    %v1902 = vpop.f32.mrf.mxu0
    %1903 = vmatprep.mubr.f32.mxu0 0.0
    %1904 = vmatmul.mubr.f32.gmra.mxu0 %v1827
    %v1905 = vpop.f32.mrf.mxu0
    %v1906 = vadd.f32 %v1818, %v1905
    %v1907 = vpop.f32.mrf.mxu0
    %1908 = vdwg.mxu0
    %v1909 = vadd.f32 %v1692, %v1896
    %v1910 = vadd.f32 %v1693, %v1901
    %v1911 = vadd.f32 %v1694, %v1906
    %v1912 = vsel %vm43, %v1909, 0.0
    %1913 = vadd.xlane.f32.xlu0 %v1912
    %v1914 = vpop.xlane.xlu0 %1913
    %v1915 = vsel %vm43, %v1910, 0.0
    %1916 = vadd.xlane.f32.xlu0 %v1915
    %v1917 = vpop.xlane.xlu0 %1916
    %v1918 = vsel %vm43, %v1911, 0.0
    %1919 = vadd.xlane.f32.xlu0 %v1918
    %v1920 = vpop.xlane.xlu0 %1919
    %v1921 = vmul.f32 %v1914, %v50
    %v1922 = vmul.f32 %v1917, %v50
    %v1923 = vmul.f32 %v1920, %v50
    %v1924 = vsub.f32 %v1909, %v1921
    %v1925 = vsub.f32 %v1910, %v1922
    %v1926 = vsub.f32 %v1911, %v1923
    %v1927 = vmul.f32 %v1924, %v1924
    %v1928 = vmul.f32 %v1925, %v1925
    %v1929 = vmul.f32 %v1926, %v1926
    %v1930 = vsel %vm43, %v1927, 0.0
    %1931 = vadd.xlane.f32.xlu0 %v1930
    %v1932 = vpop.xlane.xlu0 %1931
    %v1933 = vsel %vm43, %v1928, 0.0
    %1934 = vadd.xlane.f32.xlu0 %v1933
    %v1935 = vpop.xlane.xlu0 %1934
    %v1936 = vsel %vm43, %v1929, 0.0
    %1937 = vadd.xlane.f32.xlu0 %v1936
    %v1938 = vpop.xlane.xlu0 %1937
    %v1939 = vmul.f32 %v1932, %v50
    %v1940 = vmul.f32 %v1935, %v50
    %v1941 = vmul.f32 %v1938, %v50
    %v1942 = vadd.f32 %v1939, 1e-05
    %v1943 = vadd.f32 %v1940, 1e-05
    %v1944 = vadd.f32 %v1941, 1e-05
    %v1945 = vrsqrt.pop %v1942
    %v1946 = vrsqrt.pop %v1943
    %v1947 = vrsqrt.pop %v1944
    %v1948 = vmul.f32 %v1924, %v1945
    %v1949 = vmul.f32 %v1925, %v1946
    %v1950 = vmul.f32 %v1926, %v1947
    %v1951 = vlaneseq
    %v1952 = vshrl.u32 %v1951, 7
    %v1953 = vsub.s32 6, %v1952
    %v1954 = vrot.slane %v443, %v1953
    %v1955 = vmul.f32 %v1948, %v1954
    %v1956 = vmul.f32 %v1949, %v1954
    %v1957 = vmul.f32 %v1950, %v1954
    %v1958 = vlaneseq
    %v1959 = vshrl.u32 %v1958, 7
    %v1960 = vsub.s32 7, %v1959
    %v1961 = vrot.slane %v443, %v1960
    %v1962 = vadd.f32 %v1955, %v1961
    %v1963 = vadd.f32 %v1956, %v1961
    %v1964 = vadd.f32 %v1957, %v1961
    %s1965 = scalar_lea.vmem %s5, 160
    %v1966 = vld [vmem:[%s1965] sm:$0xff]
    %v1967 = vld [vmem:[%s1965 + $0x8] sm:$0xff]
    %v1968 = vld [vmem:[%s1965 + $0x10] sm:$0xff]
    %v1969 = vld [vmem:[%s1965 + $0x18] sm:$0xff]
    %v1970 = vld [vmem:[%s1965 + $0x20] sm:$0xff]
    %v1971 = vld [vmem:[%s1965 + $0x28] sm:$0xff]
    %v1972 = vld [vmem:[%s1965 + $0x30] sm:$0xff]
    %v1973 = vld [vmem:[%s1965 + $0x38] sm:$0xff]
    %v1974 = vld [vmem:[%s1965 + $0x40] sm:$0xff]
    %v1975 = vld [vmem:[%s1965 + $0x48] sm:$0xff]
    %v1976 = vld [vmem:[%s1965 + $0x50] sm:$0xff]
    %v1977 = vld [vmem:[%s1965 + $0x58] sm:$0xff]
    %v1978 = vld [vmem:[%s1965 + $0x60] sm:$0xff]
    %v1979 = vld [vmem:[%s1965 + $0x68] sm:$0xff]
    %v1980 = vld [vmem:[%s1965 + $0x70] sm:$0xff]
    %v1981 = vld [vmem:[%s1965 + $0x78] sm:$0xff]
    %v1982 = vld [vmem:[%s1965 + $0x80] sm:$0xff]
    %v1983 = vld [vmem:[%s1965 + $0x88] sm:$0xff]
    %v1984 = vld [vmem:[%s1965 + $0x90] sm:$0xff]
    %v1985 = vld [vmem:[%s1965 + $0x98] sm:$0xff]
    %s1986 = scalar_lea.vmem %s4, 8
    %v1987 = vld [vmem:[%s1986] sm:$0xff]
    %v1988 = vlaneseq
    %v1989 = vshrl.u32 %v1988, 7
    %v1990 = vsub.s32 0, %v1989
    %v1991 = vrot.slane %v1987, %v1990
    %v1993 = vsel %vm43, %v1962, 0
    %v1996 = vsel %vm43, %v1963, 0
    %v1999 = vsel %vm43, %v1964, 0
    %2001 = vmatprep.subr.mxu0 0.0
    %2002 = vmatpush1.msra.mxu0 0.0
    %2003 = vmatprep.subr.mxu0 0.0
    %2004 = vmatpush1.msra.mxu0 0.0
    %2005 = vmatprep.subr.mxu0 0.0
    %2006 = vmatpush1.msra.mxu0 0.0
    %2007 = vmatprep.subr.mxu0 0.0
    %2008 = vmatpush1.msra.mxu0 0.0
    %2009 = vmatprep.subr.mxu0 0.0
    %2010 = vmatpush1.msra.mxu0 0.0
    %2011 = vmatprep.subr.mxu0 0.0
    %2012 = vmatpush1.msra.mxu0 0.0
    %2013 = vmatprep.subr.mxu0 0.0
    %2014 = vmatpush1.msra.mxu0 0.0
    %2015 = vmatprep.subr.mxu0 0.0
    %2016 = vmatpush1.msra.mxu0 0.0
    %2017 = vmatprep.subr.mxu0 0.0
    %2018 = vmatpush1.msra.mxu0 0.0
    %2019 = vmatprep.subr.mxu0 0.0
    %2020 = vmatpush1.msra.mxu0 0.0
    %2021 = vmatprep.subr.mxu0 0.0
    %2022 = vmatpush1.msra.mxu0 0.0
    %2023 = vmatprep.subr.mxu0 0.0
    %2024 = vmatpush1.msra.mxu0 0.0
    %2025 = vmatprep.subr.mxu0 0.0
    %2026 = vmatpush1.msra.mxu0 %v1969
    %2027 = vmatprep.subr.mxu0 0.0
    %2028 = vmatpush1.msra.mxu0 %v1968
    %2029 = vmatprep.subr.mxu0 0.0
    %2030 = vmatpush1.msra.mxu0 %v1967
    %2031 = vmatprep.subr.mxu0 0.0
    %2032 = vmatpush1.msra.mxu0 %v1966
    %2033 = vmatprep.subr.mxu0 0.0
    %2034 = vmatpush2.msra.mxu0 0.0
    %2035 = vmatprep.subr.mxu0 0.0
    %2036 = vmatpush2.msra.mxu0 0.0
    %2037 = vmatprep.subr.mxu0 0.0
    %2038 = vmatpush2.msra.mxu0 0.0
    %2039 = vmatprep.subr.mxu0 0.0
    %2040 = vmatpush2.msra.mxu0 0.0
    %2041 = vmatprep.subr.mxu0 0.0
    %2042 = vmatpush2.msra.mxu0 0.0
    %2043 = vmatprep.subr.mxu0 0.0
    %2044 = vmatpush2.msra.mxu0 0.0
    %2045 = vmatprep.subr.mxu0 0.0
    %2046 = vmatpush2.msra.mxu0 0.0
    %2047 = vmatprep.subr.mxu0 0.0
    %2048 = vmatpush2.msra.mxu0 0.0
    %2049 = vmatprep.subr.mxu0 0.0
    %2050 = vmatpush2.msra.mxu0 0.0
    %2051 = vmatprep.subr.mxu0 0.0
    %2052 = vmatpush2.msra.mxu0 0.0
    %2053 = vmatprep.subr.mxu0 0.0
    %2054 = vmatpush2.msra.mxu0 0.0
    %2055 = vmatprep.subr.mxu0 0.0
    %2056 = vmatpush2.msra.mxu0 0.0
    %2057 = vmatprep.subr.mxu0 0.0
    %2058 = vmatpush2.msra.mxu0 0.0
    %2059 = vmatprep.subr.mxu0 0.0
    %2060 = vmatpush2.msra.mxu0 0.0
    %2061 = vmatprep.subr.mxu0 0.0
    %2062 = vmatpush2.msra.mxu0 0.0
    %2063 = vmatprep.subr.mxu0 0.0
    %2064 = vmatpush2.msra.mxu0 0.0
    %2065 = vmatprep.mubr.f32.mxu0 0.0
    %2066 = vmatmul.mubr.f32.gmra.mxu0 %v1993
    %v2067 = vpop.f32.mrf.mxu0
    %v2068 = vadd.f32 %v1991, %v2067
    %v2069 = vpop.f32.mrf.mxu0
    %2070 = vmatprep.mubr.f32.mxu0 0.0
    %2071 = vmatmul.mubr.f32.gmra.mxu0 %v1996
    %v2072 = vpop.f32.mrf.mxu0
    %v2073 = vadd.f32 %v1991, %v2072
    %v2074 = vpop.f32.mrf.mxu0
    %2075 = vmatprep.mubr.f32.mxu0 0.0
    %2076 = vmatmul.mubr.f32.gmra.mxu0 %v1999
    %v2077 = vpop.f32.mrf.mxu0
    %v2078 = vadd.f32 %v1991, %v2077
    %v2079 = vpop.f32.mrf.mxu0
    %2080 = vdwg.mxu0
    %2084 = vrot.lane.b32.xlu0 %v2068, 96
    %v2085 = vpop.permute.xlu0 %2084
    %2086 = vrot.lane.b32.xlu0 %v2073, 96
    %v2087 = vpop.permute.xlu0 %2086
    %2088 = vrot.lane.b32.xlu0 %v2078, 96
    %v2089 = vpop.permute.xlu0 %2088
    %v2090 = vsel %vm546, %v2068, 0
    %v2092 = vsel %vm546, %v2073, 0
    %v2094 = vsel %vm546, %v2078, 0
    %v2096 = vsel %vm546, %v2085, 0
    %v2098 = vsel %vm546, %v2087, 0
    %v2100 = vsel %vm546, %v2089, 0
    %2102 = vmatprep.subr.mxu0 0.0
    %2103 = vmatpush1.xpose.msra.mxu0 0.0
    %2104 = vmatprep.subr.mxu0 0.0
    %2105 = vmatpush1.xpose.msra.mxu0 0.0
    %2106 = vmatprep.subr.mxu0 0.0
    %2107 = vmatpush1.xpose.msra.mxu0 0.0
    %2108 = vmatprep.subr.mxu0 0.0
    %2109 = vmatpush1.xpose.msra.mxu0 0.0
    %2110 = vmatprep.subr.mxu0 0.0
    %2111 = vmatpush1.xpose.msra.mxu0 0.0
    %2112 = vmatprep.subr.mxu0 0.0
    %2113 = vmatpush1.xpose.msra.mxu0 0.0
    %2114 = vmatprep.subr.mxu0 0.0
    %2115 = vmatpush1.xpose.msra.mxu0 0.0
    %2116 = vmatprep.subr.mxu0 0.0
    %2117 = vmatpush1.xpose.msra.mxu0 0.0
    %2118 = vmatprep.subr.mxu0 0.0
    %2119 = vmatpush1.xpose.msra.mxu0 0.0
    %2120 = vmatprep.subr.mxu0 0.0
    %2121 = vmatpush1.xpose.msra.mxu0 0.0
    %2122 = vmatprep.subr.mxu0 0.0
    %2123 = vmatpush1.xpose.msra.mxu0 0.0
    %2124 = vmatprep.subr.mxu0 0.0
    %2125 = vmatpush1.xpose.msra.mxu0 0.0
    %2126 = vmatprep.subr.mxu0 0.0
    %2127 = vmatpush1.xpose.msra.mxu0 0.0
    %2128 = vmatprep.subr.mxu0 0.0
    %2129 = vmatpush1.xpose.msra.mxu0 %v2100
    %2130 = vmatprep.subr.mxu0 0.0
    %2131 = vmatpush1.xpose.msra.mxu0 %v2098
    %2132 = vmatprep.subr.mxu0 0.0
    %2133 = vmatpush1.xpose.msra.mxu0 %v2096
    %2134 = vmatprep.subr.mxu0 0.0
    %2135 = vmatpush2.xpose.msra.mxu0 0.0
    %2136 = vmatprep.subr.mxu0 0.0
    %2137 = vmatpush2.xpose.msra.mxu0 0.0
    %2138 = vmatprep.subr.mxu0 0.0
    %2139 = vmatpush2.xpose.msra.mxu0 0.0
    %2140 = vmatprep.subr.mxu0 0.0
    %2141 = vmatpush2.xpose.msra.mxu0 0.0
    %2142 = vmatprep.subr.mxu0 0.0
    %2143 = vmatpush2.xpose.msra.mxu0 0.0
    %2144 = vmatprep.subr.mxu0 0.0
    %2145 = vmatpush2.xpose.msra.mxu0 0.0
    %2146 = vmatprep.subr.mxu0 0.0
    %2147 = vmatpush2.xpose.msra.mxu0 0.0
    %2148 = vmatprep.subr.mxu0 0.0
    %2149 = vmatpush2.xpose.msra.mxu0 0.0
    %2150 = vmatprep.subr.mxu0 0.0
    %2151 = vmatpush2.xpose.msra.mxu0 0.0
    %2152 = vmatprep.subr.mxu0 0.0
    %2153 = vmatpush2.xpose.msra.mxu0 0.0
    %2154 = vmatprep.subr.mxu0 0.0
    %2155 = vmatpush2.xpose.msra.mxu0 0.0
    %2156 = vmatprep.subr.mxu0 0.0
    %2157 = vmatpush2.xpose.msra.mxu0 0.0
    %2158 = vmatprep.subr.mxu0 0.0
    %2159 = vmatpush2.xpose.msra.mxu0 0.0
    %2160 = vmatprep.subr.mxu0 0.0
    %2161 = vmatpush2.xpose.msra.mxu0 0.0
    %2162 = vmatprep.subr.mxu0 0.0
    %2163 = vmatpush2.xpose.msra.mxu0 0.0
    %2164 = vmatprep.subr.mxu0 0.0
    %2165 = vmatpush2.xpose.msra.mxu0 0.0
    %2166 = vmatprep.mubr.f32.mxu0 0.0
    %2167 = vmatmul.mubr.f32.gmra.mxu0 %v2090
    %v2168 = vpop.f32.mrf.mxu0
    %v2169 = vadd.f32 0.0, %v2168
    %v2170 = vpop.f32.mrf.mxu0
    %2171 = vmatprep.mubr.f32.mxu0 0.0
    %2172 = vmatmul.mubr.f32.gmra.mxu0 %v2092
    %v2173 = vpop.f32.mrf.mxu0
    %v2174 = vadd.f32 0.0, %v2173
    %v2175 = vpop.f32.mrf.mxu0
    %2176 = vmatprep.mubr.f32.mxu0 0.0
    %2177 = vmatmul.mubr.f32.gmra.mxu0 %v2094
    %v2178 = vpop.f32.mrf.mxu0
    %v2179 = vadd.f32 0.0, %v2178
    %v2180 = vpop.f32.mrf.mxu0
    %2181 = vdwg.mxu0
    %v2182 = vmul.f32 %v2169, 0.35355338
    %v2183 = vmul.f32 %v2174, 0.35355338
    %v2184 = vmul.f32 %v2179, 0.35355338
    %v2185 = vadd.f32 %v2182, %v32
    %v2186 = vadd.f32 %v2183, %v33
    %v2187 = vadd.f32 %v2184, %v34
    %v2188 = vsel %vm645, %v2185, -inf
    %2189 = vmax.xlane.f32.xlu0 %v2188
    %v2190 = vpop.xlane.xlu0 %2189
    %v2191 = vsel %vm645, %v2186, -inf
    %2192 = vmax.xlane.f32.xlu0 %v2191
    %v2193 = vpop.xlane.xlu0 %2192
    %v2194 = vsel %vm645, %v2187, -inf
    %2195 = vmax.xlane.f32.xlu0 %v2194
    %v2196 = vpop.xlane.xlu0 %2195
    %v2197 = vsub.f32 %v2185, %v2190
    %v2198 = vsub.f32 %v2186, %v2193
    %v2199 = vsub.f32 %v2187, %v2196
    %v2200 = vmul.f32 %v2197, 1.442695
    %v2201 = vpow.pop %v2200
    %v2202 = vmul.f32 %v2198, 1.442695
    %v2203 = vpow.pop %v2202
    %v2204 = vmul.f32 %v2199, 1.442695
    %v2205 = vpow.pop %v2204
    %v2206 = vsel %vm645, %v2201, 0.0
    %2207 = vadd.xlane.f32.xlu0 %v2206
    %v2208 = vpop.xlane.xlu0 %2207
    %v2209 = vsel %vm645, %v2203, 0.0
    %2210 = vadd.xlane.f32.xlu0 %v2209
    %v2211 = vpop.xlane.xlu0 %2210
    %v2212 = vsel %vm645, %v2205, 0.0
    %2213 = vadd.xlane.f32.xlu0 %v2212
    %v2214 = vpop.xlane.xlu0 %2213
    %v2215 = vrcp.pop %v2208
    %v2216 = vmul.f32 %v2201, %v2215
    %v2217 = vrcp.pop %v2211
    %v2218 = vmul.f32 %v2203, %v2217
    %v2219 = vrcp.pop %v2214
    %v2220 = vmul.f32 %v2205, %v2219
    %2221 = vrot.lane.b32.xlu0 %v2068, 64
    %v2222 = vpop.permute.xlu0 %2221
    %2223 = vrot.lane.b32.xlu0 %v2073, 64
    %v2224 = vpop.permute.xlu0 %2223
    %2225 = vrot.lane.b32.xlu0 %v2078, 64
    %v2226 = vpop.permute.xlu0 %2225
    %v2231 = vsel %vm645, %v2216, 0
    %v2234 = vsel %vm645, %v2218, 0
    %v2237 = vsel %vm645, %v2220, 0
    %2239 = vmatprep.subr.mxu0 0.0
    %2240 = vmatpush1.msra.mxu0 0.0
    %2241 = vmatprep.subr.mxu0 0.0
    %2242 = vmatpush1.msra.mxu0 0.0
    %2243 = vmatprep.subr.mxu0 0.0
    %2244 = vmatpush1.msra.mxu0 0.0
    %2245 = vmatprep.subr.mxu0 0.0
    %2246 = vmatpush1.msra.mxu0 0.0
    %2247 = vmatprep.subr.mxu0 0.0
    %2248 = vmatpush1.msra.mxu0 0.0
    %2249 = vmatprep.subr.mxu0 0.0
    %2250 = vmatpush1.msra.mxu0 0.0
    %2251 = vmatprep.subr.mxu0 0.0
    %2252 = vmatpush1.msra.mxu0 0.0
    %2253 = vmatprep.subr.mxu0 0.0
    %2254 = vmatpush1.msra.mxu0 0.0
    %2255 = vmatprep.subr.mxu0 0.0
    %2256 = vmatpush1.msra.mxu0 0.0
    %2257 = vmatprep.subr.mxu0 0.0
    %2258 = vmatpush1.msra.mxu0 0.0
    %2259 = vmatprep.subr.mxu0 0.0
    %2260 = vmatpush1.msra.mxu0 0.0
    %2261 = vmatprep.subr.mxu0 0.0
    %2262 = vmatpush1.msra.mxu0 0.0
    %2263 = vmatprep.subr.mxu0 0.0
    %2264 = vmatpush1.msra.mxu0 0.0
    %2265 = vmatprep.subr.mxu0 0.0
    %2266 = vmatpush1.msra.mxu0 %v2226
    %2267 = vmatprep.subr.mxu0 0.0
    %2268 = vmatpush1.msra.mxu0 %v2224
    %2269 = vmatprep.subr.mxu0 0.0
    %2270 = vmatpush1.msra.mxu0 %v2222
    %2271 = vmatprep.subr.mxu0 0.0
    %2272 = vmatpush2.msra.mxu0 0.0
    %2273 = vmatprep.subr.mxu0 0.0
    %2274 = vmatpush2.msra.mxu0 0.0
    %2275 = vmatprep.subr.mxu0 0.0
    %2276 = vmatpush2.msra.mxu0 0.0
    %2277 = vmatprep.subr.mxu0 0.0
    %2278 = vmatpush2.msra.mxu0 0.0
    %2279 = vmatprep.subr.mxu0 0.0
    %2280 = vmatpush2.msra.mxu0 0.0
    %2281 = vmatprep.subr.mxu0 0.0
    %2282 = vmatpush2.msra.mxu0 0.0
    %2283 = vmatprep.subr.mxu0 0.0
    %2284 = vmatpush2.msra.mxu0 0.0
    %2285 = vmatprep.subr.mxu0 0.0
    %2286 = vmatpush2.msra.mxu0 0.0
    %2287 = vmatprep.subr.mxu0 0.0
    %2288 = vmatpush2.msra.mxu0 0.0
    %2289 = vmatprep.subr.mxu0 0.0
    %2290 = vmatpush2.msra.mxu0 0.0
    %2291 = vmatprep.subr.mxu0 0.0
    %2292 = vmatpush2.msra.mxu0 0.0
    %2293 = vmatprep.subr.mxu0 0.0
    %2294 = vmatpush2.msra.mxu0 0.0
    %2295 = vmatprep.subr.mxu0 0.0
    %2296 = vmatpush2.msra.mxu0 0.0
    %2297 = vmatprep.subr.mxu0 0.0
    %2298 = vmatpush2.msra.mxu0 0.0
    %2299 = vmatprep.subr.mxu0 0.0
    %2300 = vmatpush2.msra.mxu0 0.0
    %2301 = vmatprep.subr.mxu0 0.0
    %2302 = vmatpush2.msra.mxu0 0.0
    %2303 = vmatprep.mubr.f32.mxu0 0.0
    %2304 = vmatmul.mubr.f32.gmra.mxu0 %v2231
    %v2305 = vpop.f32.mrf.mxu0
    %v2306 = vadd.f32 0.0, %v2305
    %v2307 = vpop.f32.mrf.mxu0
    %2308 = vmatprep.mubr.f32.mxu0 0.0
    %2309 = vmatmul.mubr.f32.gmra.mxu0 %v2234
    %v2310 = vpop.f32.mrf.mxu0
    %v2311 = vadd.f32 0.0, %v2310
    %v2312 = vpop.f32.mrf.mxu0
    %2313 = vmatprep.mubr.f32.mxu0 0.0
    %2314 = vmatmul.mubr.f32.gmra.mxu0 %v2237
    %v2315 = vpop.f32.mrf.mxu0
    %v2316 = vadd.f32 0.0, %v2315
    %v2317 = vpop.f32.mrf.mxu0
    %2318 = vdwg.mxu0
    %2319 = vrot.lane.b32.xlu0 %v2068, 120
    %v2320 = vpop.permute.xlu0 %2319
    %2321 = vrot.lane.b32.xlu0 %v2073, 120
    %v2322 = vpop.permute.xlu0 %2321
    %2323 = vrot.lane.b32.xlu0 %v2078, 120
    %v2324 = vpop.permute.xlu0 %2323
    %2325 = vrot.lane.b32.xlu0 %v2068, 88
    %v2326 = vpop.permute.xlu0 %2325
    %2327 = vrot.lane.b32.xlu0 %v2073, 88
    %v2328 = vpop.permute.xlu0 %2327
    %2329 = vrot.lane.b32.xlu0 %v2078, 88
    %v2330 = vpop.permute.xlu0 %2329
    %v2331 = vsel %vm546, %v2320, 0
    %v2333 = vsel %vm546, %v2322, 0
    %v2335 = vsel %vm546, %v2324, 0
    %v2337 = vsel %vm546, %v2326, 0
    %v2339 = vsel %vm546, %v2328, 0
    %v2341 = vsel %vm546, %v2330, 0
    %2343 = vmatprep.subr.mxu0 0.0
    %2344 = vmatpush1.xpose.msra.mxu0 0.0
    %2345 = vmatprep.subr.mxu0 0.0
    %2346 = vmatpush1.xpose.msra.mxu0 0.0
    %2347 = vmatprep.subr.mxu0 0.0
    %2348 = vmatpush1.xpose.msra.mxu0 0.0
    %2349 = vmatprep.subr.mxu0 0.0
    %2350 = vmatpush1.xpose.msra.mxu0 0.0
    %2351 = vmatprep.subr.mxu0 0.0
    %2352 = vmatpush1.xpose.msra.mxu0 0.0
    %2353 = vmatprep.subr.mxu0 0.0
    %2354 = vmatpush1.xpose.msra.mxu0 0.0
    %2355 = vmatprep.subr.mxu0 0.0
    %2356 = vmatpush1.xpose.msra.mxu0 0.0
    %2357 = vmatprep.subr.mxu0 0.0
    %2358 = vmatpush1.xpose.msra.mxu0 0.0
    %2359 = vmatprep.subr.mxu0 0.0
    %2360 = vmatpush1.xpose.msra.mxu0 0.0
    %2361 = vmatprep.subr.mxu0 0.0
    %2362 = vmatpush1.xpose.msra.mxu0 0.0
    %2363 = vmatprep.subr.mxu0 0.0
    %2364 = vmatpush1.xpose.msra.mxu0 0.0
    %2365 = vmatprep.subr.mxu0 0.0
    %2366 = vmatpush1.xpose.msra.mxu0 0.0
    %2367 = vmatprep.subr.mxu0 0.0
    %2368 = vmatpush1.xpose.msra.mxu0 0.0
    %2369 = vmatprep.subr.mxu0 0.0
    %2370 = vmatpush1.xpose.msra.mxu0 %v2341
    %2371 = vmatprep.subr.mxu0 0.0
    %2372 = vmatpush1.xpose.msra.mxu0 %v2339
    %2373 = vmatprep.subr.mxu0 0.0
    %2374 = vmatpush1.xpose.msra.mxu0 %v2337
    %2375 = vmatprep.subr.mxu0 0.0
    %2376 = vmatpush2.xpose.msra.mxu0 0.0
    %2377 = vmatprep.subr.mxu0 0.0
    %2378 = vmatpush2.xpose.msra.mxu0 0.0
    %2379 = vmatprep.subr.mxu0 0.0
    %2380 = vmatpush2.xpose.msra.mxu0 0.0
    %2381 = vmatprep.subr.mxu0 0.0
    %2382 = vmatpush2.xpose.msra.mxu0 0.0
    %2383 = vmatprep.subr.mxu0 0.0
    %2384 = vmatpush2.xpose.msra.mxu0 0.0
    %2385 = vmatprep.subr.mxu0 0.0
    %2386 = vmatpush2.xpose.msra.mxu0 0.0
    %2387 = vmatprep.subr.mxu0 0.0
    %2388 = vmatpush2.xpose.msra.mxu0 0.0
    %2389 = vmatprep.subr.mxu0 0.0
    %2390 = vmatpush2.xpose.msra.mxu0 0.0
    %2391 = vmatprep.subr.mxu0 0.0
    %2392 = vmatpush2.xpose.msra.mxu0 0.0
    %2393 = vmatprep.subr.mxu0 0.0
    %2394 = vmatpush2.xpose.msra.mxu0 0.0
    %2395 = vmatprep.subr.mxu0 0.0
    %2396 = vmatpush2.xpose.msra.mxu0 0.0
    %2397 = vmatprep.subr.mxu0 0.0
    %2398 = vmatpush2.xpose.msra.mxu0 0.0
    %2399 = vmatprep.subr.mxu0 0.0
    %2400 = vmatpush2.xpose.msra.mxu0 0.0
    %2401 = vmatprep.subr.mxu0 0.0
    %2402 = vmatpush2.xpose.msra.mxu0 0.0
    %2403 = vmatprep.subr.mxu0 0.0
    %2404 = vmatpush2.xpose.msra.mxu0 0.0
    %2405 = vmatprep.subr.mxu0 0.0
    %2406 = vmatpush2.xpose.msra.mxu0 0.0
    %2407 = vmatprep.mubr.f32.mxu0 0.0
    %2408 = vmatmul.mubr.f32.gmra.mxu0 %v2331
    %v2409 = vpop.f32.mrf.mxu0
    %v2410 = vadd.f32 0.0, %v2409
    %v2411 = vpop.f32.mrf.mxu0
    %2412 = vmatprep.mubr.f32.mxu0 0.0
    %2413 = vmatmul.mubr.f32.gmra.mxu0 %v2333
    %v2414 = vpop.f32.mrf.mxu0
    %v2415 = vadd.f32 0.0, %v2414
    %v2416 = vpop.f32.mrf.mxu0
    %2417 = vmatprep.mubr.f32.mxu0 0.0
    %2418 = vmatmul.mubr.f32.gmra.mxu0 %v2335
    %v2419 = vpop.f32.mrf.mxu0
    %v2420 = vadd.f32 0.0, %v2419
    %v2421 = vpop.f32.mrf.mxu0
    %2422 = vdwg.mxu0
    %v2423 = vmul.f32 %v2410, 0.35355338
    %v2424 = vmul.f32 %v2415, 0.35355338
    %v2425 = vmul.f32 %v2420, 0.35355338
    %v2426 = vadd.f32 %v2423, %v32
    %v2427 = vadd.f32 %v2424, %v33
    %v2428 = vadd.f32 %v2425, %v34
    %v2429 = vsel %vm645, %v2426, -inf
    %2430 = vmax.xlane.f32.xlu0 %v2429
    %v2431 = vpop.xlane.xlu0 %2430
    %v2432 = vsel %vm645, %v2427, -inf
    %2433 = vmax.xlane.f32.xlu0 %v2432
    %v2434 = vpop.xlane.xlu0 %2433
    %v2435 = vsel %vm645, %v2428, -inf
    %2436 = vmax.xlane.f32.xlu0 %v2435
    %v2437 = vpop.xlane.xlu0 %2436
    %v2438 = vsub.f32 %v2426, %v2431
    %v2439 = vsub.f32 %v2427, %v2434
    %v2440 = vsub.f32 %v2428, %v2437
    %v2441 = vmul.f32 %v2438, 1.442695
    %v2442 = vpow.pop %v2441
    %v2443 = vmul.f32 %v2439, 1.442695
    %v2444 = vpow.pop %v2443
    %v2445 = vmul.f32 %v2440, 1.442695
    %v2446 = vpow.pop %v2445
    %v2447 = vsel %vm645, %v2442, 0.0
    %2448 = vadd.xlane.f32.xlu0 %v2447
    %v2449 = vpop.xlane.xlu0 %2448
    %v2450 = vsel %vm645, %v2444, 0.0
    %2451 = vadd.xlane.f32.xlu0 %v2450
    %v2452 = vpop.xlane.xlu0 %2451
    %v2453 = vsel %vm645, %v2446, 0.0
    %2454 = vadd.xlane.f32.xlu0 %v2453
    %v2455 = vpop.xlane.xlu0 %2454
    %v2456 = vrcp.pop %v2449
    %v2457 = vmul.f32 %v2442, %v2456
    %v2458 = vrcp.pop %v2452
    %v2459 = vmul.f32 %v2444, %v2458
    %v2460 = vrcp.pop %v2455
    %v2461 = vmul.f32 %v2446, %v2460
    %2462 = vrot.lane.b32.xlu0 %v2068, 56
    %v2463 = vpop.permute.xlu0 %2462
    %2464 = vrot.lane.b32.xlu0 %v2073, 56
    %v2465 = vpop.permute.xlu0 %2464
    %2466 = vrot.lane.b32.xlu0 %v2078, 56
    %v2467 = vpop.permute.xlu0 %2466
    %v2472 = vsel %vm645, %v2457, 0
    %v2475 = vsel %vm645, %v2459, 0
    %v2478 = vsel %vm645, %v2461, 0
    %2480 = vmatprep.subr.mxu0 0.0
    %2481 = vmatpush1.msra.mxu0 0.0
    %2482 = vmatprep.subr.mxu0 0.0
    %2483 = vmatpush1.msra.mxu0 0.0
    %2484 = vmatprep.subr.mxu0 0.0
    %2485 = vmatpush1.msra.mxu0 0.0
    %2486 = vmatprep.subr.mxu0 0.0
    %2487 = vmatpush1.msra.mxu0 0.0
    %2488 = vmatprep.subr.mxu0 0.0
    %2489 = vmatpush1.msra.mxu0 0.0
    %2490 = vmatprep.subr.mxu0 0.0
    %2491 = vmatpush1.msra.mxu0 0.0
    %2492 = vmatprep.subr.mxu0 0.0
    %2493 = vmatpush1.msra.mxu0 0.0
    %2494 = vmatprep.subr.mxu0 0.0
    %2495 = vmatpush1.msra.mxu0 0.0
    %2496 = vmatprep.subr.mxu0 0.0
    %2497 = vmatpush1.msra.mxu0 0.0
    %2498 = vmatprep.subr.mxu0 0.0
    %2499 = vmatpush1.msra.mxu0 0.0
    %2500 = vmatprep.subr.mxu0 0.0
    %2501 = vmatpush1.msra.mxu0 0.0
    %2502 = vmatprep.subr.mxu0 0.0
    %2503 = vmatpush1.msra.mxu0 0.0
    %2504 = vmatprep.subr.mxu0 0.0
    %2505 = vmatpush1.msra.mxu0 0.0
    %2506 = vmatprep.subr.mxu0 0.0
    %2507 = vmatpush1.msra.mxu0 %v2467
    %2508 = vmatprep.subr.mxu0 0.0
    %2509 = vmatpush1.msra.mxu0 %v2465
    %2510 = vmatprep.subr.mxu0 0.0
    %2511 = vmatpush1.msra.mxu0 %v2463
    %2512 = vmatprep.subr.mxu0 0.0
    %2513 = vmatpush2.msra.mxu0 0.0
    %2514 = vmatprep.subr.mxu0 0.0
    %2515 = vmatpush2.msra.mxu0 0.0
    %2516 = vmatprep.subr.mxu0 0.0
    %2517 = vmatpush2.msra.mxu0 0.0
    %2518 = vmatprep.subr.mxu0 0.0
    %2519 = vmatpush2.msra.mxu0 0.0
    %2520 = vmatprep.subr.mxu0 0.0
    %2521 = vmatpush2.msra.mxu0 0.0
    %2522 = vmatprep.subr.mxu0 0.0
    %2523 = vmatpush2.msra.mxu0 0.0
    %2524 = vmatprep.subr.mxu0 0.0
    %2525 = vmatpush2.msra.mxu0 0.0
    %2526 = vmatprep.subr.mxu0 0.0
    %2527 = vmatpush2.msra.mxu0 0.0
    %2528 = vmatprep.subr.mxu0 0.0
    %2529 = vmatpush2.msra.mxu0 0.0
    %2530 = vmatprep.subr.mxu0 0.0
    %2531 = vmatpush2.msra.mxu0 0.0
    %2532 = vmatprep.subr.mxu0 0.0
    %2533 = vmatpush2.msra.mxu0 0.0
    %2534 = vmatprep.subr.mxu0 0.0
    %2535 = vmatpush2.msra.mxu0 0.0
    %2536 = vmatprep.subr.mxu0 0.0
    %2537 = vmatpush2.msra.mxu0 0.0
    %2538 = vmatprep.subr.mxu0 0.0
    %2539 = vmatpush2.msra.mxu0 0.0
    %2540 = vmatprep.subr.mxu0 0.0
    %2541 = vmatpush2.msra.mxu0 0.0
    %2542 = vmatprep.subr.mxu0 0.0
    %2543 = vmatpush2.msra.mxu0 0.0
    %2544 = vmatprep.mubr.f32.mxu0 0.0
    %2545 = vmatmul.mubr.f32.gmra.mxu0 %v2472
    %v2546 = vpop.f32.mrf.mxu0
    %v2547 = vadd.f32 0.0, %v2546
    %v2548 = vpop.f32.mrf.mxu0
    %2549 = vmatprep.mubr.f32.mxu0 0.0
    %2550 = vmatmul.mubr.f32.gmra.mxu0 %v2475
    %v2551 = vpop.f32.mrf.mxu0
    %v2552 = vadd.f32 0.0, %v2551
    %v2553 = vpop.f32.mrf.mxu0
    %2554 = vmatprep.mubr.f32.mxu0 0.0
    %2555 = vmatmul.mubr.f32.gmra.mxu0 %v2478
    %v2556 = vpop.f32.mrf.mxu0
    %v2557 = vadd.f32 0.0, %v2556
    %v2558 = vpop.f32.mrf.mxu0
    %2559 = vdwg.mxu0
    %2560 = vrot.lane.b32.xlu0 %v2068, 112
    %v2561 = vpop.permute.xlu0 %2560
    %2562 = vrot.lane.b32.xlu0 %v2073, 112
    %v2563 = vpop.permute.xlu0 %2562
    %2564 = vrot.lane.b32.xlu0 %v2078, 112
    %v2565 = vpop.permute.xlu0 %2564
    %2566 = vrot.lane.b32.xlu0 %v2068, 80
    %v2567 = vpop.permute.xlu0 %2566
    %2568 = vrot.lane.b32.xlu0 %v2073, 80
    %v2569 = vpop.permute.xlu0 %2568
    %2570 = vrot.lane.b32.xlu0 %v2078, 80
    %v2571 = vpop.permute.xlu0 %2570
    %v2572 = vsel %vm546, %v2561, 0
    %v2574 = vsel %vm546, %v2563, 0
    %v2576 = vsel %vm546, %v2565, 0
    %v2578 = vsel %vm546, %v2567, 0
    %v2580 = vsel %vm546, %v2569, 0
    %v2582 = vsel %vm546, %v2571, 0
    %2584 = vmatprep.subr.mxu0 0.0
    %2585 = vmatpush1.xpose.msra.mxu0 0.0
    %2586 = vmatprep.subr.mxu0 0.0
    %2587 = vmatpush1.xpose.msra.mxu0 0.0
    %2588 = vmatprep.subr.mxu0 0.0
    %2589 = vmatpush1.xpose.msra.mxu0 0.0
    %2590 = vmatprep.subr.mxu0 0.0
    %2591 = vmatpush1.xpose.msra.mxu0 0.0
    %2592 = vmatprep.subr.mxu0 0.0
    %2593 = vmatpush1.xpose.msra.mxu0 0.0
    %2594 = vmatprep.subr.mxu0 0.0
    %2595 = vmatpush1.xpose.msra.mxu0 0.0
    %2596 = vmatprep.subr.mxu0 0.0
    %2597 = vmatpush1.xpose.msra.mxu0 0.0
    %2598 = vmatprep.subr.mxu0 0.0
    %2599 = vmatpush1.xpose.msra.mxu0 0.0
    %2600 = vmatprep.subr.mxu0 0.0
    %2601 = vmatpush1.xpose.msra.mxu0 0.0
    %2602 = vmatprep.subr.mxu0 0.0
    %2603 = vmatpush1.xpose.msra.mxu0 0.0
    %2604 = vmatprep.subr.mxu0 0.0
    %2605 = vmatpush1.xpose.msra.mxu0 0.0
    %2606 = vmatprep.subr.mxu0 0.0
    %2607 = vmatpush1.xpose.msra.mxu0 0.0
    %2608 = vmatprep.subr.mxu0 0.0
    %2609 = vmatpush1.xpose.msra.mxu0 0.0
    %2610 = vmatprep.subr.mxu0 0.0
    %2611 = vmatpush1.xpose.msra.mxu0 %v2582
    %2612 = vmatprep.subr.mxu0 0.0
    %2613 = vmatpush1.xpose.msra.mxu0 %v2580
    %2614 = vmatprep.subr.mxu0 0.0
    %2615 = vmatpush1.xpose.msra.mxu0 %v2578
    %2616 = vmatprep.subr.mxu0 0.0
    %2617 = vmatpush2.xpose.msra.mxu0 0.0
    %2618 = vmatprep.subr.mxu0 0.0
    %2619 = vmatpush2.xpose.msra.mxu0 0.0
    %2620 = vmatprep.subr.mxu0 0.0
    %2621 = vmatpush2.xpose.msra.mxu0 0.0
    %2622 = vmatprep.subr.mxu0 0.0
    %2623 = vmatpush2.xpose.msra.mxu0 0.0
    %2624 = vmatprep.subr.mxu0 0.0
    %2625 = vmatpush2.xpose.msra.mxu0 0.0
    %2626 = vmatprep.subr.mxu0 0.0
    %2627 = vmatpush2.xpose.msra.mxu0 0.0
    %2628 = vmatprep.subr.mxu0 0.0
    %2629 = vmatpush2.xpose.msra.mxu0 0.0
    %2630 = vmatprep.subr.mxu0 0.0
    %2631 = vmatpush2.xpose.msra.mxu0 0.0
    %2632 = vmatprep.subr.mxu0 0.0
    %2633 = vmatpush2.xpose.msra.mxu0 0.0
    %2634 = vmatprep.subr.mxu0 0.0
    %2635 = vmatpush2.xpose.msra.mxu0 0.0
    %2636 = vmatprep.subr.mxu0 0.0
    %2637 = vmatpush2.xpose.msra.mxu0 0.0
    %2638 = vmatprep.subr.mxu0 0.0
    %2639 = vmatpush2.xpose.msra.mxu0 0.0
    %2640 = vmatprep.subr.mxu0 0.0
    %2641 = vmatpush2.xpose.msra.mxu0 0.0
    %2642 = vmatprep.subr.mxu0 0.0
    %2643 = vmatpush2.xpose.msra.mxu0 0.0
    %2644 = vmatprep.subr.mxu0 0.0
    %2645 = vmatpush2.xpose.msra.mxu0 0.0
    %2646 = vmatprep.subr.mxu0 0.0
    %2647 = vmatpush2.xpose.msra.mxu0 0.0
    %2648 = vmatprep.mubr.f32.mxu0 0.0
    %2649 = vmatmul.mubr.f32.gmra.mxu0 %v2572
    %v2650 = vpop.f32.mrf.mxu0
    %v2651 = vadd.f32 0.0, %v2650
    %v2652 = vpop.f32.mrf.mxu0
    %2653 = vmatprep.mubr.f32.mxu0 0.0
    %2654 = vmatmul.mubr.f32.gmra.mxu0 %v2574
    %v2655 = vpop.f32.mrf.mxu0
    %v2656 = vadd.f32 0.0, %v2655
    %v2657 = vpop.f32.mrf.mxu0
    %2658 = vmatprep.mubr.f32.mxu0 0.0
    %2659 = vmatmul.mubr.f32.gmra.mxu0 %v2576
    %v2660 = vpop.f32.mrf.mxu0
    %v2661 = vadd.f32 0.0, %v2660
    %v2662 = vpop.f32.mrf.mxu0
    %2663 = vdwg.mxu0
    %v2664 = vmul.f32 %v2651, 0.35355338
    %v2665 = vmul.f32 %v2656, 0.35355338
    %v2666 = vmul.f32 %v2661, 0.35355338
    %v2667 = vadd.f32 %v2664, %v32
    %v2668 = vadd.f32 %v2665, %v33
    %v2669 = vadd.f32 %v2666, %v34
    %v2670 = vsel %vm645, %v2667, -inf
    %2671 = vmax.xlane.f32.xlu0 %v2670
    %v2672 = vpop.xlane.xlu0 %2671
    %v2673 = vsel %vm645, %v2668, -inf
    %2674 = vmax.xlane.f32.xlu0 %v2673
    %v2675 = vpop.xlane.xlu0 %2674
    %v2676 = vsel %vm645, %v2669, -inf
    %2677 = vmax.xlane.f32.xlu0 %v2676
    %v2678 = vpop.xlane.xlu0 %2677
    %v2679 = vsub.f32 %v2667, %v2672
    %v2680 = vsub.f32 %v2668, %v2675
    %v2681 = vsub.f32 %v2669, %v2678
    %v2682 = vmul.f32 %v2679, 1.442695
    %v2683 = vpow.pop %v2682
    %v2684 = vmul.f32 %v2680, 1.442695
    %v2685 = vpow.pop %v2684
    %v2686 = vmul.f32 %v2681, 1.442695
    %v2687 = vpow.pop %v2686
    %v2688 = vsel %vm645, %v2683, 0.0
    %2689 = vadd.xlane.f32.xlu0 %v2688
    %v2690 = vpop.xlane.xlu0 %2689
    %v2691 = vsel %vm645, %v2685, 0.0
    %2692 = vadd.xlane.f32.xlu0 %v2691
    %v2693 = vpop.xlane.xlu0 %2692
    %v2694 = vsel %vm645, %v2687, 0.0
    %2695 = vadd.xlane.f32.xlu0 %v2694
    %v2696 = vpop.xlane.xlu0 %2695
    %v2697 = vrcp.pop %v2690
    %v2698 = vmul.f32 %v2683, %v2697
    %v2699 = vrcp.pop %v2693
    %v2700 = vmul.f32 %v2685, %v2699
    %v2701 = vrcp.pop %v2696
    %v2702 = vmul.f32 %v2687, %v2701
    %2703 = vrot.lane.b32.xlu0 %v2068, 48
    %v2704 = vpop.permute.xlu0 %2703
    %2705 = vrot.lane.b32.xlu0 %v2073, 48
    %v2706 = vpop.permute.xlu0 %2705
    %2707 = vrot.lane.b32.xlu0 %v2078, 48
    %v2708 = vpop.permute.xlu0 %2707
    %v2713 = vsel %vm645, %v2698, 0
    %v2716 = vsel %vm645, %v2700, 0
    %v2719 = vsel %vm645, %v2702, 0
    %2721 = vmatprep.subr.mxu0 0.0
    %2722 = vmatpush1.msra.mxu0 0.0
    %2723 = vmatprep.subr.mxu0 0.0
    %2724 = vmatpush1.msra.mxu0 0.0
    %2725 = vmatprep.subr.mxu0 0.0
    %2726 = vmatpush1.msra.mxu0 0.0
    %2727 = vmatprep.subr.mxu0 0.0
    %2728 = vmatpush1.msra.mxu0 0.0
    %2729 = vmatprep.subr.mxu0 0.0
    %2730 = vmatpush1.msra.mxu0 0.0
    %2731 = vmatprep.subr.mxu0 0.0
    %2732 = vmatpush1.msra.mxu0 0.0
    %2733 = vmatprep.subr.mxu0 0.0
    %2734 = vmatpush1.msra.mxu0 0.0
    %2735 = vmatprep.subr.mxu0 0.0
    %2736 = vmatpush1.msra.mxu0 0.0
    %2737 = vmatprep.subr.mxu0 0.0
    %2738 = vmatpush1.msra.mxu0 0.0
    %2739 = vmatprep.subr.mxu0 0.0
    %2740 = vmatpush1.msra.mxu0 0.0
    %2741 = vmatprep.subr.mxu0 0.0
    %2742 = vmatpush1.msra.mxu0 0.0
    %2743 = vmatprep.subr.mxu0 0.0
    %2744 = vmatpush1.msra.mxu0 0.0
    %2745 = vmatprep.subr.mxu0 0.0
    %2746 = vmatpush1.msra.mxu0 0.0
    %2747 = vmatprep.subr.mxu0 0.0
    %2748 = vmatpush1.msra.mxu0 %v2708
    %2749 = vmatprep.subr.mxu0 0.0
    %2750 = vmatpush1.msra.mxu0 %v2706
    %2751 = vmatprep.subr.mxu0 0.0
    %2752 = vmatpush1.msra.mxu0 %v2704
    %2753 = vmatprep.subr.mxu0 0.0
    %2754 = vmatpush2.msra.mxu0 0.0
    %2755 = vmatprep.subr.mxu0 0.0
    %2756 = vmatpush2.msra.mxu0 0.0
    %2757 = vmatprep.subr.mxu0 0.0
    %2758 = vmatpush2.msra.mxu0 0.0
    %2759 = vmatprep.subr.mxu0 0.0
    %2760 = vmatpush2.msra.mxu0 0.0
    %2761 = vmatprep.subr.mxu0 0.0
    %2762 = vmatpush2.msra.mxu0 0.0
    %2763 = vmatprep.subr.mxu0 0.0
    %2764 = vmatpush2.msra.mxu0 0.0
    %2765 = vmatprep.subr.mxu0 0.0
    %2766 = vmatpush2.msra.mxu0 0.0
    %2767 = vmatprep.subr.mxu0 0.0
    %2768 = vmatpush2.msra.mxu0 0.0
    %2769 = vmatprep.subr.mxu0 0.0
    %2770 = vmatpush2.msra.mxu0 0.0
    %2771 = vmatprep.subr.mxu0 0.0
    %2772 = vmatpush2.msra.mxu0 0.0
    %2773 = vmatprep.subr.mxu0 0.0
    %2774 = vmatpush2.msra.mxu0 0.0
    %2775 = vmatprep.subr.mxu0 0.0
    %2776 = vmatpush2.msra.mxu0 0.0
    %2777 = vmatprep.subr.mxu0 0.0
    %2778 = vmatpush2.msra.mxu0 0.0
    %2779 = vmatprep.subr.mxu0 0.0
    %2780 = vmatpush2.msra.mxu0 0.0
    %2781 = vmatprep.subr.mxu0 0.0
    %2782 = vmatpush2.msra.mxu0 0.0
    %2783 = vmatprep.subr.mxu0 0.0
    %2784 = vmatpush2.msra.mxu0 0.0
    %2785 = vmatprep.mubr.f32.mxu0 0.0
    %2786 = vmatmul.mubr.f32.gmra.mxu0 %v2713
    %v2787 = vpop.f32.mrf.mxu0
    %v2788 = vadd.f32 0.0, %v2787
    %v2789 = vpop.f32.mrf.mxu0
    %2790 = vmatprep.mubr.f32.mxu0 0.0
    %2791 = vmatmul.mubr.f32.gmra.mxu0 %v2716
    %v2792 = vpop.f32.mrf.mxu0
    %v2793 = vadd.f32 0.0, %v2792
    %v2794 = vpop.f32.mrf.mxu0
    %2795 = vmatprep.mubr.f32.mxu0 0.0
    %2796 = vmatmul.mubr.f32.gmra.mxu0 %v2719
    %v2797 = vpop.f32.mrf.mxu0
    %v2798 = vadd.f32 0.0, %v2797
    %v2799 = vpop.f32.mrf.mxu0
    %2800 = vdwg.mxu0
    %2801 = vrot.lane.b32.xlu0 %v2068, 104
    %v2802 = vpop.permute.xlu0 %2801
    %2803 = vrot.lane.b32.xlu0 %v2073, 104
    %v2804 = vpop.permute.xlu0 %2803
    %2805 = vrot.lane.b32.xlu0 %v2078, 104
    %v2806 = vpop.permute.xlu0 %2805
    %2807 = vrot.lane.b32.xlu0 %v2068, 72
    %v2808 = vpop.permute.xlu0 %2807
    %2809 = vrot.lane.b32.xlu0 %v2073, 72
    %v2810 = vpop.permute.xlu0 %2809
    %2811 = vrot.lane.b32.xlu0 %v2078, 72
    %v2812 = vpop.permute.xlu0 %2811
    %v2813 = vsel %vm546, %v2802, 0
    %v2815 = vsel %vm546, %v2804, 0
    %v2817 = vsel %vm546, %v2806, 0
    %v2819 = vsel %vm546, %v2808, 0
    %v2821 = vsel %vm546, %v2810, 0
    %v2823 = vsel %vm546, %v2812, 0
    %2825 = vmatprep.subr.mxu0 0.0
    %2826 = vmatpush1.xpose.msra.mxu0 0.0
    %2827 = vmatprep.subr.mxu0 0.0
    %2828 = vmatpush1.xpose.msra.mxu0 0.0
    %2829 = vmatprep.subr.mxu0 0.0
    %2830 = vmatpush1.xpose.msra.mxu0 0.0
    %2831 = vmatprep.subr.mxu0 0.0
    %2832 = vmatpush1.xpose.msra.mxu0 0.0
    %2833 = vmatprep.subr.mxu0 0.0
    %2834 = vmatpush1.xpose.msra.mxu0 0.0
    %2835 = vmatprep.subr.mxu0 0.0
    %2836 = vmatpush1.xpose.msra.mxu0 0.0
    %2837 = vmatprep.subr.mxu0 0.0
    %2838 = vmatpush1.xpose.msra.mxu0 0.0
    %2839 = vmatprep.subr.mxu0 0.0
    %2840 = vmatpush1.xpose.msra.mxu0 0.0
    %2841 = vmatprep.subr.mxu0 0.0
    %2842 = vmatpush1.xpose.msra.mxu0 0.0
    %2843 = vmatprep.subr.mxu0 0.0
    %2844 = vmatpush1.xpose.msra.mxu0 0.0
    %2845 = vmatprep.subr.mxu0 0.0
    %2846 = vmatpush1.xpose.msra.mxu0 0.0
    %2847 = vmatprep.subr.mxu0 0.0
    %2848 = vmatpush1.xpose.msra.mxu0 0.0
    %2849 = vmatprep.subr.mxu0 0.0
    %2850 = vmatpush1.xpose.msra.mxu0 0.0
    %2851 = vmatprep.subr.mxu0 0.0
    %2852 = vmatpush1.xpose.msra.mxu0 %v2823
    %2853 = vmatprep.subr.mxu0 0.0
    %2854 = vmatpush1.xpose.msra.mxu0 %v2821
    %2855 = vmatprep.subr.mxu0 0.0
    %2856 = vmatpush1.xpose.msra.mxu0 %v2819
    %2857 = vmatprep.subr.mxu0 0.0
    %2858 = vmatpush2.xpose.msra.mxu0 0.0
    %2859 = vmatprep.subr.mxu0 0.0
    %2860 = vmatpush2.xpose.msra.mxu0 0.0
    %2861 = vmatprep.subr.mxu0 0.0
    %2862 = vmatpush2.xpose.msra.mxu0 0.0
    %2863 = vmatprep.subr.mxu0 0.0
    %2864 = vmatpush2.xpose.msra.mxu0 0.0
    %2865 = vmatprep.subr.mxu0 0.0
    %2866 = vmatpush2.xpose.msra.mxu0 0.0
    %2867 = vmatprep.subr.mxu0 0.0
    %2868 = vmatpush2.xpose.msra.mxu0 0.0
    %2869 = vmatprep.subr.mxu0 0.0
    %2870 = vmatpush2.xpose.msra.mxu0 0.0
    %2871 = vmatprep.subr.mxu0 0.0
    %2872 = vmatpush2.xpose.msra.mxu0 0.0
    %2873 = vmatprep.subr.mxu0 0.0
    %2874 = vmatpush2.xpose.msra.mxu0 0.0
    %2875 = vmatprep.subr.mxu0 0.0
    %2876 = vmatpush2.xpose.msra.mxu0 0.0
    %2877 = vmatprep.subr.mxu0 0.0
    %2878 = vmatpush2.xpose.msra.mxu0 0.0
    %2879 = vmatprep.subr.mxu0 0.0
    %2880 = vmatpush2.xpose.msra.mxu0 0.0
    %2881 = vmatprep.subr.mxu0 0.0
    %2882 = vmatpush2.xpose.msra.mxu0 0.0
    %2883 = vmatprep.subr.mxu0 0.0
    %2884 = vmatpush2.xpose.msra.mxu0 0.0
    %2885 = vmatprep.subr.mxu0 0.0
    %2886 = vmatpush2.xpose.msra.mxu0 0.0
    %2887 = vmatprep.subr.mxu0 0.0
    %2888 = vmatpush2.xpose.msra.mxu0 0.0
    %2889 = vmatprep.mubr.f32.mxu0 0.0
    %2890 = vmatmul.mubr.f32.gmra.mxu0 %v2813
    %v2891 = vpop.f32.mrf.mxu0
    %v2892 = vadd.f32 0.0, %v2891
    %v2893 = vpop.f32.mrf.mxu0
    %2894 = vmatprep.mubr.f32.mxu0 0.0
    %2895 = vmatmul.mubr.f32.gmra.mxu0 %v2815
    %v2896 = vpop.f32.mrf.mxu0
    %v2897 = vadd.f32 0.0, %v2896
    %v2898 = vpop.f32.mrf.mxu0
    %2899 = vmatprep.mubr.f32.mxu0 0.0
    %2900 = vmatmul.mubr.f32.gmra.mxu0 %v2817
    %v2901 = vpop.f32.mrf.mxu0
    %v2902 = vadd.f32 0.0, %v2901
    %v2903 = vpop.f32.mrf.mxu0
    %2904 = vdwg.mxu0
    %v2905 = vmul.f32 %v2892, 0.35355338
    %v2906 = vmul.f32 %v2897, 0.35355338
    %v2907 = vmul.f32 %v2902, 0.35355338
    %v2908 = vadd.f32 %v2905, %v32
    %v2909 = vadd.f32 %v2906, %v33
    %v2910 = vadd.f32 %v2907, %v34
    %v2911 = vsel %vm645, %v2908, -inf
    %2912 = vmax.xlane.f32.xlu0 %v2911
    %v2913 = vpop.xlane.xlu0 %2912
    %v2914 = vsel %vm645, %v2909, -inf
    %2915 = vmax.xlane.f32.xlu0 %v2914
    %v2916 = vpop.xlane.xlu0 %2915
    %v2917 = vsel %vm645, %v2910, -inf
    %2918 = vmax.xlane.f32.xlu0 %v2917
    %v2919 = vpop.xlane.xlu0 %2918
    %v2920 = vsub.f32 %v2908, %v2913
    %v2921 = vsub.f32 %v2909, %v2916
    %v2922 = vsub.f32 %v2910, %v2919
    %v2923 = vmul.f32 %v2920, 1.442695
    %v2924 = vpow.pop %v2923
    %v2925 = vmul.f32 %v2921, 1.442695
    %v2926 = vpow.pop %v2925
    %v2927 = vmul.f32 %v2922, 1.442695
    %v2928 = vpow.pop %v2927
    %v2929 = vsel %vm645, %v2924, 0.0
    %2930 = vadd.xlane.f32.xlu0 %v2929
    %v2931 = vpop.xlane.xlu0 %2930
    %v2932 = vsel %vm645, %v2926, 0.0
    %2933 = vadd.xlane.f32.xlu0 %v2932
    %v2934 = vpop.xlane.xlu0 %2933
    %v2935 = vsel %vm645, %v2928, 0.0
    %2936 = vadd.xlane.f32.xlu0 %v2935
    %v2937 = vpop.xlane.xlu0 %2936
    %v2938 = vrcp.pop %v2931
    %v2939 = vmul.f32 %v2924, %v2938
    %v2940 = vrcp.pop %v2934
    %v2941 = vmul.f32 %v2926, %v2940
    %v2942 = vrcp.pop %v2937
    %v2943 = vmul.f32 %v2928, %v2942
    %2944 = vrot.lane.b32.xlu0 %v2068, 40
    %v2945 = vpop.permute.xlu0 %2944
    %2946 = vrot.lane.b32.xlu0 %v2073, 40
    %v2947 = vpop.permute.xlu0 %2946
    %2948 = vrot.lane.b32.xlu0 %v2078, 40
    %v2949 = vpop.permute.xlu0 %2948
    %v2954 = vsel %vm645, %v2939, 0
    %v2957 = vsel %vm645, %v2941, 0
    %v2960 = vsel %vm645, %v2943, 0
    %2962 = vmatprep.subr.mxu0 0.0
    %2963 = vmatpush1.msra.mxu0 0.0
    %2964 = vmatprep.subr.mxu0 0.0
    %2965 = vmatpush1.msra.mxu0 0.0
    %2966 = vmatprep.subr.mxu0 0.0
    %2967 = vmatpush1.msra.mxu0 0.0
    %2968 = vmatprep.subr.mxu0 0.0
    %2969 = vmatpush1.msra.mxu0 0.0
    %2970 = vmatprep.subr.mxu0 0.0
    %2971 = vmatpush1.msra.mxu0 0.0
    %2972 = vmatprep.subr.mxu0 0.0
    %2973 = vmatpush1.msra.mxu0 0.0
    %2974 = vmatprep.subr.mxu0 0.0
    %2975 = vmatpush1.msra.mxu0 0.0
    %2976 = vmatprep.subr.mxu0 0.0
    %2977 = vmatpush1.msra.mxu0 0.0
    %2978 = vmatprep.subr.mxu0 0.0
    %2979 = vmatpush1.msra.mxu0 0.0
    %2980 = vmatprep.subr.mxu0 0.0
    %2981 = vmatpush1.msra.mxu0 0.0
    %2982 = vmatprep.subr.mxu0 0.0
    %2983 = vmatpush1.msra.mxu0 0.0
    %2984 = vmatprep.subr.mxu0 0.0
    %2985 = vmatpush1.msra.mxu0 0.0
    %2986 = vmatprep.subr.mxu0 0.0
    %2987 = vmatpush1.msra.mxu0 0.0
    %2988 = vmatprep.subr.mxu0 0.0
    %2989 = vmatpush1.msra.mxu0 %v2949
    %2990 = vmatprep.subr.mxu0 0.0
    %2991 = vmatpush1.msra.mxu0 %v2947
    %2992 = vmatprep.subr.mxu0 0.0
    %2993 = vmatpush1.msra.mxu0 %v2945
    %2994 = vmatprep.subr.mxu0 0.0
    %2995 = vmatpush2.msra.mxu0 0.0
    %2996 = vmatprep.subr.mxu0 0.0
    %2997 = vmatpush2.msra.mxu0 0.0
    %2998 = vmatprep.subr.mxu0 0.0
    %2999 = vmatpush2.msra.mxu0 0.0
    %3000 = vmatprep.subr.mxu0 0.0
    %3001 = vmatpush2.msra.mxu0 0.0
    %3002 = vmatprep.subr.mxu0 0.0
    %3003 = vmatpush2.msra.mxu0 0.0
    %3004 = vmatprep.subr.mxu0 0.0
    %3005 = vmatpush2.msra.mxu0 0.0
    %3006 = vmatprep.subr.mxu0 0.0
    %3007 = vmatpush2.msra.mxu0 0.0
    %3008 = vmatprep.subr.mxu0 0.0
    %3009 = vmatpush2.msra.mxu0 0.0
    %3010 = vmatprep.subr.mxu0 0.0
    %3011 = vmatpush2.msra.mxu0 0.0
    %3012 = vmatprep.subr.mxu0 0.0
    %3013 = vmatpush2.msra.mxu0 0.0
    %3014 = vmatprep.subr.mxu0 0.0
    %3015 = vmatpush2.msra.mxu0 0.0
    %3016 = vmatprep.subr.mxu0 0.0
    %3017 = vmatpush2.msra.mxu0 0.0
    %3018 = vmatprep.subr.mxu0 0.0
    %3019 = vmatpush2.msra.mxu0 0.0
    %3020 = vmatprep.subr.mxu0 0.0
    %3021 = vmatpush2.msra.mxu0 0.0
    %3022 = vmatprep.subr.mxu0 0.0
    %3023 = vmatpush2.msra.mxu0 0.0
    %3024 = vmatprep.subr.mxu0 0.0
    %3025 = vmatpush2.msra.mxu0 0.0
    %3026 = vmatprep.mubr.f32.mxu0 0.0
    %3027 = vmatmul.mubr.f32.gmra.mxu0 %v2954
    %v3028 = vpop.f32.mrf.mxu0
    %v3029 = vadd.f32 0.0, %v3028
    %v3030 = vpop.f32.mrf.mxu0
    %3031 = vmatprep.mubr.f32.mxu0 0.0
    %3032 = vmatmul.mubr.f32.gmra.mxu0 %v2957
    %v3033 = vpop.f32.mrf.mxu0
    %v3034 = vadd.f32 0.0, %v3033
    %v3035 = vpop.f32.mrf.mxu0
    %3036 = vmatprep.mubr.f32.mxu0 0.0
    %3037 = vmatmul.mubr.f32.gmra.mxu0 %v2960
    %v3038 = vpop.f32.mrf.mxu0
    %v3039 = vadd.f32 0.0, %v3038
    %v3040 = vpop.f32.mrf.mxu0
    %3041 = vdwg.mxu0
    %3045 = vrot.lane.b32.xlu0 %v2547, 8
    %v3046 = vpop.permute.xlu0 %3045
    %3047 = vrot.lane.b32.xlu0 %v2552, 8
    %v3048 = vpop.permute.xlu0 %3047
    %3049 = vrot.lane.b32.xlu0 %v2557, 8
    %v3050 = vpop.permute.xlu0 %3049
    %3057 = vrot.lane.b32.xlu0 %v2788, 16
    %v3058 = vpop.permute.xlu0 %3057
    %3059 = vrot.lane.b32.xlu0 %v2793, 16
    %v3060 = vpop.permute.xlu0 %3059
    %3061 = vrot.lane.b32.xlu0 %v2798, 16
    %v3062 = vpop.permute.xlu0 %3061
    %3069 = vrot.lane.b32.xlu0 %v3029, 24
    %v3070 = vpop.permute.xlu0 %3069
    %3071 = vrot.lane.b32.xlu0 %v3034, 24
    %v3072 = vpop.permute.xlu0 %3071
    %3073 = vrot.lane.b32.xlu0 %v3039, 24
    %v3074 = vpop.permute.xlu0 %3073
    %v3078 = vsel %vm546, %v2306, %v3046
    %v3079 = vsel %vm546, %v2311, %v3048
    %v3080 = vsel %vm546, %v2316, %v3050
    %v3081 = vsel %vm1539, %v3078, %v3058
    %v3082 = vsel %vm1539, %v3079, %v3060
    %v3083 = vsel %vm1539, %v3080, %v3062
    %v3084 = vsel %vm645, %v3081, %v3070
    %v3085 = vsel %vm645, %v3082, %v3072
    %v3086 = vsel %vm645, %v3083, %v3074
    %v3087 = vlaneseq
    %v3088 = vshrl.u32 %v3087, 7
    %v3089 = vsub.s32 1, %v3088
    %v3090 = vrot.slane %v1987, %v3089
    %v3092 = vsel %vm43, %v3084, 0
    %v3095 = vsel %vm43, %v3085, 0
    %v3098 = vsel %vm43, %v3086, 0
    %3100 = vmatprep.subr.mxu0 0.0
    %3101 = vmatpush1.msra.mxu0 0.0
    %3102 = vmatprep.subr.mxu0 0.0
    %3103 = vmatpush1.msra.mxu0 0.0
    %3104 = vmatprep.subr.mxu0 0.0
    %3105 = vmatpush1.msra.mxu0 0.0
    %3106 = vmatprep.subr.mxu0 0.0
    %3107 = vmatpush1.msra.mxu0 0.0
    %3108 = vmatprep.subr.mxu0 0.0
    %3109 = vmatpush1.msra.mxu0 0.0
    %3110 = vmatprep.subr.mxu0 0.0
    %3111 = vmatpush1.msra.mxu0 0.0
    %3112 = vmatprep.subr.mxu0 0.0
    %3113 = vmatpush1.msra.mxu0 0.0
    %3114 = vmatprep.subr.mxu0 0.0
    %3115 = vmatpush1.msra.mxu0 0.0
    %3116 = vmatprep.subr.mxu0 0.0
    %3117 = vmatpush1.msra.mxu0 0.0
    %3118 = vmatprep.subr.mxu0 0.0
    %3119 = vmatpush1.msra.mxu0 0.0
    %3120 = vmatprep.subr.mxu0 0.0
    %3121 = vmatpush1.msra.mxu0 0.0
    %3122 = vmatprep.subr.mxu0 0.0
    %3123 = vmatpush1.msra.mxu0 0.0
    %3124 = vmatprep.subr.mxu0 0.0
    %3125 = vmatpush1.msra.mxu0 %v1973
    %3126 = vmatprep.subr.mxu0 0.0
    %3127 = vmatpush1.msra.mxu0 %v1972
    %3128 = vmatprep.subr.mxu0 0.0
    %3129 = vmatpush1.msra.mxu0 %v1971
    %3130 = vmatprep.subr.mxu0 0.0
    %3131 = vmatpush1.msra.mxu0 %v1970
    %3132 = vmatprep.subr.mxu0 0.0
    %3133 = vmatpush2.msra.mxu0 0.0
    %3134 = vmatprep.subr.mxu0 0.0
    %3135 = vmatpush2.msra.mxu0 0.0
    %3136 = vmatprep.subr.mxu0 0.0
    %3137 = vmatpush2.msra.mxu0 0.0
    %3138 = vmatprep.subr.mxu0 0.0
    %3139 = vmatpush2.msra.mxu0 0.0
    %3140 = vmatprep.subr.mxu0 0.0
    %3141 = vmatpush2.msra.mxu0 0.0
    %3142 = vmatprep.subr.mxu0 0.0
    %3143 = vmatpush2.msra.mxu0 0.0
    %3144 = vmatprep.subr.mxu0 0.0
    %3145 = vmatpush2.msra.mxu0 0.0
    %3146 = vmatprep.subr.mxu0 0.0
    %3147 = vmatpush2.msra.mxu0 0.0
    %3148 = vmatprep.subr.mxu0 0.0
    %3149 = vmatpush2.msra.mxu0 0.0
    %3150 = vmatprep.subr.mxu0 0.0
    %3151 = vmatpush2.msra.mxu0 0.0
    %3152 = vmatprep.subr.mxu0 0.0
    %3153 = vmatpush2.msra.mxu0 0.0
    %3154 = vmatprep.subr.mxu0 0.0
    %3155 = vmatpush2.msra.mxu0 0.0
    %3156 = vmatprep.subr.mxu0 0.0
    %3157 = vmatpush2.msra.mxu0 0.0
    %3158 = vmatprep.subr.mxu0 0.0
    %3159 = vmatpush2.msra.mxu0 0.0
    %3160 = vmatprep.subr.mxu0 0.0
    %3161 = vmatpush2.msra.mxu0 0.0
    %3162 = vmatprep.subr.mxu0 0.0
    %3163 = vmatpush2.msra.mxu0 0.0
    %3164 = vmatprep.mubr.f32.mxu0 0.0
    %3165 = vmatmul.mubr.f32.gmra.mxu0 %v3092
    %v3166 = vpop.f32.mrf.mxu0
    %v3167 = vadd.f32 %v3090, %v3166
    %v3168 = vpop.f32.mrf.mxu0
    %3169 = vmatprep.mubr.f32.mxu0 0.0
    %3170 = vmatmul.mubr.f32.gmra.mxu0 %v3095
    %v3171 = vpop.f32.mrf.mxu0
    %v3172 = vadd.f32 %v3090, %v3171
    %v3173 = vpop.f32.mrf.mxu0
    %3174 = vmatprep.mubr.f32.mxu0 0.0
    %3175 = vmatmul.mubr.f32.gmra.mxu0 %v3098
    %v3176 = vpop.f32.mrf.mxu0
    %v3177 = vadd.f32 %v3090, %v3176
    %v3178 = vpop.f32.mrf.mxu0
    %3179 = vdwg.mxu0
    %v3180 = vadd.f32 %v1962, %v3167
    %v3181 = vadd.f32 %v1963, %v3172
    %v3182 = vadd.f32 %v1964, %v3177
    %v3183 = vsel %vm43, %v3180, 0.0
    %3184 = vadd.xlane.f32.xlu0 %v3183
    %v3185 = vpop.xlane.xlu0 %3184
    %v3186 = vsel %vm43, %v3181, 0.0
    %3187 = vadd.xlane.f32.xlu0 %v3186
    %v3188 = vpop.xlane.xlu0 %3187
    %v3189 = vsel %vm43, %v3182, 0.0
    %3190 = vadd.xlane.f32.xlu0 %v3189
    %v3191 = vpop.xlane.xlu0 %3190
    %v3192 = vmul.f32 %v3185, %v50
    %v3193 = vmul.f32 %v3188, %v50
    %v3194 = vmul.f32 %v3191, %v50
    %v3195 = vsub.f32 %v3180, %v3192
    %v3196 = vsub.f32 %v3181, %v3193
    %v3197 = vsub.f32 %v3182, %v3194
    %v3198 = vmul.f32 %v3195, %v3195
    %v3199 = vmul.f32 %v3196, %v3196
    %v3200 = vmul.f32 %v3197, %v3197
    %v3201 = vsel %vm43, %v3198, 0.0
    %3202 = vadd.xlane.f32.xlu0 %v3201
    %v3203 = vpop.xlane.xlu0 %3202
    %v3204 = vsel %vm43, %v3199, 0.0
    %3205 = vadd.xlane.f32.xlu0 %v3204
    %v3206 = vpop.xlane.xlu0 %3205
    %v3207 = vsel %vm43, %v3200, 0.0
    %3208 = vadd.xlane.f32.xlu0 %v3207
    %v3209 = vpop.xlane.xlu0 %3208
    %v3210 = vmul.f32 %v3203, %v50
    %v3211 = vmul.f32 %v3206, %v50
    %v3212 = vmul.f32 %v3209, %v50
    %v3213 = vadd.f32 %v3210, 1e-05
    %v3214 = vadd.f32 %v3211, 1e-05
    %v3215 = vadd.f32 %v3212, 1e-05
    %v3216 = vrsqrt.pop %v3213
    %v3217 = vrsqrt.pop %v3214
    %v3218 = vrsqrt.pop %v3215
    %v3219 = vmul.f32 %v3195, %v3216
    %v3220 = vmul.f32 %v3196, %v3217
    %v3221 = vmul.f32 %v3197, %v3218
    %v3222 = vlaneseq
    %v3223 = vshrl.u32 %v3222, 7
    %v3224 = vsub.s32 2, %v3223
    %v3225 = vrot.slane %v1987, %v3224
    %v3226 = vmul.f32 %v3219, %v3225
    %v3227 = vmul.f32 %v3220, %v3225
    %v3228 = vmul.f32 %v3221, %v3225
    %v3229 = vlaneseq
    %v3230 = vshrl.u32 %v3229, 7
    %v3231 = vsub.s32 3, %v3230
    %v3232 = vrot.slane %v1987, %v3231
    %v3233 = vadd.f32 %v3226, %v3232
    %v3234 = vadd.f32 %v3227, %v3232
    %v3235 = vadd.f32 %v3228, %v3232
    %v3236 = vlaneseq
    %v3237 = vshrl.u32 %v3236, 7
    %v3238 = vsub.s32 4, %v3237
    %v3239 = vrot.slane %v1987, %v3238
    %v3241 = vsel %vm43, %v3233, 0
    %v3244 = vsel %vm43, %v3234, 0
    %v3247 = vsel %vm43, %v3235, 0
    %3249 = vmatprep.subr.mxu0 0.0
    %3250 = vmatpush1.msra.mxu0 0.0
    %3251 = vmatprep.subr.mxu0 0.0
    %3252 = vmatpush1.msra.mxu0 0.0
    %3253 = vmatprep.subr.mxu0 0.0
    %3254 = vmatpush1.msra.mxu0 0.0
    %3255 = vmatprep.subr.mxu0 0.0
    %3256 = vmatpush1.msra.mxu0 0.0
    %3257 = vmatprep.subr.mxu0 0.0
    %3258 = vmatpush1.msra.mxu0 0.0
    %3259 = vmatprep.subr.mxu0 0.0
    %3260 = vmatpush1.msra.mxu0 0.0
    %3261 = vmatprep.subr.mxu0 0.0
    %3262 = vmatpush1.msra.mxu0 0.0
    %3263 = vmatprep.subr.mxu0 0.0
    %3264 = vmatpush1.msra.mxu0 0.0
    %3265 = vmatprep.subr.mxu0 0.0
    %3266 = vmatpush1.msra.mxu0 0.0
    %3267 = vmatprep.subr.mxu0 0.0
    %3268 = vmatpush1.msra.mxu0 0.0
    %3269 = vmatprep.subr.mxu0 0.0
    %3270 = vmatpush1.msra.mxu0 0.0
    %3271 = vmatprep.subr.mxu0 0.0
    %3272 = vmatpush1.msra.mxu0 0.0
    %3273 = vmatprep.subr.mxu0 0.0
    %3274 = vmatpush1.msra.mxu0 %v1977
    %3275 = vmatprep.subr.mxu0 0.0
    %3276 = vmatpush1.msra.mxu0 %v1976
    %3277 = vmatprep.subr.mxu0 0.0
    %3278 = vmatpush1.msra.mxu0 %v1975
    %3279 = vmatprep.subr.mxu0 0.0
    %3280 = vmatpush1.msra.mxu0 %v1974
    %3281 = vmatprep.subr.mxu0 0.0
    %3282 = vmatpush2.msra.mxu0 0.0
    %3283 = vmatprep.subr.mxu0 0.0
    %3284 = vmatpush2.msra.mxu0 0.0
    %3285 = vmatprep.subr.mxu0 0.0
    %3286 = vmatpush2.msra.mxu0 0.0
    %3287 = vmatprep.subr.mxu0 0.0
    %3288 = vmatpush2.msra.mxu0 0.0
    %3289 = vmatprep.subr.mxu0 0.0
    %3290 = vmatpush2.msra.mxu0 0.0
    %3291 = vmatprep.subr.mxu0 0.0
    %3292 = vmatpush2.msra.mxu0 0.0
    %3293 = vmatprep.subr.mxu0 0.0
    %3294 = vmatpush2.msra.mxu0 0.0
    %3295 = vmatprep.subr.mxu0 0.0
    %3296 = vmatpush2.msra.mxu0 0.0
    %3297 = vmatprep.subr.mxu0 0.0
    %3298 = vmatpush2.msra.mxu0 0.0
    %3299 = vmatprep.subr.mxu0 0.0
    %3300 = vmatpush2.msra.mxu0 0.0
    %3301 = vmatprep.subr.mxu0 0.0
    %3302 = vmatpush2.msra.mxu0 0.0
    %3303 = vmatprep.subr.mxu0 0.0
    %3304 = vmatpush2.msra.mxu0 0.0
    %3305 = vmatprep.subr.mxu0 0.0
    %3306 = vmatpush2.msra.mxu0 0.0
    %3307 = vmatprep.subr.mxu0 0.0
    %3308 = vmatpush2.msra.mxu0 0.0
    %3309 = vmatprep.subr.mxu0 0.0
    %3310 = vmatpush2.msra.mxu0 0.0
    %3311 = vmatprep.subr.mxu0 0.0
    %3312 = vmatpush2.msra.mxu0 0.0
    %3313 = vmatprep.mubr.f32.mxu0 0.0
    %3314 = vmatmul.mubr.f32.gmra.mxu0 %v3241
    %v3315 = vpop.f32.mrf.mxu0
    %v3316 = vadd.f32 %v3239, %v3315
    %v3317 = vpop.f32.mrf.mxu0
    %3318 = vmatprep.mubr.f32.mxu0 0.0
    %3319 = vmatmul.mubr.f32.gmra.mxu0 %v3244
    %v3320 = vpop.f32.mrf.mxu0
    %v3321 = vadd.f32 %v3239, %v3320
    %v3322 = vpop.f32.mrf.mxu0
    %3323 = vmatprep.mubr.f32.mxu0 0.0
    %3324 = vmatmul.mubr.f32.gmra.mxu0 %v3247
    %v3325 = vpop.f32.mrf.mxu0
    %v3326 = vadd.f32 %v3239, %v3325
    %v3327 = vpop.f32.mrf.mxu0
    %3328 = vdwg.mxu0
    %v3329 = vmul.f32 %v3316, 0.5
    %v3330 = vmul.f32 %v3321, 0.5
    %v3331 = vmul.f32 %v3326, 0.5
    %v3332 = vmul.f32 %v3316, 0.044715
    %v3333 = vmul.f32 %v3321, 0.044715
    %v3334 = vmul.f32 %v3326, 0.044715
    %v3335 = vmul.f32 %v3332, %v3316
    %v3336 = vmul.f32 %v3333, %v3321
    %v3337 = vmul.f32 %v3334, %v3326
    %v3338 = vmul.f32 %v3335, %v3316
    %v3339 = vmul.f32 %v3336, %v3321
    %v3340 = vmul.f32 %v3337, %v3326
    %v3341 = vadd.f32 %v3316, %v3338
    %v3342 = vadd.f32 %v3321, %v3339
    %v3343 = vadd.f32 %v3326, %v3340
    %v3344 = vmul.f32 %v3341, 0.7978846
    %v3345 = vmul.f32 %v3342, 0.7978846
    %v3346 = vmul.f32 %v3343, 0.7978846
    %v3347 = vtanh.pop %v3344
    %v3348 = vtanh.pop %v3345
    %v3349 = vtanh.pop %v3346
    %v3350 = vadd.f32 %v3347, 1.0
    %v3351 = vadd.f32 %v3348, 1.0
    %v3352 = vadd.f32 %v3349, 1.0
    %v3353 = vmul.f32 %v3329, %v3350
    %v3354 = vmul.f32 %v3330, %v3351
    %v3355 = vmul.f32 %v3331, %v3352
    %v3356 = vlaneseq
    %v3357 = vshrl.u32 %v3356, 7
    %v3358 = vsub.s32 5, %v3357
    %v3359 = vrot.slane %v1987, %v3358
    %v3361 = vsel %vm1819, %v3353, 0
    %v3364 = vsel %vm1819, %v3354, 0
    %v3367 = vsel %vm1819, %v3355, 0
    %3369 = vmatprep.subr.mxu0 0.0
    %3370 = vmatpush1.msra.mxu0 0.0
    %3371 = vmatprep.subr.mxu0 0.0
    %3372 = vmatpush1.msra.mxu0 0.0
    %3373 = vmatprep.subr.mxu0 0.0
    %3374 = vmatpush1.msra.mxu0 0.0
    %3375 = vmatprep.subr.mxu0 0.0
    %3376 = vmatpush1.msra.mxu0 0.0
    %3377 = vmatprep.subr.mxu0 0.0
    %3378 = vmatpush1.msra.mxu0 0.0
    %3379 = vmatprep.subr.mxu0 0.0
    %3380 = vmatpush1.msra.mxu0 0.0
    %3381 = vmatprep.subr.mxu0 0.0
    %3382 = vmatpush1.msra.mxu0 0.0
    %3383 = vmatprep.subr.mxu0 0.0
    %3384 = vmatpush1.msra.mxu0 0.0
    %3385 = vmatprep.subr.mxu0 0.0
    %3386 = vmatpush1.msra.mxu0 %v1985
    %3387 = vmatprep.subr.mxu0 0.0
    %3388 = vmatpush1.msra.mxu0 %v1984
    %3389 = vmatprep.subr.mxu0 0.0
    %3390 = vmatpush1.msra.mxu0 %v1983
    %3391 = vmatprep.subr.mxu0 0.0
    %3392 = vmatpush1.msra.mxu0 %v1982
    %3393 = vmatprep.subr.mxu0 0.0
    %3394 = vmatpush1.msra.mxu0 %v1981
    %3395 = vmatprep.subr.mxu0 0.0
    %3396 = vmatpush1.msra.mxu0 %v1980
    %3397 = vmatprep.subr.mxu0 0.0
    %3398 = vmatpush1.msra.mxu0 %v1979
    %3399 = vmatprep.subr.mxu0 0.0
    %3400 = vmatpush1.msra.mxu0 %v1978
    %3401 = vmatprep.subr.mxu0 0.0
    %3402 = vmatpush2.msra.mxu0 0.0
    %3403 = vmatprep.subr.mxu0 0.0
    %3404 = vmatpush2.msra.mxu0 0.0
    %3405 = vmatprep.subr.mxu0 0.0
    %3406 = vmatpush2.msra.mxu0 0.0
    %3407 = vmatprep.subr.mxu0 0.0
    %3408 = vmatpush2.msra.mxu0 0.0
    %3409 = vmatprep.subr.mxu0 0.0
    %3410 = vmatpush2.msra.mxu0 0.0
    %3411 = vmatprep.subr.mxu0 0.0
    %3412 = vmatpush2.msra.mxu0 0.0
    %3413 = vmatprep.subr.mxu0 0.0
    %3414 = vmatpush2.msra.mxu0 0.0
    %3415 = vmatprep.subr.mxu0 0.0
    %3416 = vmatpush2.msra.mxu0 0.0
    %3417 = vmatprep.subr.mxu0 0.0
    %3418 = vmatpush2.msra.mxu0 0.0
    %3419 = vmatprep.subr.mxu0 0.0
    %3420 = vmatpush2.msra.mxu0 0.0
    %3421 = vmatprep.subr.mxu0 0.0
    %3422 = vmatpush2.msra.mxu0 0.0
    %3423 = vmatprep.subr.mxu0 0.0
    %3424 = vmatpush2.msra.mxu0 0.0
    %3425 = vmatprep.subr.mxu0 0.0
    %3426 = vmatpush2.msra.mxu0 0.0
    %3427 = vmatprep.subr.mxu0 0.0
    %3428 = vmatpush2.msra.mxu0 0.0
    %3429 = vmatprep.subr.mxu0 0.0
    %3430 = vmatpush2.msra.mxu0 0.0
    %3431 = vmatprep.subr.mxu0 0.0
    %3432 = vmatpush2.msra.mxu0 0.0
    %3433 = vmatprep.mubr.f32.mxu0 0.0
    %3434 = vmatmul.mubr.f32.gmra.mxu0 %v3361
    %v3435 = vpop.f32.mrf.mxu0
    %v3436 = vadd.f32 %v3359, %v3435
    %v3437 = vpop.f32.mrf.mxu0
    %3438 = vmatprep.mubr.f32.mxu0 0.0
    %3439 = vmatmul.mubr.f32.gmra.mxu0 %v3364
    %v3440 = vpop.f32.mrf.mxu0
    %v3441 = vadd.f32 %v3359, %v3440
    %v3442 = vpop.f32.mrf.mxu0
    %3443 = vmatprep.mubr.f32.mxu0 0.0
    %3444 = vmatmul.mubr.f32.gmra.mxu0 %v3367
    %v3445 = vpop.f32.mrf.mxu0
    %v3446 = vadd.f32 %v3359, %v3445
    %v3447 = vpop.f32.mrf.mxu0
    %3448 = vdwg.mxu0
    %v3449 = vadd.f32 %v3233, %v3436
    %v3450 = vadd.f32 %v3234, %v3441
    %v3451 = vadd.f32 %v3235, %v3446
    %v3452 = vsel %vm43, %v3449, 0.0
    %3453 = vadd.xlane.f32.xlu0 %v3452
    %v3454 = vpop.xlane.xlu0 %3453
    %v3455 = vsel %vm43, %v3450, 0.0
    %3456 = vadd.xlane.f32.xlu0 %v3455
    %v3457 = vpop.xlane.xlu0 %3456
    %v3458 = vsel %vm43, %v3451, 0.0
    %3459 = vadd.xlane.f32.xlu0 %v3458
    %v3460 = vpop.xlane.xlu0 %3459
    %v3461 = vmul.f32 %v3454, %v50
    %v3462 = vmul.f32 %v3457, %v50
    %v3463 = vmul.f32 %v3460, %v50
    %v3464 = vsub.f32 %v3449, %v3461
    %v3465 = vsub.f32 %v3450, %v3462
    %v3466 = vsub.f32 %v3451, %v3463
    %v3467 = vmul.f32 %v3464, %v3464
    %v3468 = vmul.f32 %v3465, %v3465
    %v3469 = vmul.f32 %v3466, %v3466
    %v3470 = vsel %vm43, %v3467, 0.0
    %3471 = vadd.xlane.f32.xlu0 %v3470
    %v3472 = vpop.xlane.xlu0 %3471
    %v3473 = vsel %vm43, %v3468, 0.0
    %3474 = vadd.xlane.f32.xlu0 %v3473
    %v3475 = vpop.xlane.xlu0 %3474
    %v3476 = vsel %vm43, %v3469, 0.0
    %3477 = vadd.xlane.f32.xlu0 %v3476
    %v3478 = vpop.xlane.xlu0 %3477
    %v3479 = vmul.f32 %v3472, %v50
    %v3480 = vmul.f32 %v3475, %v50
    %v3481 = vmul.f32 %v3478, %v50
    %v3482 = vadd.f32 %v3479, 1e-05
    %v3483 = vadd.f32 %v3480, 1e-05
    %v3484 = vadd.f32 %v3481, 1e-05
    %v3485 = vrsqrt.pop %v3482
    %v3486 = vrsqrt.pop %v3483
    %v3487 = vrsqrt.pop %v3484
    %v3488 = vmul.f32 %v3464, %v3485
    %v3489 = vmul.f32 %v3465, %v3486
    %v3490 = vmul.f32 %v3466, %v3487
    %v3491 = vlaneseq
    %v3492 = vshrl.u32 %v3491, 7
    %v3493 = vsub.s32 6, %v3492
    %v3494 = vrot.slane %v1987, %v3493
    %v3495 = vmul.f32 %v3488, %v3494
    %v3496 = vmul.f32 %v3489, %v3494
    %v3497 = vmul.f32 %v3490, %v3494
    %v3498 = vlaneseq
    %v3499 = vshrl.u32 %v3498, 7
    %v3500 = vsub.s32 7, %v3499
    %v3501 = vrot.slane %v1987, %v3500
    %v3502 = vadd.f32 %v3495, %v3501
    %v3503 = vadd.f32 %v3496, %v3501
    %v3504 = vadd.f32 %v3497, %v3501
    %v3505 = vlaneseq
    %v3506 = vshrl.u32 %v3505, 7
    %v3507 = vsub.s32 5, %v3506
    %v3508 = vrot.slane %v26, %v3507
    %v3510 = vsel %vm43, %v3502, 0
    %v3513 = vsel %vm43, %v3503, 0
    %v3516 = vsel %vm43, %v3504, 0
    %3518 = vmatprep.subr.mxu0 0.0
    %3519 = vmatpush1.msra.mxu0 0.0
    %3520 = vmatprep.subr.mxu0 0.0
    %3521 = vmatpush1.msra.mxu0 0.0
    %3522 = vmatprep.subr.mxu0 0.0
    %3523 = vmatpush1.msra.mxu0 0.0
    %3524 = vmatprep.subr.mxu0 0.0
    %3525 = vmatpush1.msra.mxu0 0.0
    %3526 = vmatprep.subr.mxu0 0.0
    %3527 = vmatpush1.msra.mxu0 0.0
    %3528 = vmatprep.subr.mxu0 0.0
    %3529 = vmatpush1.msra.mxu0 0.0
    %3530 = vmatprep.subr.mxu0 0.0
    %3531 = vmatpush1.msra.mxu0 0.0
    %3532 = vmatprep.subr.mxu0 0.0
    %3533 = vmatpush1.msra.mxu0 0.0
    %3534 = vmatprep.subr.mxu0 0.0
    %3535 = vmatpush1.msra.mxu0 0.0
    %3536 = vmatprep.subr.mxu0 0.0
    %3537 = vmatpush1.msra.mxu0 0.0
    %3538 = vmatprep.subr.mxu0 0.0
    %3539 = vmatpush1.msra.mxu0 0.0
    %3540 = vmatprep.subr.mxu0 0.0
    %3541 = vmatpush1.msra.mxu0 0.0
    %3542 = vmatprep.subr.mxu0 0.0
    %3543 = vmatpush1.msra.mxu0 %v31
    %3544 = vmatprep.subr.mxu0 0.0
    %3545 = vmatpush1.msra.mxu0 %v30
    %3546 = vmatprep.subr.mxu0 0.0
    %3547 = vmatpush1.msra.mxu0 %v29
    %3548 = vmatprep.subr.mxu0 0.0
    %3549 = vmatpush1.msra.mxu0 %v28
    %3550 = vmatprep.subr.mxu0 0.0
    %3551 = vmatpush2.msra.mxu0 0.0
    %3552 = vmatprep.subr.mxu0 0.0
    %3553 = vmatpush2.msra.mxu0 0.0
    %3554 = vmatprep.subr.mxu0 0.0
    %3555 = vmatpush2.msra.mxu0 0.0
    %3556 = vmatprep.subr.mxu0 0.0
    %3557 = vmatpush2.msra.mxu0 0.0
    %3558 = vmatprep.subr.mxu0 0.0
    %3559 = vmatpush2.msra.mxu0 0.0
    %3560 = vmatprep.subr.mxu0 0.0
    %3561 = vmatpush2.msra.mxu0 0.0
    %3562 = vmatprep.subr.mxu0 0.0
    %3563 = vmatpush2.msra.mxu0 0.0
    %3564 = vmatprep.subr.mxu0 0.0
    %3565 = vmatpush2.msra.mxu0 0.0
    %3566 = vmatprep.subr.mxu0 0.0
    %3567 = vmatpush2.msra.mxu0 0.0
    %3568 = vmatprep.subr.mxu0 0.0
    %3569 = vmatpush2.msra.mxu0 0.0
    %3570 = vmatprep.subr.mxu0 0.0
    %3571 = vmatpush2.msra.mxu0 0.0
    %3572 = vmatprep.subr.mxu0 0.0
    %3573 = vmatpush2.msra.mxu0 0.0
    %3574 = vmatprep.subr.mxu0 0.0
    %3575 = vmatpush2.msra.mxu0 0.0
    %3576 = vmatprep.subr.mxu0 0.0
    %3577 = vmatpush2.msra.mxu0 0.0
    %3578 = vmatprep.subr.mxu0 0.0
    %3579 = vmatpush2.msra.mxu0 0.0
    %3580 = vmatprep.subr.mxu0 0.0
    %3581 = vmatpush2.msra.mxu0 0.0
    %3582 = vmatprep.mubr.f32.mxu0 0.0
    %3583 = vmatmul.mubr.f32.gmra.mxu0 %v3510
    %v3584 = vpop.f32.mrf.mxu0
    %v3585 = vadd.f32 %v3508, %v3584
    %v3586 = vpop.f32.mrf.mxu0
    %3587 = vmatprep.mubr.f32.mxu0 0.0
    %3588 = vmatmul.mubr.f32.gmra.mxu0 %v3513
    %v3589 = vpop.f32.mrf.mxu0
    %v3590 = vadd.f32 %v3508, %v3589
    %v3591 = vpop.f32.mrf.mxu0
    %3592 = vmatprep.mubr.f32.mxu0 0.0
    %3593 = vmatmul.mubr.f32.gmra.mxu0 %v3516
    %v3594 = vpop.f32.mrf.mxu0
    %v3595 = vadd.f32 %v3508, %v3594
    %v3596 = vpop.f32.mrf.mxu0
    %3597 = vdwg.mxu0
    %3598 = vst [vmem:[%s6] sm:$0xff] %v3585
    %3599 = vst [vmem:[%s6 + $0x8] sm:$0xff] %v3590
    %v3600 = vlaneseq
    %v3601 = vand.u32 %v3600, 127
    %vm3602 = vcmp.lt.s32.totalorder %v3601, 5
    %v3603 = vsel %vm3602, %v3585, -1e+30
    %v3604 = vsel %vm3602, %v3590, -1e+30
    %v3605 = vsel %vm3602, %v3595, -1e+30
    %3606 = vmax.xlane.f32.xlu0 %v3603
    %v3607 = vpop.xlane.xlu0 %3606
    %3608 = vmax.xlane.f32.xlu0 %v3604
    %v3609 = vpop.xlane.xlu0 %3608
    %3610 = vmax.xlane.f32.xlu0 %v3605
    %v3611 = vpop.xlane.xlu0 %3610
    %v3612 = vsub.f32 %v3603, %v3607
    %v3613 = vsub.f32 %v3604, %v3609
    %v3614 = vsub.f32 %v3605, %v3611
    %v3615 = vmul.f32 %v3612, 1.442695
    %v3616 = vpow.pop %v3615
    %v3617 = vmul.f32 %v3613, 1.442695
    %v3618 = vpow.pop %v3617
    %v3619 = vmul.f32 %v3614, 1.442695
    %v3620 = vpow.pop %v3619
    %3621 = vadd.xlane.f32.xlu0 %v3616
    %v3622 = vpop.xlane.xlu0 %3621
    %3623 = vadd.xlane.f32.xlu0 %v3618
    %v3624 = vpop.xlane.xlu0 %3623
    %3625 = vadd.xlane.f32.xlu0 %v3620
    %v3626 = vpop.xlane.xlu0 %3625
    %v3627 = vlog2.pop %v3622
    %v3628 = vmul.f32 %v3627, 0.6931472
    %v3629 = vlog2.pop %v3624
    %v3630 = vmul.f32 %v3629, 0.6931472
    %v3631 = vlog2.pop %v3626
    %v3632 = vmul.f32 %v3631, 0.6931472
    %v3633 = vadd.f32 %v3628, %v3607
    %v3634 = vadd.f32 %v3630, %v3609
    %v3635 = vadd.f32 %v3632, %v3611
    %3636 = vset.pattern.permute.xlu0 0
    %3637 = vperm.xlu0 %3636, %v38
    %v3638 = vpop.permute.xlu0 %3637
    %3639 = vset.pattern.permute.xlu0 0
    %3640 = vperm.xlu0 %3639, %v39
    %v3641 = vpop.permute.xlu0 %3640
    %3642 = vset.pattern.permute.xlu0 0
    %3643 = vperm.xlu0 %3642, %v40
    %v3644 = vpop.permute.xlu0 %3643
    %vm3645 = vcmp.eq.s32.totalorder %v3601, %v3638
    %vm3646 = vcmp.eq.s32.totalorder %v3601, %v3641
    %vm3647 = vcmp.eq.s32.totalorder %v3601, %v3644
    %v3648 = vsel %vm3645, %v3585, 0.0
    %v3649 = vsel %vm3646, %v3590, 0.0
    %v3650 = vsel %vm3647, %v3595, 0.0
    %3651 = vadd.xlane.f32.xlu0 %v3648
    %v3652 = vpop.xlane.xlu0 %3651
    %3653 = vadd.xlane.f32.xlu0 %v3649
    %v3654 = vpop.xlane.xlu0 %3653
    %3655 = vadd.xlane.f32.xlu0 %v3650
    %v3656 = vpop.xlane.xlu0 %3655
    %vm3657 = vcmp.ge.s32.totalorder %v38, 0
    %vm3658 = vcmp.ge.s32.totalorder %v39, 0
    %vm3659 = vcmp.ge.s32.totalorder %v40, 0
    %v3660 = vsel %vm3657, 1, 0
    %v3661 = vsel %vm3658, 1, 0
    %v3662 = vsel %vm3659, 1, 0
    %v3663 = vcvt.s32.f32 %v3660
    %v3664 = vcvt.s32.f32 %v3661
    %v3665 = vcvt.s32.f32 %v3662
    %vm3666 = vcmask 7168
    %v3667 = vsel %vm3666, %v3663, 0.0
    %v3668 = vsel %vm3666, %v3664, 0.0
    %v3669 = vadd.f32 %v3667, %v3668
    %v3670 = vsel %vm3666, %v3665, 0.0
    %v3671 = vadd.f32 %v3669, %v3670
    %3672 = vadd.xlane.f32.xlu0 %v3671
    %v3673 = vpop.xlane.xlu0 %3672
    %v3674 = vrot.slane %v3673, 4
    %v3675 = vadd.f32 %v3673, %v3674
    %v3676 = vrot.slane %v3675, 2
    %v3677 = vadd.f32 %v3675, %v3676
    %v3678 = vrot.slane %v3677, 1
    %v3679 = vadd.f32 %v3677, %v3678
    %s3680 = vtos %v3679
    %s3681 = smax.f32 %s3680, 1.0
    %v3682 = vsub.f32 %v3633, %v3652
    %v3683 = vsub.f32 %v3634, %v3654
    %v3684 = vsub.f32 %v3635, %v3656
    %v3685 = vmul.f32 %v3682, %v3663
    %v3686 = vmul.f32 %v3683, %v3664
    %v3687 = vmul.f32 %v3684, %v3665
    %v3688 = vsel %vm3666, %v3685, 0.0
    %v3689 = vsel %vm3666, %v3686, 0.0
    %v3690 = vadd.f32 %v3688, %v3689
    %v3691 = vsel %vm3666, %v3687, 0.0
    %v3692 = vadd.f32 %v3690, %v3691
    %3693 = vadd.xlane.f32.xlu0 %v3692
    %v3694 = vpop.xlane.xlu0 %3693
    %v3695 = vrot.slane %v3694, 4
    %v3696 = vadd.f32 %v3694, %v3695
    %v3697 = vrot.slane %v3696, 2
    %v3698 = vadd.f32 %v3696, %v3697
    %v3699 = vrot.slane %v3698, 1
    %v3700 = vadd.f32 %v3698, %v3699
    %s3701 = vtos %v3700
    %v3702 = vstv %s3681
    %v3703 = vrcp.pop %v3702
    %s3704 = vtos %v3703
    %s3705 = smul.f32 %s3701, %s3704
    %s3706 = scalar_lea.smem [#allocation2], 0
    %3707 = sst [smem:[%s3706]] %s3705
    // Predicated region
    $region26: #{_lambda_.1} parent=1 // pred_check
      _
    $region27: #{_lambda_.1} parent=1 // pred_check_branch
      %3709 = sbr.rel (0) target = $region29
    $region28: #{_lambda_.1} parent=1 // pred_region
      _
    $region29: #{_lambda_.1} parent=1 // pred_fallthru
      _
    // Predicated region
    $region30: #{_lambda_.1} parent=1 // pred_check
      _
    $region31: #{_lambda_.1} parent=1 // pred_check_branch
      %3711 = sbr.rel (0) target = $region33
    $region32: #{_lambda_.1} parent=1 // pred_region
      %s3713 = ssub.s32 16, 16
      %3714 = vsyncadd [#allocation3], %s3713
      %3717 = dma.smem_to_hbm [#allocation2], 16, %s7, [#allocation3]
    $region33: #{_lambda_.1} parent=1 // pred_fallthru
      _
    // Predicated region
    $region34: #{_lambda_.1} parent=1 // pred_check
      _
    $region35: #{_lambda_.1} parent=1 // pred_check_branch
      %3719 = sbr.rel (0) target = $region37
    $region36: #{_lambda_.1} parent=1 // pred_region
      _
    $region37: #{_lambda_.1} parent=1 // pred_fallthru
      _
    // Predicated region
    $region38: #{_lambda_.1} parent=1 // pred_check
      _
    $region39: #{_lambda_.1} parent=1 // pred_check_branch
      %3721 = sbr.rel (0) target = $region41
    $region40: #{_lambda_.1} parent=1 // pred_region
      %3722 = dma.done [#allocation3], 16
    $region41: #{_lambda_.1} parent=1 // pred_fallthru
      _
    %3723 = sfence
    %3724 = vsyncpa [#allocation3], 1

</llo_original>
